<compile_context>
chip_gen: v6e
topology: v6e:2x2x1
jax: 0.10.0
libtpu: 0.0.40
codegen_flags: <defaults>
</compile_context>

<pallas_src>
import numpy as np
import jax
import jax.numpy as jnp
from jax.experimental import pallas as pl
from jax.experimental.pallas import tpu as pltpu

_VMEM_LIMIT_BYTES = 32 * 1024 * 1024
_EPS = 1e-5
_SLOPE = 0.2


# ----------------------------------------------------------------------------
# In-kernel helpers (pure jnp, traced inside the kernels)
# ----------------------------------------------------------------------------
def _instance_norm(x, gamma, beta, eps=_EPS):
    """Two-pass InstanceNorm over axis=1 (spatial). x:(tb,HW,C) f32."""
    m = jnp.mean(x, axis=1, keepdims=True)
    xc = x - m
    var = jnp.mean(xc * xc, axis=1, keepdims=True)
    return xc * (gamma * jax.lax.rsqrt(var + eps)) + beta


def _leaky_relu(x, slope=_SLOPE):
    return jnp.where(x >= 0.0, x, slope * x)


# ----------------------------------------------------------------------------
# Kernels
# ----------------------------------------------------------------------------
def _make_conv_block_kernel(tb, HW, K, Cout, norm):
    """Conv2d(k=4,s=2,p=1,bias=False) as ONE MXU matmul on a host-prepared
    im2col operand [+ InstanceNorm(affine)] + LeakyReLU(0.2)."""

    def kernel(*refs):
        if norm:
            p_ref, w_ref, g_ref, b_ref, o_ref = refs
        else:
            p_ref, w_ref, o_ref = refs
        # Single matmul, K = 16*Cin; reshape merges leading dims only (free).
        x = jnp.dot(p_ref[...].reshape(tb * HW, K), w_ref[...],
                    preferred_element_type=jnp.float32).reshape(tb, HW, Cout)
        if norm:
            x = _instance_norm(x, g_ref[...], b_ref[...])
        x = _leaky_relu(x)
        # TODO(synk): Dropout(p=0.2) is inference-mode identity here.
        o_ref[...] = x.astype(o_ref.dtype)

    return kernel


def _make_deep_head_kernel(tb, HW3, K3, C3, C4):
    """Fused conv3 -> IN -> LReLU -> conv4 -> IN -> LReLU -> conv5(4x4 valid)
    -> Sigmoid.  conv3's activation stays in VMEM; conv3->conv4 im2col is a
    relayout-free one-hot gather matmul (zero rows realize the zero padding)."""

    def kernel(p_ref, w3_ref, g3_ref, b3_ref, s_ref, w4_ref, g4_ref, b4_ref,
               w5_ref, o_ref, g_scratch):
        # ---- conv3: single MXU matmul (K = 16*C2) + InstanceNorm + LeakyReLU
        x3 = jnp.dot(p_ref[...].reshape(tb * HW3, K3), w3_ref[...],
                     preferred_element_type=jnp.float32).reshape(tb, HW3, C3)
        x3 = _leaky_relu(_instance_norm(x3, g3_ref[...], b3_ref[...]))
        x3 = x3.astype(jnp.bfloat16)

        # ---- conv3 -> conv4 im2col via one-hot selection matmul (MXU gather)
        sel = s_ref[...]                                    # (256, HW3) bf16
        for n in range(tb):                                 # tb is small/static
            g_scratch[n] = jnp.dot(
                sel, x3[n], preferred_element_type=jnp.float32
            ).astype(jnp.bfloat16)

        # ---- conv4: 16 taps accumulated on the MXU (acc starts from tap 0)
        acc = jnp.dot(g_scratch[:, 0:16, :].reshape(tb * 16, C3), w4_ref[0],
                      preferred_element_type=jnp.float32)
        for t in range(1, 16):
            acc = acc + jnp.dot(
                g_scratch[:, t * 16:(t + 1) * 16, :].reshape(tb * 16, C3),
                w4_ref[t], preferred_element_type=jnp.float32)
        x4 = _leaky_relu(_instance_norm(acc.reshape(tb, 16, C4),
                                        g4_ref[...], b4_ref[...]))
        # TODO(synk): Dropout(p=0.2) after conv3/conv4 is inference-mode identity.

        # ---- conv5 (4x4 valid -> 1x1, Cout=1) + Sigmoid as a VPU reduction
        xw = x4 * w5_ref[...]                               # (tb,16,C4)*(1,16,C4)
        logit = jnp.sum(jnp.sum(xw, axis=2, keepdims=True), axis=1, keepdims=True)
        o_ref[...] = 1.0 / (1.0 + jnp.exp(-logit))

    return kernel


# ----------------------------------------------------------------------------
# Host-side layout helpers
# ----------------------------------------------------------------------------
def _im2col_s2(x):
    """NHWC -> (N, (H/2)*(W/2), 16*C) patches of a 4x4/stride-2/pad-1 conv.
    k-index = (kh*4 + kw)*C + c, matching _reorder_conv_weight."""
    N, H, W, C = x.shape
    Ho, Wo = H // 2, W // 2
    xp = jnp.pad(x, ((0, 0), (1, 1), (1, 1), (0, 0)))
    taps = [xp[:, kh:kh + 2 * Ho:2, kw:kw + 2 * Wo:2, :]
            for kh in range(4) for kw in range(4)]
    y = jnp.concatenate(taps, axis=-1)                      # (N, Ho, Wo, 16C)
    return y.reshape(N, Ho * Wo, 16 * C)


def _reorder_conv_weight(w):
    """PyTorch (Cout, Cin, 4, 4) -> (16*Cin, Cout), row = (kh*4+kw)*Cin + cin."""
    cout, cin = w.shape[0], w.shape[1]
    return jnp.transpose(w, (2, 3, 1, 0)).reshape(16 * cin, cout)


def _reorder_conv_taps(w):
    """PyTorch (Cout, Cin, 4, 4) -> (16 taps, Cin, Cout), tap = kh*4 + kw."""
    cout, cin = w.shape[0], w.shape[1]
    return jnp.transpose(w, (2, 3, 1, 0)).reshape(16, cin, cout)


def _reorder_head_weight(w5):
    """PyTorch (1, C, 4, 4) conv5 weight -> (16, C), row = h*4 + w."""
    c = w5.shape[1]
    return jnp.transpose(w5[0], (1, 2, 0)).reshape(16, c)


def _conv4_gather_matrix():
    """(256, 64) one-hot matrix: row t*16 + p selects the conv3 pixel
    (2i+kh-1, 2j+kw-1) for output position p=(i,j) and tap t=(kh,kw) of the
    4x4/s2/p1 conv on an 8x8 map; out-of-range rows are all-zero (padding)."""
    S = np.zeros((256, 64), np.float32)
    for kh in range(4):
        for kw in range(4):
            t = kh * 4 + kw
            for i in range(4):
                for j in range(4):
                    h, w = 2 * i + kh - 1, 2 * j + kw - 1
                    if 0 <= h < 8 and 0 <= w < 8:
                        S[t * 16 + (i * 4 + j), h * 8 + w] = 1.0
    return jnp.asarray(S, jnp.bfloat16)


def _pick_tb(n, cap):
    """Largest power-of-two divisor of n that is <= cap and keeps >= 2 grid
    steps (so both v7x TensorCores get work via the 'parallel' axis)."""
    cap = max(1, min(cap, n // 2))
    tb = 1
    for t in (2, 4, 8, 16):
        if t <= cap and n % t == 0:
            tb = t
    return tb


# ----------------------------------------------------------------------------
# pallas_call wrappers
# ----------------------------------------------------------------------------
def _conv_block(p, w, gamma=None, beta=None, *, norm, tb):
    """One fused conv block: matmul on im2col [+ IN] + LeakyReLU."""
    N, HW, K = p.shape
    Cout = w.shape[1]
    in_specs = [
        pl.BlockSpec((tb, HW, K), lambda n: (n, 0, 0)),     # activations
        pl.BlockSpec((K, Cout), lambda n: (0, 0)),          # resident weight
    ]
    args = [p, w.astype(jnp.bfloat16)]
    if norm:
        in_specs += [pl.BlockSpec((1, 1, Cout), lambda n: (0, 0, 0)),
                     pl.BlockSpec((1, 1, Cout), lambda n: (0, 0, 0))]
        args += [gamma.reshape(1, 1, Cout).astype(jnp.float32),
                 beta.reshape(1, 1, Cout).astype(jnp.float32)]
    return pl.pallas_call(
        _make_conv_block_kernel(tb, HW, K, Cout, norm),
        out_shape=jax.ShapeDtypeStruct((N, HW, Cout), jnp.bfloat16),
        grid=(N // tb,),
        in_specs=in_specs,
        out_specs=pl.BlockSpec((tb, HW, Cout), lambda n: (n, 0, 0)),
        compiler_params=pltpu.CompilerParams(
            dimension_semantics=("parallel",),
            vmem_limit_bytes=_VMEM_LIMIT_BYTES),
    )(*args)


def _deep_head(p3, w3, g3, b3, w4t, g4, b4, w5r, *, tb):
    """Fused conv3 + conv4 + conv5 head (single pallas_call)."""
    N, HW3, K3 = p3.shape
    C3 = w3.shape[1]
    C4 = w4t.shape[2]
    assert HW3 == 64 and w5r.shape == (16, C4), (HW3, w5r.shape)
    sel = _conv4_gather_matrix()                            # (256, 64) bf16
    args = [
        p3, w3.astype(jnp.bfloat16),
        g3.reshape(1, 1, C3).astype(jnp.float32),
        b3.reshape(1, 1, C3).astype(jnp.float32),
        sel, w4t.astype(jnp.bfloat16),
        g4.reshape(1, 1, C4).astype(jnp.float32),
        b4.reshape(1, 1, C4).astype(jnp.float32),
        w5r.reshape(1, 16, C4).astype(jnp.float32),
    ]
    in_specs = [
        pl.BlockSpec((tb, HW3, K3), lambda n: (n, 0, 0)),
        pl.BlockSpec((K3, C3), lambda n: (0, 0)),
        pl.BlockSpec((1, 1, C3), lambda n: (0, 0, 0)),
        pl.BlockSpec((1, 1, C3), lambda n: (0, 0, 0)),
        pl.BlockSpec((256, HW3), lambda n: (0, 0)),
        pl.BlockSpec((16, C3, C4), lambda n: (0, 0, 0)),
        pl.BlockSpec((1, 1, C4), lambda n: (0, 0, 0)),
        pl.BlockSpec((1, 1, C4), lambda n: (0, 0, 0)),
        pl.BlockSpec((1, 16, C4), lambda n: (0, 0, 0)),
    ]
    return pl.pallas_call(
        _make_deep_head_kernel(tb, HW3, K3, C3, C4),
        out_shape=jax.ShapeDtypeStruct((N, 1, 1), jnp.float32),
        grid=(N // tb,),
        in_specs=in_specs,
        out_specs=pl.BlockSpec((tb, 1, 1), lambda n: (n, 0, 0)),
        scratch_shapes=[pltpu.VMEM((tb, 256, C3), jnp.bfloat16)],
        compiler_params=pltpu.CompilerParams(
            dimension_semantics=("parallel",),
            vmem_limit_bytes=_VMEM_LIMIT_BYTES),
    )(*args)


# ----------------------------------------------------------------------------
# Model parameters / forward
# ----------------------------------------------------------------------------
def init_params(key, nc):
    """Deterministic synthetic parameters with the PyTorch module's shapes."""
    chans = [(3, nc), (nc, 2 * nc), (2 * nc, 4 * nc), (4 * nc, 8 * nc), (8 * nc, 1)]
    norms = [False, True, True, True, False]
    keys = jax.random.split(key, 3 * len(chans))
    params = {}
    for i, (cin, cout) in enumerate(chans):
        name = f"conv{i + 1}"
        # PyTorch Conv2d weight layout: (Cout, Cin, kH, kW), bias=False.
        params[name + "_w"] = 0.05 * jax.random.normal(
            keys[3 * i], (cout, cin, 4, 4), jnp.float32)
        if norms[i]:  # InstanceNorm2d(affine=True) scale / shift
            params[name + "_g"] = 1.0 + 0.1 * jax.random.normal(
                keys[3 * i + 1], (cout,), jnp.float32)
            params[name + "_b"] = 0.1 * jax.random.normal(
                keys[3 * i + 2], (cout,), jnp.float32)
    return params


def discriminator_forward(x_nchw, params):
    N, _, H, W = x_nchw.shape
    assert H == 64 and W == 64, "DCGAN discriminator head expects 64x64 input"
    nc = params["conv1_w"].shape[0]
    x = jnp.transpose(x_nchw, (0, 2, 3, 1)).astype(jnp.bfloat16)   # NHWC bf16

    # conv1: Conv(3 -> nc) + LeakyReLU                (64x64 -> 32x32)
    p1 = _im2col_s2(x)                                             # (N,1024,48)
    a1 = _conv_block(p1, _reorder_conv_weight(params["conv1_w"]),
                     norm=False, tb=_pick_tb(N, 8))
    # conv2: Conv(nc -> 2nc) + IN + LReLU             (32x32 -> 16x16)
    p2 = _im2col_s2(a1.reshape(N, 32, 32, nc))                     # (N,256,16nc)
    a2 = _conv_block(p2, _reorder_conv_weight(params["conv2_w"]),
                     params["conv2_g"], params["conv2_b"],
                     norm=True, tb=_pick_tb(N, 8))
    # conv3 + conv4 + conv5 head, fully fused         (16x16 -> 8x8 -> 4x4 -> 1)
    p3 = _im2col_s2(a2.reshape(N, 16, 16, 2 * nc))                 # (N,64,32nc)
    out = _deep_head(
        p3,
        _reorder_conv_weight(params["conv3_w"]),
        params["conv3_g"], params["conv3_b"],
        _reorder_conv_taps(params["conv4_w"]),
        params["conv4_g"], params["conv4_b"],
        _reorder_head_weight(params["conv5_w"]),
        tb=_pick_tb(N, 8))
    return out.reshape(N, 1, 1, 1)                                 # sigmoid probs


# ----------------------------------------------------------------------------
# Pure-JAX f32 reference (for a loose numerical sanity check)
# ----------------------------------------------------------------------------
def _reference_forward(x_nchw, params):
    x = jnp.transpose(x_nchw, (0, 2, 3, 1))                        # NHWC f32

    def conv(x, w, stride, pad):
        return jax.lax.conv_general_dilated(
            x, jnp.transpose(w, (2, 3, 1, 0)), (stride, stride),
            [(pad, pad), (pad, pad)],
            dimension_numbers=("NHWC", "HWIO", "NHWC"))

    def inorm(x, g, b, eps=_EPS):
        m = jnp.mean(x, axis=(1, 2), keepdims=True)
        v = jnp.mean((x - m) ** 2, axis=(1, 2), keepdims=True)
        return (x - m) * jax.lax.rsqrt(v + eps) * g + b

    lrelu = lambda z: jnp.where(z >= 0, z, _SLOPE * z)
    x = lrelu(conv(x, params["conv1_w"], 2, 1))
    for name in ("conv2", "conv3", "conv4"):
        x = conv(x, params[name + "_w"], 2, 1)
        x = lrelu(inorm(x, params[name + "_g"], params[name + "_b"]))
    x = conv(x, params["conv5_w"], 1, 0)
    return jnp.transpose(jax.nn.sigmoid(x), (0, 3, 1, 2))          # (N,1,1,1)


if __name__ == "__main__":
    nc = 8                      # scaled-down from nc=64 for a small example
    key = jax.random.PRNGKey(0)
    kx, kp = jax.random.split(key)
    # 64x64 input: 64 -> 32 -> 16 -> 8 -> 4 -> 1x1 final logit (as in DCGAN).
    x = jax.random.normal(kx, (2, 3, 64, 64), jnp.float32)
    params = init_params(kp, nc)

    fwd = jax.jit(discriminator_forward)
    y = fwd(x, params)
    jax.block_until_ready(y)
    assert y.shape == (2, 1, 1, 1), y.shape
    assert bool(jnp.all((y >= 0.0) & (y <= 1.0)))   # sigmoid output range

    # Loose parity check vs. a float32 XLA reference (kernel path is bf16 MXU).
    y_ref = _reference_forward(x, params)
    err = float(jnp.max(jnp.abs(y.astype(jnp.float32) - y_ref)))
    assert err < 0.1, f"mismatch vs reference: {err}"
    print("KERNEL_OK")
</pallas_src>

<mosaic_0001>
module attributes {stable_mosaic.version = 11 : i64} {
  func.func @kernel(%arg0: i32, %arg1: memref<1x1024x48xbf16, #tpu.memory_space<vmem>>, %arg2: memref<48x8xbf16, #tpu.memory_space<vmem>>, %arg3: memref<1x1024x8xbf16, #tpu.memory_space<vmem>>) attributes {dimension_semantics = [#tpu.dimension_semantics<parallel>], iteration_bounds = array<i64: 2>, scalar_prefetch = 0 : i64, scratch_operands = 0 : i64, tpu.core_type = #tpu.core_type<tc>, window_params = [{transform_indices = @transform_0, window_bounds = array<i64: 1, 1024, 48>}, {pipeline_mode = #tpu.pipeline_mode<synchronous>, transform_indices = @transform_1, window_bounds = array<i64: 48, 8>}, {transform_indices = @transform_2, window_bounds = array<i64: 1, 1024, 8>}]} {
    %c0 = arith.constant 0 : index
    %c0_0 = arith.constant 0 : index
    %c0_1 = arith.constant 0 : index
    %0 = vector.load %arg1[%c0, %c0_0, %c0_1] : memref<1x1024x48xbf16, #tpu.memory_space<vmem>>, vector<1x1024x48xbf16>
    %1 = vector.shape_cast %0 : vector<1x1024x48xbf16> to vector<1024x48xbf16>
    %c0_2 = arith.constant 0 : index
    %c0_3 = arith.constant 0 : index
    %2 = vector.load %arg2[%c0_2, %c0_3] : memref<48x8xbf16, #tpu.memory_space<vmem>>, vector<48x8xbf16>
    %cst = arith.constant dense<0.000000e+00> : vector<1024x8xf32>
    %3 = tpu.matmul %1, %2, %cst {dimension_numbers = #tpu.dot_dimension_numbers<[1], [0], [0], [1], [0, 0, 1, 1], [], []>} : vector<1024x48xbf16>, vector<48x8xbf16>, vector<1024x8xf32> -> vector<1024x8xf32>
    %4 = vector.shape_cast %3 : vector<1024x8xf32> to vector<1x1024x8xf32>
    %cst_4 = arith.constant 0.000000e+00 : f32
    %5 = vector.broadcast %cst_4 : f32 to vector<1x1024x8xf32>
    %6 = arith.cmpf oge, %4, %5 : vector<1x1024x8xf32>
    %cst_5 = arith.constant 2.000000e-01 : f32
    %7 = vector.broadcast %cst_5 : f32 to vector<1x1024x8xf32>
    %8 = arith.mulf %7, %4 : vector<1x1024x8xf32>
    %9 = arith.select %6, %4, %8 : vector<1x1024x8xi1>, vector<1x1024x8xf32>
    %10 = arith.truncf %9 : vector<1x1024x8xf32> to vector<1x1024x8xbf16>
    %c0_6 = arith.constant 0 : index
    %c0_7 = arith.constant 0 : index
    %c0_8 = arith.constant 0 : index
    %11 = vector.load %arg3[%c0_6, %c0_7, %c0_8] : memref<1x1024x8xbf16, #tpu.memory_space<vmem>>, vector<1x1024x8xbf16>
    tpu.vector_store %arg3[%c0_6, %c0_7, %c0_8], %10 {strides = array<i32>} : memref<1x1024x8xbf16, #tpu.memory_space<vmem>>, vector<1x1024x8xbf16>,
    return
  }
  func.func @transform_0(%arg0: i32) -> (i32, i32, i32) {
    %c0_i32 = arith.constant 0 : i32
    %c0_i32_0 = arith.constant 0 : i32
    %c0_i32_1 = arith.constant 0 : i32
    return %arg0, %c0_i32, %c0_i32_0 : i32, i32, i32
  }
  func.func @transform_1(%arg0: i32) -> (i32, i32) {
    %c0_i32 = arith.constant 0 : i32
    %c0_i32_0 = arith.constant 0 : i32
    %c0_i32_1 = arith.constant 0 : i32
    return %c0_i32, %c0_i32_0 : i32, i32
  }
  func.func @transform_2(%arg0: i32) -> (i32, i32, i32) {
    %c0_i32 = arith.constant 0 : i32
    %c0_i32_0 = arith.constant 0 : i32
    %c0_i32_1 = arith.constant 0 : i32
    return %arg0, %c0_i32, %c0_i32_0 : i32, i32, i32
  }
}

module attributes {stable_mosaic.version = 11 : i64} {
  func.func @kernel(%arg0: i32, %arg1: memref<1x256x128xbf16, #tpu.memory_space<vmem>>, %arg2: memref<128x16xbf16, #tpu.memory_space<vmem>>, %arg3: memref<1x1x16xf32, #tpu.memory_space<vmem>>, %arg4: memref<1x1x16xf32, #tpu.memory_space<vmem>>, %arg5: memref<1x256x16xbf16, #tpu.memory_space<vmem>>) attributes {dimension_semantics = [#tpu.dimension_semantics<parallel>], iteration_bounds = array<i64: 2>, scalar_prefetch = 0 : i64, scratch_operands = 0 : i64, tpu.core_type = #tpu.core_type<tc>, window_params = [{transform_indices = @transform_0, window_bounds = array<i64: 1, 256, 128>}, {pipeline_mode = #tpu.pipeline_mode<synchronous>, transform_indices = @transform_1, window_bounds = array<i64: 128, 16>}, {pipeline_mode = #tpu.pipeline_mode<synchronous>, transform_indices = @transform_2, window_bounds = array<i64: 1, 1, 16>}, {pipeline_mode = #tpu.pipeline_mode<synchronous>, transform_indices = @transform_3, window_bounds = array<i64: 1, 1, 16>}, {transform_indices = @transform_4, window_bounds = array<i64: 1, 256, 16>}]} {
    %c0 = arith.constant 0 : index
    %c0_0 = arith.constant 0 : index
    %c0_1 = arith.constant 0 : index
    %0 = vector.load %arg1[%c0, %c0_0, %c0_1] : memref<1x256x128xbf16, #tpu.memory_space<vmem>>, vector<1x256x128xbf16>
    %1 = vector.shape_cast %0 : vector<1x256x128xbf16> to vector<256x128xbf16>
    %c0_2 = arith.constant 0 : index
    %c0_3 = arith.constant 0 : index
    %2 = vector.load %arg2[%c0_2, %c0_3] : memref<128x16xbf16, #tpu.memory_space<vmem>>, vector<128x16xbf16>
    %cst = arith.constant dense<0.000000e+00> : vector<256x16xf32>
    %3 = tpu.matmul %1, %2, %cst {dimension_numbers = #tpu.dot_dimension_numbers<[1], [0], [0], [1], [0, 0, 1, 1], [], []>} : vector<256x128xbf16>, vector<128x16xbf16>, vector<256x16xf32> -> vector<256x16xf32>
    %4 = vector.shape_cast %3 : vector<256x16xf32> to vector<1x256x16xf32>
    %c0_4 = arith.constant 0 : index
    %c0_5 = arith.constant 0 : index
    %c0_6 = arith.constant 0 : index
    %5 = vector.load %arg3[%c0_4, %c0_5, %c0_6] : memref<1x1x16xf32, #tpu.memory_space<vmem>>, vector<1x1x16xf32>
    %c0_7 = arith.constant 0 : index
    %c0_8 = arith.constant 0 : index
    %c0_9 = arith.constant 0 : index
    %6 = vector.load %arg4[%c0_7, %c0_8, %c0_9] : memref<1x1x16xf32, #tpu.memory_space<vmem>>, vector<1x1x16xf32>
    %cst_10 = arith.constant dense<0.000000e+00> : vector<1x16xf32>
    %7 = vector.multi_reduction <add>, %4, %cst_10 [1] : vector<1x256x16xf32> to vector<1x16xf32>
    %8 = vector.shape_cast %7 : vector<1x16xf32> to vector<1x1x16xf32>
    %cst_11 = arith.constant 2.560000e+02 : f32
    %9 = vector.broadcast %cst_11 : f32 to vector<1x1x16xf32>
    %10 = arith.divf %8, %9 : vector<1x1x16xf32>
    %11 = vector.broadcast %10 : vector<1x1x16xf32> to vector<1x256x16xf32>
    %12 = arith.subf %4, %11 : vector<1x256x16xf32>
    %13 = arith.mulf %12, %12 : vector<1x256x16xf32>
    %cst_12 = arith.constant dense<0.000000e+00> : vector<1x16xf32>
    %14 = vector.multi_reduction <add>, %13, %cst_12 [1] : vector<1x256x16xf32> to vector<1x16xf32>
    %15 = vector.shape_cast %14 : vector<1x16xf32> to vector<1x1x16xf32>
    %cst_13 = arith.constant 2.560000e+02 : f32
    %16 = vector.broadcast %cst_13 : f32 to vector<1x1x16xf32>
    %17 = arith.divf %15, %16 : vector<1x1x16xf32>
    %cst_14 = arith.constant 9.99999974E-6 : f32
    %18 = vector.broadcast %cst_14 : f32 to vector<1x1x16xf32>
    %19 = arith.addf %17, %18 : vector<1x1x16xf32>
    %20 = math.rsqrt %19 : vector<1x1x16xf32>
    %21 = arith.mulf %5, %20 : vector<1x1x16xf32>
    %22 = vector.broadcast %21 : vector<1x1x16xf32> to vector<1x256x16xf32>
    %23 = arith.mulf %12, %22 : vector<1x256x16xf32>
    %24 = vector.broadcast %6 : vector<1x1x16xf32> to vector<1x256x16xf32>
    %25 = arith.addf %23, %24 : vector<1x256x16xf32>
    %cst_15 = arith.constant 0.000000e+00 : f32
    %26 = vector.broadcast %cst_15 : f32 to vector<1x256x16xf32>
    %27 = arith.cmpf oge, %25, %26 : vector<1x256x16xf32>
    %cst_16 = arith.constant 2.000000e-01 : f32
    %28 = vector.broadcast %cst_16 : f32 to vector<1x256x16xf32>
    %29 = arith.mulf %28, %25 : vector<1x256x16xf32>
    %30 = arith.select %27, %25, %29 : vector<1x256x16xi1>, vector<1x256x16xf32>
    %31 = arith.truncf %30 : vector<1x256x16xf32> to vector<1x256x16xbf16>
    %c0_17 = arith.constant 0 : index
    %c0_18 = arith.constant 0 : index
    %c0_19 = arith.constant 0 : index
    %32 = vector.load %arg5[%c0_17, %c0_18, %c0_19] : memref<1x256x16xbf16, #tpu.memory_space<vmem>>, vector<1x256x16xbf16>
    tpu.vector_store %arg5[%c0_17, %c0_18, %c0_19], %31 {strides = array<i32>} : memref<1x256x16xbf16, #tpu.memory_space<vmem>>, vector<1x256x16xbf16>,
    return
  }
  func.func @transform_0(%arg0: i32) -> (i32, i32, i32) {
    %c0_i32 = arith.constant 0 : i32
    %c0_i32_0 = arith.constant 0 : i32
    %c0_i32_1 = arith.constant 0 : i32
    return %arg0, %c0_i32, %c0_i32_0 : i32, i32, i32
  }
  func.func @transform_1(%arg0: i32) -> (i32, i32) {
    %c0_i32 = arith.constant 0 : i32
    %c0_i32_0 = arith.constant 0 : i32
    %c0_i32_1 = arith.constant 0 : i32
    return %c0_i32, %c0_i32_0 : i32, i32
  }
  func.func @transform_2(%arg0: i32) -> (i32, i32, i32) {
    %c0_i32 = arith.constant 0 : i32
    %c0_i32_0 = arith.constant 0 : i32
    %c0_i32_1 = arith.constant 0 : i32
    %c0_i32_2 = arith.constant 0 : i32
    return %c0_i32, %c0_i32_0, %c0_i32_1 : i32, i32, i32
  }
  func.func @transform_3(%arg0: i32) -> (i32, i32, i32) {
    %c0_i32 = arith.constant 0 : i32
    %c0_i32_0 = arith.constant 0 : i32
    %c0_i32_1 = arith.constant 0 : i32
    %c0_i32_2 = arith.constant 0 : i32
    return %c0_i32, %c0_i32_0, %c0_i32_1 : i32, i32, i32
  }
  func.func @transform_4(%arg0: i32) -> (i32, i32, i32) {
    %c0_i32 = arith.constant 0 : i32
    %c0_i32_0 = arith.constant 0 : i32
    %c0_i32_1 = arith.constant 0 : i32
    return %arg0, %c0_i32, %c0_i32_0 : i32, i32, i32
  }
}

module attributes {stable_mosaic.version = 11 : i64} {
  func.func @kernel(%arg0: i32, %arg1: memref<1x64x256xbf16, #tpu.memory_space<vmem>>, %arg2: memref<256x32xbf16, #tpu.memory_space<vmem>>, %arg3: memref<1x1x32xf32, #tpu.memory_space<vmem>>, %arg4: memref<1x1x32xf32, #tpu.memory_space<vmem>>, %arg5: memref<256x64xbf16, #tpu.memory_space<vmem>>, %arg6: memref<16x32x64xbf16, #tpu.memory_space<vmem>>, %arg7: memref<1x1x64xf32, #tpu.memory_space<vmem>>, %arg8: memref<1x1x64xf32, #tpu.memory_space<vmem>>, %arg9: memref<1x16x64xf32, #tpu.memory_space<vmem>>, %arg10: memref<1x1x1xf32, #tpu.memory_space<vmem>>, %arg11: memref<1x256x32xbf16, #tpu.memory_space<vmem>>) attributes {dimension_semantics = [#tpu.dimension_semantics<parallel>], iteration_bounds = array<i64: 2>, scalar_prefetch = 0 : i64, scratch_operands = 1 : i64, tpu.core_type = #tpu.core_type<tc>, window_params = [{transform_indices = @transform_0, window_bounds = array<i64: 1, 64, 256>}, {pipeline_mode = #tpu.pipeline_mode<synchronous>, transform_indices = @transform_1, window_bounds = array<i64: 256, 32>}, {pipeline_mode = #tpu.pipeline_mode<synchronous>, transform_indices = @transform_2, window_bounds = array<i64: 1, 1, 32>}, {pipeline_mode = #tpu.pipeline_mode<synchronous>, transform_indices = @transform_3, window_bounds = array<i64: 1, 1, 32>}, {pipeline_mode = #tpu.pipeline_mode<synchronous>, transform_indices = @transform_4, window_bounds = array<i64: 256, 64>}, {pipeline_mode = #tpu.pipeline_mode<synchronous>, transform_indices = @transform_5, window_bounds = array<i64: 16, 32, 64>}, {pipeline_mode = #tpu.pipeline_mode<synchronous>, transform_indices = @transform_6, window_bounds = array<i64: 1, 1, 64>}, {pipeline_mode = #tpu.pipeline_mode<synchronous>, transform_indices = @transform_7, window_bounds = array<i64: 1, 1, 64>}, {pipeline_mode = #tpu.pipeline_mode<synchronous>, transform_indices = @transform_8, window_bounds = array<i64: 1, 16, 64>}, {transform_indices = @transform_9, window_bounds = array<i64: 1, 1, 1>}]} {
    %c0 = arith.constant 0 : index
    %c0_0 = arith.constant 0 : index
    %c0_1 = arith.constant 0 : index
    %0 = vector.load %arg1[%c0, %c0_0, %c0_1] : memref<1x64x256xbf16, #tpu.memory_space<vmem>>, vector<1x64x256xbf16>
    %1 = vector.shape_cast %0 : vector<1x64x256xbf16> to vector<64x256xbf16>
    %c0_2 = arith.constant 0 : index
    %c0_3 = arith.constant 0 : index
    %2 = vector.load %arg2[%c0_2, %c0_3] : memref<256x32xbf16, #tpu.memory_space<vmem>>, vector<256x32xbf16>
    %cst = arith.constant dense<0.000000e+00> : vector<64x32xf32>
    %3 = tpu.matmul %1, %2, %cst {dimension_numbers = #tpu.dot_dimension_numbers<[1], [0], [0], [1], [0, 0, 1, 1], [], []>} : vector<64x256xbf16>, vector<256x32xbf16>, vector<64x32xf32> -> vector<64x32xf32>
    %4 = vector.shape_cast %3 : vector<64x32xf32> to vector<1x64x32xf32>
    %c0_4 = arith.constant 0 : index
    %c0_5 = arith.constant 0 : index
    %c0_6 = arith.constant 0 : index
    %5 = vector.load %arg3[%c0_4, %c0_5, %c0_6] : memref<1x1x32xf32, #tpu.memory_space<vmem>>, vector<1x1x32xf32>
    %c0_7 = arith.constant 0 : index
    %c0_8 = arith.constant 0 : index
    %c0_9 = arith.constant 0 : index
    %6 = vector.load %arg4[%c0_7, %c0_8, %c0_9] : memref<1x1x32xf32, #tpu.memory_space<vmem>>, vector<1x1x32xf32>
    %cst_10 = arith.constant dense<0.000000e+00> : vector<1x32xf32>
    %7 = vector.multi_reduction <add>, %4, %cst_10 [1] : vector<1x64x32xf32> to vector<1x32xf32>
    %8 = vector.shape_cast %7 : vector<1x32xf32> to vector<1x1x32xf32>
    %cst_11 = arith.constant 6.400000e+01 : f32
    %9 = vector.broadcast %cst_11 : f32 to vector<1x1x32xf32>
    %10 = arith.divf %8, %9 : vector<1x1x32xf32>
    %11 = vector.broadcast %10 : vector<1x1x32xf32> to vector<1x64x32xf32>
    %12 = arith.subf %4, %11 : vector<1x64x32xf32>
    %13 = arith.mulf %12, %12 : vector<1x64x32xf32>
    %cst_12 = arith.constant dense<0.000000e+00> : vector<1x32xf32>
    %14 = vector.multi_reduction <add>, %13, %cst_12 [1] : vector<1x64x32xf32> to vector<1x32xf32>
    %15 = vector.shape_cast %14 : vector<1x32xf32> to vector<1x1x32xf32>
    %cst_13 = arith.constant 6.400000e+01 : f32
    %16 = vector.broadcast %cst_13 : f32 to vector<1x1x32xf32>
    %17 = arith.divf %15, %16 : vector<1x1x32xf32>
    %cst_14 = arith.constant 9.99999974E-6 : f32
    %18 = vector.broadcast %cst_14 : f32 to vector<1x1x32xf32>
    %19 = arith.addf %17, %18 : vector<1x1x32xf32>
    %20 = math.rsqrt %19 : vector<1x1x32xf32>
    %21 = arith.mulf %5, %20 : vector<1x1x32xf32>
    %22 = vector.broadcast %21 : vector<1x1x32xf32> to vector<1x64x32xf32>
    %23 = arith.mulf %12, %22 : vector<1x64x32xf32>
    %24 = vector.broadcast %6 : vector<1x1x32xf32> to vector<1x64x32xf32>
    %25 = arith.addf %23, %24 : vector<1x64x32xf32>
    %cst_15 = arith.constant 0.000000e+00 : f32
    %26 = vector.broadcast %cst_15 : f32 to vector<1x64x32xf32>
    %27 = arith.cmpf oge, %25, %26 : vector<1x64x32xf32>
    %cst_16 = arith.constant 2.000000e-01 : f32
    %28 = vector.broadcast %cst_16 : f32 to vector<1x64x32xf32>
    %29 = arith.mulf %28, %25 : vector<1x64x32xf32>
    %30 = arith.select %27, %25, %29 : vector<1x64x32xi1>, vector<1x64x32xf32>
    %31 = arith.truncf %30 : vector<1x64x32xf32> to vector<1x64x32xbf16>
    %c0_17 = arith.constant 0 : index
    %c0_18 = arith.constant 0 : index
    %32 = vector.load %arg5[%c0_17, %c0_18] : memref<256x64xbf16, #tpu.memory_space<vmem>>, vector<256x64xbf16>
    %33 = vector.shape_cast %31 : vector<1x64x32xbf16> to vector<64x32xbf16>
    %cst_19 = arith.constant dense<0.000000e+00> : vector<256x32xf32>
    %34 = tpu.matmul %32, %33, %cst_19 {dimension_numbers = #tpu.dot_dimension_numbers<[1], [0], [0], [1], [0, 0, 1, 1], [], []>} : vector<256x64xbf16>, vector<64x32xbf16>, vector<256x32xf32> -> vector<256x32xf32>
    %35 = arith.truncf %34 : vector<256x32xf32> to vector<256x32xbf16>
    %c0_20 = arith.constant 0 : index
    %c0_21 = arith.constant 0 : index
    %c0_22 = arith.constant 0 : index
    %36 = vector.load %arg11[%c0_20, %c0_21, %c0_22] : memref<1x256x32xbf16, #tpu.memory_space<vmem>>, vector<1x256x32xbf16>
    %37 = vector.shape_cast %36 : vector<1x256x32xbf16> to vector<256x32xbf16>
    %38 = vector.shape_cast %35 : vector<256x32xbf16> to vector<1x256x32xbf16>
    tpu.vector_store %arg11[%c0_20, %c0_21, %c0_22], %38 {strides = array<i32>} : memref<1x256x32xbf16, #tpu.memory_space<vmem>>, vector<1x256x32xbf16>,
    %c0_23 = arith.constant 0 : index
    %c0_24 = arith.constant 0 : index
    %c0_25 = arith.constant 0 : index
    %39 = vector.load %arg11[%c0_23, %c0_24, %c0_25] : memref<1x256x32xbf16, #tpu.memory_space<vmem>>, vector<1x16x32xbf16>
    %40 = vector.shape_cast %39 : vector<1x16x32xbf16> to vector<16x32xbf16>
    %c0_26 = arith.constant 0 : index
    %c0_27 = arith.constant 0 : index
    %c0_28 = arith.constant 0 : index
    %41 = vector.load %arg6[%c0_26, %c0_27, %c0_28] : memref<16x32x64xbf16, #tpu.memory_space<vmem>>, vector<1x32x64xbf16>
    %42 = vector.shape_cast %41 : vector<1x32x64xbf16> to vector<32x64xbf16>
    %cst_29 = arith.constant dense<0.000000e+00> : vector<16x64xf32>
    %43 = tpu.matmul %40, %42, %cst_29 {dimension_numbers = #tpu.dot_dimension_numbers<[1], [0], [0], [1], [0, 0, 1, 1], [], []>} : vector<16x32xbf16>, vector<32x64xbf16>, vector<16x64xf32> -> vector<16x64xf32>
    %c0_30 = arith.constant 0 : index
    %c16 = arith.constant 16 : index
    %c0_31 = arith.constant 0 : index
    %44 = vector.load %arg11[%c0_30, %c16, %c0_31] : memref<1x256x32xbf16, #tpu.memory_space<vmem>>, vector<1x16x32xbf16>
    %45 = vector.shape_cast %44 : vector<1x16x32xbf16> to vector<16x32xbf16>
    %c1 = arith.constant 1 : index
    %c0_32 = arith.constant 0 : index
    %c0_33 = arith.constant 0 : index
    %46 = vector.load %arg6[%c1, %c0_32, %c0_33] : memref<16x32x64xbf16, #tpu.memory_space<vmem>>, vector<1x32x64xbf16>
    %47 = vector.shape_cast %46 : vector<1x32x64xbf16> to vector<32x64xbf16>
    %cst_34 = arith.constant dense<0.000000e+00> : vector<16x64xf32>
    %48 = tpu.matmul %45, %47, %cst_34 {dimension_numbers = #tpu.dot_dimension_numbers<[1], [0], [0], [1], [0, 0, 1, 1], [], []>} : vector<16x32xbf16>, vector<32x64xbf16>, vector<16x64xf32> -> vector<16x64xf32>
    %49 = arith.addf %43, %48 : vector<16x64xf32>
    %c0_35 = arith.constant 0 : index
    %c32 = arith.constant 32 : index
    %c0_36 = arith.constant 0 : index
    %50 = vector.load %arg11[%c0_35, %c32, %c0_36] : memref<1x256x32xbf16, #tpu.memory_space<vmem>>, vector<1x16x32xbf16>
    %51 = vector.shape_cast %50 : vector<1x16x32xbf16> to vector<16x32xbf16>
    %c2 = arith.constant 2 : index
    %c0_37 = arith.constant 0 : index
    %c0_38 = arith.constant 0 : index
    %52 = vector.load %arg6[%c2, %c0_37, %c0_38] : memref<16x32x64xbf16, #tpu.memory_space<vmem>>, vector<1x32x64xbf16>
    %53 = vector.shape_cast %52 : vector<1x32x64xbf16> to vector<32x64xbf16>
    %cst_39 = arith.constant dense<0.000000e+00> : vector<16x64xf32>
    %54 = tpu.matmul %51, %53, %cst_39 {dimension_numbers = #tpu.dot_dimension_numbers<[1], [0], [0], [1], [0, 0, 1, 1], [], []>} : vector<16x32xbf16>, vector<32x64xbf16>, vector<16x64xf32> -> vector<16x64xf32>
    %55 = arith.addf %49, %54 : vector<16x64xf32>
    %c0_40 = arith.constant 0 : index
    %c48 = arith.constant 48 : index
    %c0_41 = arith.constant 0 : index
    %56 = vector.load %arg11[%c0_40, %c48, %c0_41] : memref<1x256x32xbf16, #tpu.memory_space<vmem>>, vector<1x16x32xbf16>
    %57 = vector.shape_cast %56 : vector<1x16x32xbf16> to vector<16x32xbf16>
    %c3 = arith.constant 3 : index
    %c0_42 = arith.constant 0 : index
    %c0_43 = arith.constant 0 : index
    %58 = vector.load %arg6[%c3, %c0_42, %c0_43] : memref<16x32x64xbf16, #tpu.memory_space<vmem>>, vector<1x32x64xbf16>
    %59 = vector.shape_cast %58 : vector<1x32x64xbf16> to vector<32x64xbf16>
    %cst_44 = arith.constant dense<0.000000e+00> : vector<16x64xf32>
    %60 = tpu.matmul %57, %59, %cst_44 {dimension_numbers = #tpu.dot_dimension_numbers<[1], [0], [0], [1], [0, 0, 1, 1], [], []>} : vector<16x32xbf16>, vector<32x64xbf16>, vector<16x64xf32> -> vector<16x64xf32>
    %61 = arith.addf %55, %60 : vector<16x64xf32>
    %c0_45 = arith.constant 0 : index
    %c64 = arith.constant 64 : index
    %c0_46 = arith.constant 0 : index
    %62 = vector.load %arg11[%c0_45, %c64, %c0_46] : memref<1x256x32xbf16, #tpu.memory_space<vmem>>, vector<1x16x32xbf16>
    %63 = vector.shape_cast %62 : vector<1x16x32xbf16> to vector<16x32xbf16>
    %c4 = arith.constant 4 : index
    %c0_47 = arith.constant 0 : index
    %c0_48 = arith.constant 0 : index
    %64 = vector.load %arg6[%c4, %c0_47, %c0_48] : memref<16x32x64xbf16, #tpu.memory_space<vmem>>, vector<1x32x64xbf16>
    %65 = vector.shape_cast %64 : vector<1x32x64xbf16> to vector<32x64xbf16>
    %cst_49 = arith.constant dense<0.000000e+00> : vector<16x64xf32>
    %66 = tpu.matmul %63, %65, %cst_49 {dimension_numbers = #tpu.dot_dimension_numbers<[1], [0], [0], [1], [0, 0, 1, 1], [], []>} : vector<16x32xbf16>, vector<32x64xbf16>, vector<16x64xf32> -> vector<16x64xf32>
    %67 = arith.addf %61, %66 : vector<16x64xf32>
    %c0_50 = arith.constant 0 : index
    %c80 = arith.constant 80 : index
    %c0_51 = arith.constant 0 : index
    %68 = vector.load %arg11[%c0_50, %c80, %c0_51] : memref<1x256x32xbf16, #tpu.memory_space<vmem>>, vector<1x16x32xbf16>
    %69 = vector.shape_cast %68 : vector<1x16x32xbf16> to vector<16x32xbf16>
    %c5 = arith.constant 5 : index
    %c0_52 = arith.constant 0 : index
    %c0_53 = arith.constant 0 : index
    %70 = vector.load %arg6[%c5, %c0_52, %c0_53] : memref<16x32x64xbf16, #tpu.memory_space<vmem>>, vector<1x32x64xbf16>
    %71 = vector.shape_cast %70 : vector<1x32x64xbf16> to vector<32x64xbf16>
    %cst_54 = arith.constant dense<0.000000e+00> : vector<16x64xf32>
    %72 = tpu.matmul %69, %71, %cst_54 {dimension_numbers = #tpu.dot_dimension_numbers<[1], [0], [0], [1], [0, 0, 1, 1], [], []>} : vector<16x32xbf16>, vector<32x64xbf16>, vector<16x64xf32> -> vector<16x64xf32>
    %73 = arith.addf %67, %72 : vector<16x64xf32>
    %c0_55 = arith.constant 0 : index
    %c96 = arith.constant 96 : index
    %c0_56 = arith.constant 0 : index
    %74 = vector.load %arg11[%c0_55, %c96, %c0_56] : memref<1x256x32xbf16, #tpu.memory_space<vmem>>, vector<1x16x32xbf16>
    %75 = vector.shape_cast %74 : vector<1x16x32xbf16> to vector<16x32xbf16>
    %c6 = arith.constant 6 : index
    %c0_57 = arith.constant 0 : index
    %c0_58 = arith.constant 0 : index
    %76 = vector.load %arg6[%c6, %c0_57, %c0_58] : memref<16x32x64xbf16, #tpu.memory_space<vmem>>, vector<1x32x64xbf16>
    %77 = vector.shape_cast %76 : vector<1x32x64xbf16> to vector<32x64xbf16>
    %cst_59 = arith.constant dense<0.000000e+00> : vector<16x64xf32>
    %78 = tpu.matmul %75, %77, %cst_59 {dimension_numbers = #tpu.dot_dimension_numbers<[1], [0], [0], [1], [0, 0, 1, 1], [], []>} : vector<16x32xbf16>, vector<32x64xbf16>, vector<16x64xf32> -> vector<16x64xf32>
    %79 = arith.addf %73, %78 : vector<16x64xf32>
    %c0_60 = arith.constant 0 : index
    %c112 = arith.constant 112 : index
    %c0_61 = arith.constant 0 : index
    %80 = vector.load %arg11[%c0_60, %c112, %c0_61] : memref<1x256x32xbf16, #tpu.memory_space<vmem>>, vector<1x16x32xbf16>
    %81 = vector.shape_cast %80 : vector<1x16x32xbf16> to vector<16x32xbf16>
    %c7 = arith.constant 7 : index
    %c0_62 = arith.constant 0 : index
    %c0_63 = arith.constant 0 : index
    %82 = vector.load %arg6[%c7, %c0_62, %c0_63] : memref<16x32x64xbf16, #tpu.memory_space<vmem>>, vector<1x32x64xbf16>
    %83 = vector.shape_cast %82 : vector<1x32x64xbf16> to vector<32x64xbf16>
    %cst_64 = arith.constant dense<0.000000e+00> : vector<16x64xf32>
    %84 = tpu.matmul %81, %83, %cst_64 {dimension_numbers = #tpu.dot_dimension_numbers<[1], [0], [0], [1], [0, 0, 1, 1], [], []>} : vector<16x32xbf16>, vector<32x64xbf16>, vector<16x64xf32> -> vector<16x64xf32>
    %85 = arith.addf %79, %84 : vector<16x64xf32>
    %c0_65 = arith.constant 0 : index
    %c128 = arith.constant 128 : index
    %c0_66 = arith.constant 0 : index
    %86 = vector.load %arg11[%c0_65, %c128, %c0_66] : memref<1x256x32xbf16, #tpu.memory_space<vmem>>, vector<1x16x32xbf16>
    %87 = vector.shape_cast %86 : vector<1x16x32xbf16> to vector<16x32xbf16>
    %c8 = arith.constant 8 : index
    %c0_67 = arith.constant 0 : index
    %c0_68 = arith.constant 0 : index
    %88 = vector.load %arg6[%c8, %c0_67, %c0_68] : memref<16x32x64xbf16, #tpu.memory_space<vmem>>, vector<1x32x64xbf16>
    %89 = vector.shape_cast %88 : vector<1x32x64xbf16> to vector<32x64xbf16>
    %cst_69 = arith.constant dense<0.000000e+00> : vector<16x64xf32>
    %90 = tpu.matmul %87, %89, %cst_69 {dimension_numbers = #tpu.dot_dimension_numbers<[1], [0], [0], [1], [0, 0, 1, 1], [], []>} : vector<16x32xbf16>, vector<32x64xbf16>, vector<16x64xf32> -> vector<16x64xf32>
    %91 = arith.addf %85, %90 : vector<16x64xf32>
    %c0_70 = arith.constant 0 : index
    %c144 = arith.constant 144 : index
    %c0_71 = arith.constant 0 : index
    %92 = vector.load %arg11[%c0_70, %c144, %c0_71] : memref<1x256x32xbf16, #tpu.memory_space<vmem>>, vector<1x16x32xbf16>
    %93 = vector.shape_cast %92 : vector<1x16x32xbf16> to vector<16x32xbf16>
    %c9 = arith.constant 9 : index
    %c0_72 = arith.constant 0 : index
    %c0_73 = arith.constant 0 : index
    %94 = vector.load %arg6[%c9, %c0_72, %c0_73] : memref<16x32x64xbf16, #tpu.memory_space<vmem>>, vector<1x32x64xbf16>
    %95 = vector.shape_cast %94 : vector<1x32x64xbf16> to vector<32x64xbf16>
    %cst_74 = arith.constant dense<0.000000e+00> : vector<16x64xf32>
    %96 = tpu.matmul %93, %95, %cst_74 {dimension_numbers = #tpu.dot_dimension_numbers<[1], [0], [0], [1], [0, 0, 1, 1], [], []>} : vector<16x32xbf16>, vector<32x64xbf16>, vector<16x64xf32> -> vector<16x64xf32>
    %97 = arith.addf %91, %96 : vector<16x64xf32>
    %c0_75 = arith.constant 0 : index
    %c160 = arith.constant 160 : index
    %c0_76 = arith.constant 0 : index
    %98 = vector.load %arg11[%c0_75, %c160, %c0_76] : memref<1x256x32xbf16, #tpu.memory_space<vmem>>, vector<1x16x32xbf16>
    %99 = vector.shape_cast %98 : vector<1x16x32xbf16> to vector<16x32xbf16>
    %c10 = arith.constant 10 : index
    %c0_77 = arith.constant 0 : index
    %c0_78 = arith.constant 0 : index
    %100 = vector.load %arg6[%c10, %c0_77, %c0_78] : memref<16x32x64xbf16, #tpu.memory_space<vmem>>, vector<1x32x64xbf16>
    %101 = vector.shape_cast %100 : vector<1x32x64xbf16> to vector<32x64xbf16>
    %cst_79 = arith.constant dense<0.000000e+00> : vector<16x64xf32>
    %102 = tpu.matmul %99, %101, %cst_79 {dimension_numbers = #tpu.dot_dimension_numbers<[1], [0], [0], [1], [0, 0, 1, 1], [], []>} : vector<16x32xbf16>, vector<32x64xbf16>, vector<16x64xf32> -> vector<16x64xf32>
    %103 = arith.addf %97, %102 : vector<16x64xf32>
    %c0_80 = arith.constant 0 : index
    %c176 = arith.constant 176 : index
    %c0_81 = arith.constant 0 : index
    %104 = vector.load %arg11[%c0_80, %c176, %c0_81] : memref<1x256x32xbf16, #tpu.memory_space<vmem>>, vector<1x16x32xbf16>
    %105 = vector.shape_cast %104 : vector<1x16x32xbf16> to vector<16x32xbf16>
    %c11 = arith.constant 11 : index
    %c0_82 = arith.constant 0 : index
    %c0_83 = arith.constant 0 : index
    %106 = vector.load %arg6[%c11, %c0_82, %c0_83] : memref<16x32x64xbf16, #tpu.memory_space<vmem>>, vector<1x32x64xbf16>
    %107 = vector.shape_cast %106 : vector<1x32x64xbf16> to vector<32x64xbf16>
    %cst_84 = arith.constant dense<0.000000e+00> : vector<16x64xf32>
    %108 = tpu.matmul %105, %107, %cst_84 {dimension_numbers = #tpu.dot_dimension_numbers<[1], [0], [0], [1], [0, 0, 1, 1], [], []>} : vector<16x32xbf16>, vector<32x64xbf16>, vector<16x64xf32> -> vector<16x64xf32>
    %109 = arith.addf %103, %108 : vector<16x64xf32>
    %c0_85 = arith.constant 0 : index
    %c192 = arith.constant 192 : index
    %c0_86 = arith.constant 0 : index
    %110 = vector.load %arg11[%c0_85, %c192, %c0_86] : memref<1x256x32xbf16, #tpu.memory_space<vmem>>, vector<1x16x32xbf16>
    %111 = vector.shape_cast %110 : vector<1x16x32xbf16> to vector<16x32xbf16>
    %c12 = arith.constant 12 : index
    %c0_87 = arith.constant 0 : index
    %c0_88 = arith.constant 0 : index
    %112 = vector.load %arg6[%c12, %c0_87, %c0_88] : memref<16x32x64xbf16, #tpu.memory_space<vmem>>, vector<1x32x64xbf16>
    %113 = vector.shape_cast %112 : vector<1x32x64xbf16> to vector<32x64xbf16>
    %cst_89 = arith.constant dense<0.000000e+00> : vector<16x64xf32>
    %114 = tpu.matmul %111, %113, %cst_89 {dimension_numbers = #tpu.dot_dimension_numbers<[1], [0], [0], [1], [0, 0, 1, 1], [], []>} : vector<16x32xbf16>, vector<32x64xbf16>, vector<16x64xf32> -> vector<16x64xf32>
    %115 = arith.addf %109, %114 : vector<16x64xf32>
    %c0_90 = arith.constant 0 : index
    %c208 = arith.constant 208 : index
    %c0_91 = arith.constant 0 : index
    %116 = vector.load %arg11[%c0_90, %c208, %c0_91] : memref<1x256x32xbf16, #tpu.memory_space<vmem>>, vector<1x16x32xbf16>
    %117 = vector.shape_cast %116 : vector<1x16x32xbf16> to vector<16x32xbf16>
    %c13 = arith.constant 13 : index
    %c0_92 = arith.constant 0 : index
    %c0_93 = arith.constant 0 : index
    %118 = vector.load %arg6[%c13, %c0_92, %c0_93] : memref<16x32x64xbf16, #tpu.memory_space<vmem>>, vector<1x32x64xbf16>
    %119 = vector.shape_cast %118 : vector<1x32x64xbf16> to vector<32x64xbf16>
    %cst_94 = arith.constant dense<0.000000e+00> : vector<16x64xf32>
    %120 = tpu.matmul %117, %119, %cst_94 {dimension_numbers = #tpu.dot_dimension_numbers<[1], [0], [0], [1], [0, 0, 1, 1], [], []>} : vector<16x32xbf16>, vector<32x64xbf16>, vector<16x64xf32> -> vector<16x64xf32>
    %121 = arith.addf %115, %120 : vector<16x64xf32>
    %c0_95 = arith.constant 0 : index
    %c224 = arith.constant 224 : index
    %c0_96 = arith.constant 0 : index
    %122 = vector.load %arg11[%c0_95, %c224, %c0_96] : memref<1x256x32xbf16, #tpu.memory_space<vmem>>, vector<1x16x32xbf16>
    %123 = vector.shape_cast %122 : vector<1x16x32xbf16> to vector<16x32xbf16>
    %c14 = arith.constant 14 : index
    %c0_97 = arith.constant 0 : index
    %c0_98 = arith.constant 0 : index
    %124 = vector.load %arg6[%c14, %c0_97, %c0_98] : memref<16x32x64xbf16, #tpu.memory_space<vmem>>, vector<1x32x64xbf16>
    %125 = vector.shape_cast %124 : vector<1x32x64xbf16> to vector<32x64xbf16>
    %cst_99 = arith.constant dense<0.000000e+00> : vector<16x64xf32>
    %126 = tpu.matmul %123, %125, %cst_99 {dimension_numbers = #tpu.dot_dimension_numbers<[1], [0], [0], [1], [0, 0, 1, 1], [], []>} : vector<16x32xbf16>, vector<32x64xbf16>, vector<16x64xf32> -> vector<16x64xf32>
    %127 = arith.addf %121, %126 : vector<16x64xf32>
    %c0_100 = arith.constant 0 : index
    %c240 = arith.constant 240 : index
    %c0_101 = arith.constant 0 : index
    %128 = vector.load %arg11[%c0_100, %c240, %c0_101] : memref<1x256x32xbf16, #tpu.memory_space<vmem>>, vector<1x16x32xbf16>
    %129 = vector.shape_cast %128 : vector<1x16x32xbf16> to vector<16x32xbf16>
    %c15 = arith.constant 15 : index
    %c0_102 = arith.constant 0 : index
    %c0_103 = arith.constant 0 : index
    %130 = vector.load %arg6[%c15, %c0_102, %c0_103] : memref<16x32x64xbf16, #tpu.memory_space<vmem>>, vector<1x32x64xbf16>
    %131 = vector.shape_cast %130 : vector<1x32x64xbf16> to vector<32x64xbf16>
    %cst_104 = arith.constant dense<0.000000e+00> : vector<16x64xf32>
    %132 = tpu.matmul %129, %131, %cst_104 {dimension_numbers = #tpu.dot_dimension_numbers<[1], [0], [0], [1], [0, 0, 1, 1], [], []>} : vector<16x32xbf16>, vector<32x64xbf16>, vector<16x64xf32> -> vector<16x64xf32>
    %133 = arith.addf %127, %132 : vector<16x64xf32>
    %134 = vector.shape_cast %133 : vector<16x64xf32> to vector<1x16x64xf32>
    %c0_105 = arith.constant 0 : index
    %c0_106 = arith.constant 0 : index
    %c0_107 = arith.constant 0 : index
    %135 = vector.load %arg7[%c0_105, %c0_106, %c0_107] : memref<1x1x64xf32, #tpu.memory_space<vmem>>, vector<1x1x64xf32>
    %c0_108 = arith.constant 0 : index
    %c0_109 = arith.constant 0 : index
    %c0_110 = arith.constant 0 : index
    %136 = vector.load %arg8[%c0_108, %c0_109, %c0_110] : memref<1x1x64xf32, #tpu.memory_space<vmem>>, vector<1x1x64xf32>
    %cst_111 = arith.constant dense<0.000000e+00> : vector<1x64xf32>
    %137 = vector.multi_reduction <add>, %134, %cst_111 [1] : vector<1x16x64xf32> to vector<1x64xf32>
    %138 = vector.shape_cast %137 : vector<1x64xf32> to vector<1x1x64xf32>
    %cst_112 = arith.constant 1.600000e+01 : f32
    %139 = vector.broadcast %cst_112 : f32 to vector<1x1x64xf32>
    %140 = arith.divf %138, %139 : vector<1x1x64xf32>
    %141 = vector.broadcast %140 : vector<1x1x64xf32> to vector<1x16x64xf32>
    %142 = arith.subf %134, %141 : vector<1x16x64xf32>
    %143 = arith.mulf %142, %142 : vector<1x16x64xf32>
    %cst_113 = arith.constant dense<0.000000e+00> : vector<1x64xf32>
    %144 = vector.multi_reduction <add>, %143, %cst_113 [1] : vector<1x16x64xf32> to vector<1x64xf32>
    %145 = vector.shape_cast %144 : vector<1x64xf32> to vector<1x1x64xf32>
    %cst_114 = arith.constant 1.600000e+01 : f32
    %146 = vector.broadcast %cst_114 : f32 to vector<1x1x64xf32>
    %147 = arith.divf %145, %146 : vector<1x1x64xf32>
    %cst_115 = arith.constant 9.99999974E-6 : f32
    %148 = vector.broadcast %cst_115 : f32 to vector<1x1x64xf32>
    %149 = arith.addf %147, %148 : vector<1x1x64xf32>
    %150 = math.rsqrt %149 : vector<1x1x64xf32>
    %151 = arith.mulf %135, %150 : vector<1x1x64xf32>
    %152 = vector.broadcast %151 : vector<1x1x64xf32> to vector<1x16x64xf32>
    %153 = arith.mulf %142, %152 : vector<1x16x64xf32>
    %154 = vector.broadcast %136 : vector<1x1x64xf32> to vector<1x16x64xf32>
    %155 = arith.addf %153, %154 : vector<1x16x64xf32>
    %cst_116 = arith.constant 0.000000e+00 : f32
    %156 = vector.broadcast %cst_116 : f32 to vector<1x16x64xf32>
    %157 = arith.cmpf oge, %155, %156 : vector<1x16x64xf32>
    %cst_117 = arith.constant 2.000000e-01 : f32
    %158 = vector.broadcast %cst_117 : f32 to vector<1x16x64xf32>
    %159 = arith.mulf %158, %155 : vector<1x16x64xf32>
    %160 = arith.select %157, %155, %159 : vector<1x16x64xi1>, vector<1x16x64xf32>
    %c0_118 = arith.constant 0 : index
    %c0_119 = arith.constant 0 : index
    %c0_120 = arith.constant 0 : index
    %161 = vector.load %arg9[%c0_118, %c0_119, %c0_120] : memref<1x16x64xf32, #tpu.memory_space<vmem>>, vector<1x16x64xf32>
    %162 = arith.mulf %160, %161 : vector<1x16x64xf32>
    %cst_121 = arith.constant dense<0.000000e+00> : vector<1x16xf32>
    %163 = vector.multi_reduction <add>, %162, %cst_121 [2] : vector<1x16x64xf32> to vector<1x16xf32>
    %164 = vector.shape_cast %163 : vector<1x16xf32> to vector<1x16x1xf32>
    %cst_122 = arith.constant dense<0.000000e+00> : vector<1x1xf32>
    %165 = vector.multi_reduction <add>, %164, %cst_122 [1] : vector<1x16x1xf32> to vector<1x1xf32>
    %166 = vector.shape_cast %165 : vector<1x1xf32> to vector<1x1x1xf32>
    %cst_123 = arith.constant 0.000000e+00 : f32
    %167 = vector.broadcast %cst_123 : f32 to vector<1x1x1xf32>
    %168 = arith.subf %167, %166 : vector<1x1x1xf32>
    %169 = math.exp %168 : vector<1x1x1xf32>
    %cst_124 = arith.constant 1.000000e+00 : f32
    %170 = vector.broadcast %cst_124 : f32 to vector<1x1x1xf32>
    %171 = arith.addf %170, %169 : vector<1x1x1xf32>
    %cst_125 = arith.constant 1.000000e+00 : f32
    %172 = vector.broadcast %cst_125 : f32 to vector<1x1x1xf32>
    %173 = arith.divf %172, %171 : vector<1x1x1xf32>
    %c0_126 = arith.constant 0 : index
    %c0_127 = arith.constant 0 : index
    %c0_128 = arith.constant 0 : index
    %174 = vector.load %arg10[%c0_126, %c0_127, %c0_128] : memref<1x1x1xf32, #tpu.memory_space<vmem>>, vector<1x1x1xf32>
    tpu.vector_store %arg10[%c0_126, %c0_127, %c0_128], %173 {strides = array<i32>} : memref<1x1x1xf32, #tpu.memory_space<vmem>>, vector<1x1x1xf32>,
    return
  }
  func.func @transform_0(%arg0: i32) -> (i32, i32, i32) {
    %c0_i32 = arith.constant 0 : i32
    %c0_i32_0 = arith.constant 0 : i32
    %c0_i32_1 = arith.constant 0 : i32
    return %arg0, %c0_i32, %c0_i32_0 : i32, i32, i32
  }
  func.func @transform_1(%arg0: i32) -> (i32, i32) {
    %c0_i32 = arith.constant 0 : i32
    %c0_i32_0 = arith.constant 0 : i32
    %c0_i32_1 = arith.constant 0 : i32
    return %c0_i32, %c0_i32_0 : i32, i32
  }
  func.func @transform_2(%arg0: i32) -> (i32, i32, i32) {
    %c0_i32 = arith.constant 0 : i32
    %c0_i32_0 = arith.constant 0 : i32
    %c0_i32_1 = arith.constant 0 : i32
    %c0_i32_2 = arith.constant 0 : i32
    return %c0_i32, %c0_i32_0, %c0_i32_1 : i32, i32, i32
  }
  func.func @transform_3(%arg0: i32) -> (i32, i32, i32) {
    %c0_i32 = arith.constant 0 : i32
    %c0_i32_0 = arith.constant 0 : i32
    %c0_i32_1 = arith.constant 0 : i32
    %c0_i32_2 = arith.constant 0 : i32
    return %c0_i32, %c0_i32_0, %c0_i32_1 : i32, i32, i32
  }
  func.func @transform_4(%arg0: i32) -> (i32, i32) {
    %c0_i32 = arith.constant 0 : i32
    %c0_i32_0 = arith.constant 0 : i32
    %c0_i32_1 = arith.constant 0 : i32
    return %c0_i32, %c0_i32_0 : i32, i32
  }
  func.func @transform_5(%arg0: i32) -> (i32, i32, i32) {
    %c0_i32 = arith.constant 0 : i32
    %c0_i32_0 = arith.constant 0 : i32
    %c0_i32_1 = arith.constant 0 : i32
    %c0_i32_2 = arith.constant 0 : i32
    return %c0_i32, %c0_i32_0, %c0_i32_1 : i32, i32, i32
  }
  func.func @transform_6(%arg0: i32) -> (i32, i32, i32) {
    %c0_i32 = arith.constant 0 : i32
    %c0_i32_0 = arith.constant 0 : i32
    %c0_i32_1 = arith.constant 0 : i32
    %c0_i32_2 = arith.constant 0 : i32
    return %c0_i32, %c0_i32_0, %c0_i32_1 : i32, i32, i32
  }
  func.func @transform_7(%arg0: i32) -> (i32, i32, i32) {
    %c0_i32 = arith.constant 0 : i32
    %c0_i32_0 = arith.constant 0 : i32
    %c0_i32_1 = arith.constant 0 : i32
    %c0_i32_2 = arith.constant 0 : i32
    return %c0_i32, %c0_i32_0, %c0_i32_1 : i32, i32, i32
  }
  func.func @transform_8(%arg0: i32) -> (i32, i32, i32) {
    %c0_i32 = arith.constant 0 : i32
    %c0_i32_0 = arith.constant 0 : i32
    %c0_i32_1 = arith.constant 0 : i32
    %c0_i32_2 = arith.constant 0 : i32
    return %c0_i32, %c0_i32_0, %c0_i32_1 : i32, i32, i32
  }
  func.func @transform_9(%arg0: i32) -> (i32, i32, i32) {
    %c0_i32 = arith.constant 0 : i32
    %c0_i32_0 = arith.constant 0 : i32
    %c0_i32_1 = arith.constant 0 : i32
    return %arg0, %c0_i32, %c0_i32_0 : i32, i32, i32
  }
}

</mosaic_0001>

<llo_original>
// kernel: discriminator_forward.3
$region0: #{discriminator_forward.3}
  #allocation0 [shape = 'u32[]', space=smem, size = 0x4, offset = 0x4, fixed_abs, tag = 'smem constant byte address 0x4 - core index']
  #allocation1 [shape = 'u32[144,128]{1,0:T(1,128)}', space=vmem, size = 0x12000, scoped, tag = 'internal scratch']
  %s0 = inlined_call_operand.vmem [shape: bf16[2,1024,48], index: 0, kind: input, shape index: {}]
  %s1 = inlined_call_operand.vmem [shape: bf16[48,8], index: 1, kind: input, shape index: {}]
  %s2 = inlined_call_operand.vmem [shape: bf16[2,1024,8], index: 2, kind: output, shape index: {}]
  %s3 = sld [smem:[#allocation0]]
  $region41: #{discriminator_forward.3} parent=0
    _
  %s5 = ssub.s32 1, %s3
  %s6 = scalar_select 0, %s5, %s3
  loop: start=0, step=1, limit=4
  $region2: #{discriminator_forward.3} parent=0 // loop_pre_header
    _
  $region3: #{discriminator_forward.3} parent=0 // loop_header
    %s8 = sphi 0, %s12
    %p9 = scmp.ge.s32.totalorder %s8, 4
    %s18 = sphi 0, %s20
    %s21 = sphi 0, %s18
    %s22 = sphi 0, %s21
    %s38 = sphi 0, %s22
    %s42 = sphi 0, %s42
    %s44 = sphi 0, %s42
    %s45 = sphi 0, %s44
    %s59 = sphi 0, %s45
    %s65 = sphi 0, %s67
    %s68 = sphi 0, %s65
    %s69 = sphi 0, %s68
    %s85 = sphi 0, %s69
  $region4: #{discriminator_forward.3} parent=0 // loop_header_branch
    %11 = sbr.rel (%p9) target = $region8
  $region5: #{discriminator_forward.3} parent=0 // loop_body
    %s13 = ssub.s32 %s8, 1
    %s14 = ssub.s32 %s8, 2
    %s15 = sadd.s32 %s8, 1
    %s16 = ssub.s32 %s8, %s15
    %p17 = scmp.eq.s32.totalorder %s16, 0
    %s19 = sadd.s32 %s18, 1
    %s20 = scalar_select %p17, %s18, %s19
    %p23 = pneg %p17
    %p24 = scmp.eq.s32.totalorder %s8, 1
    %p25 = por %p23, %p24
    %p26 = scmp.ne.s32.totalorder %s18, %s21
    %p27 = scmp.eq.s32.totalorder %s8, 0
    %p28 = por %p26, %p27
    %p29 = scmp.ne.s32.totalorder %s18, %s21
    %p30 = scmp.eq.s32.totalorder %s13, 1
    %p31 = por %p29, %p30
    %p32 = scmp.ne.s32.totalorder %s21, %s22
    %p33 = scmp.eq.s32.totalorder %s13, 0
    %p34 = por %p32, %p33
    %p35 = scmp.ne.s32.totalorder %s21, %s22
    %p36 = scmp.eq.s32.totalorder %s14, 1
    %p37 = por %p35, %p36
    %p39 = scmp.ne.s32.totalorder %s22, %s38
    %p40 = scmp.eq.s32.totalorder %s14, 0
    %p41 = por %p39, %p40
    %s43 = sadd.s32 %s42, 1
    %p46 = scmp.eq.s32.totalorder %s8, 1
    %p47 = scmp.ne.s32.totalorder %s42, %s44
    %p48 = scmp.eq.s32.totalorder %s8, 0
    %p49 = por %p47, %p48
    %p50 = scmp.ne.s32.totalorder %s42, %s44
    %p51 = scmp.eq.s32.totalorder %s13, 1
    %p52 = por %p50, %p51
    %p53 = scmp.ne.s32.totalorder %s44, %s45
    %p54 = scmp.eq.s32.totalorder %s13, 0
    %p55 = por %p53, %p54
    %p56 = scmp.ne.s32.totalorder %s44, %s45
    %p57 = scmp.eq.s32.totalorder %s14, 1
    %p58 = por %p56, %p57
    %p60 = scmp.ne.s32.totalorder %s45, %s59
    %p61 = scmp.eq.s32.totalorder %s14, 0
    %p62 = por %p60, %p61
    %s63 = ssub.s32 %s8, %s15
    %p64 = scmp.eq.s32.totalorder %s63, 0
    %s66 = sadd.s32 %s65, 1
    %s67 = scalar_select %p64, %s65, %s66
    %p70 = pneg %p64
    %p71 = scmp.eq.s32.totalorder %s8, 1
    %p72 = por %p70, %p71
    %p73 = scmp.ne.s32.totalorder %s65, %s68
    %p74 = scmp.eq.s32.totalorder %s8, 0
    %p75 = por %p73, %p74
    %p76 = scmp.ne.s32.totalorder %s65, %s68
    %p77 = scmp.eq.s32.totalorder %s13, 1
    %p78 = por %p76, %p77
    %p79 = scmp.ne.s32.totalorder %s68, %s69
    %p80 = scmp.eq.s32.totalorder %s13, 0
    %p81 = por %p79, %p80
    %p82 = scmp.ne.s32.totalorder %s68, %s69
    %p83 = scmp.eq.s32.totalorder %s14, 1
    %p84 = por %p82, %p83
    %p86 = scmp.ne.s32.totalorder %s69, %s85
    %p87 = scmp.eq.s32.totalorder %s14, 0
    %p88 = por %p86, %p87
    %p89 = scmp.le.s32.totalorder 1, %s8
    %p90 = scmp.lt.s32.totalorder %s8, 3
    %p91 = pnand %p89, %p90
    %p92 = pneg %p91
    // Predicated region
    $region9: #{discriminator_forward.3} parent=5 // pred_check
      _
    $region10: #{discriminator_forward.3} parent=5 // pred_check_branch
      %94 = sbr.rel (%p91) target = $region12
    $region11: #{discriminator_forward.3} parent=5 // pred_region
      %s95 = ssub.s32 %s8, 1
      // Predicated region
      $region13: #{discriminator_forward.3} parent=11 // pred_check
        %p96 = pneg %p55
      $region14: #{discriminator_forward.3} parent=11 // pred_check_branch
        %98 = sbr.rel (%p96) target = $region16
      $region15: #{discriminator_forward.3} parent=11 // pred_region
        _
      $region16: #{discriminator_forward.3} parent=11 // pred_fallthru
        _
    $region12: #{discriminator_forward.3} parent=5 // pred_fallthru
      _
    %p99 = scmp.lt.s32.totalorder %s8, 2
    // Predicated region
    $region17: #{discriminator_forward.3} parent=5 // pred_check
      %p100 = pneg %p99
    $region18: #{discriminator_forward.3} parent=5 // pred_check_branch
      %102 = sbr.rel (%p100) target = $region20
    $region19: #{discriminator_forward.3} parent=5 // pred_region
      // Predicated region
      $region21: #{discriminator_forward.3} parent=19 // pred_check
        %p103 = pneg %p28
      $region22: #{discriminator_forward.3} parent=19 // pred_check_branch
        %105 = sbr.rel (%p103) target = $region24
      $region23: #{discriminator_forward.3} parent=19 // pred_region
        %p106 = scmp.lt.s32.totalorder %s8, 1
        %s107 = scalar_select %p106, %s8, 1
        %s108 = smul.addr %s107, 128
        %s109 = smul.addr %s108, 4
        %s110 = scalar_lea.vmem %s0, %s109
      $region24: #{discriminator_forward.3} parent=19 // pred_fallthru
        _
    $region20: #{discriminator_forward.3} parent=5 // pred_fallthru
      _
    %p111 = scmp.le.s32.totalorder 1, %s8
    %p112 = scmp.lt.s32.totalorder %s8, 3
    %p113 = pnand %p111, %p112
    %p114 = pneg %p113
    // Predicated region
    $region25: #{discriminator_forward.3} parent=5 // pred_check
      _
    $region26: #{discriminator_forward.3} parent=5 // pred_check_branch
      %116 = sbr.rel (%p113) target = $region28
    $region27: #{discriminator_forward.3} parent=5 // pred_region
      %s117 = ssub.s32 %s8, 1
      %p118 = scmp.lt.s32.totalorder %s13, 1
      %s119 = scalar_select %p118, %s13, 1
      %s120 = smul.addr %s119, 128
      %s121 = smul.addr %s120, 4
      %s122 = scalar_lea.vmem %s0, %s121
      %p123 = pneg %p34
      %p124 = pneg %p31
      %p125 = pneg %p55
      %p126 = pneg %p52
      %p127 = pneg %p81
      %p128 = pneg %p78
      %p129 = scmp.lt.s32.totalorder %s13, 1
      %s130 = scalar_select %p129, %s13, 1
      %s131 = smul.addr %s130, 128
      %s132 = smul.addr %s131, 4
      %s133 = scalar_lea.vmem %s2, %s132
      %p134 = scmp.lt.s32.totalorder %s13, 1
      %s135 = scalar_select %p134, %s13, 1
      %s136 = smul.addr %s135, 128
      %s137 = smul.addr %s136, 4
      %s138 = scalar_lea.vmem %s0, %s137
      %p139 = scmp.lt.s32.totalorder %s13, 1
      %s140 = scalar_select %p139, %s13, 1
      %s141 = smul.addr %s140, 128
      %s142 = smul.addr %s141, 4
      %s143 = scalar_lea.vmem %s2, %s142
      %v145 = vld [vmem:[%s138] sm:$0xf]
      %v146 = vld [vmem:[%s138 + $0x4] sm:$0xf]
      %v147 = vld [vmem:[%s138 + $0x8] sm:$0xf]
      %v148 = vld [vmem:[%s138 + $0xc] sm:$0xf]
      %v149 = vld [vmem:[%s138 + $0x10] sm:$0xf]
      %v150 = vld [vmem:[%s138 + $0x14] sm:$0xf]
      %v151 = vld [vmem:[%s138 + $0x18] sm:$0xf]
      %v152 = vld [vmem:[%s138 + $0x1c] sm:$0xf]
      %v153 = vld [vmem:[%s138 + $0x20] sm:$0xf]
      %v154 = vld [vmem:[%s138 + $0x24] sm:$0xf]
      %v155 = vld [vmem:[%s138 + $0x28] sm:$0xf]
      %v156 = vld [vmem:[%s138 + $0x2c] sm:$0xf]
      %v157 = vld [vmem:[%s138 + $0x30] sm:$0xf]
      %v158 = vld [vmem:[%s138 + $0x34] sm:$0xf]
      %v159 = vld [vmem:[%s138 + $0x38] sm:$0xf]
      %v160 = vld [vmem:[%s138 + $0x3c] sm:$0xf]
      %v161 = vld [vmem:[%s138 + $0x40] sm:$0xf]
      %v162 = vld [vmem:[%s138 + $0x44] sm:$0xf]
      %v163 = vld [vmem:[%s138 + $0x48] sm:$0xf]
      %v164 = vld [vmem:[%s138 + $0x4c] sm:$0xf]
      %v165 = vld [vmem:[%s138 + $0x50] sm:$0xf]
      %v166 = vld [vmem:[%s138 + $0x54] sm:$0xf]
      %v167 = vld [vmem:[%s138 + $0x58] sm:$0xf]
      %v168 = vld [vmem:[%s138 + $0x5c] sm:$0xf]
      %v169 = vld [vmem:[%s138 + $0x60] sm:$0xf]
      %v170 = vld [vmem:[%s138 + $0x64] sm:$0xf]
      %v171 = vld [vmem:[%s138 + $0x68] sm:$0xf]
      %v172 = vld [vmem:[%s138 + $0x6c] sm:$0xf]
      %v173 = vld [vmem:[%s138 + $0x70] sm:$0xf]
      %v174 = vld [vmem:[%s138 + $0x74] sm:$0xf]
      %v175 = vld [vmem:[%s138 + $0x78] sm:$0xf]
      %v176 = vld [vmem:[%s138 + $0x7c] sm:$0xf]
      %v177 = vld [vmem:[%s138 + $0x80] sm:$0xf]
      %v178 = vld [vmem:[%s138 + $0x84] sm:$0xf]
      %v179 = vld [vmem:[%s138 + $0x88] sm:$0xf]
      %v180 = vld [vmem:[%s138 + $0x8c] sm:$0xf]
      %v181 = vld [vmem:[%s138 + $0x90] sm:$0xf]
      %v182 = vld [vmem:[%s138 + $0x94] sm:$0xf]
      %v183 = vld [vmem:[%s138 + $0x98] sm:$0xf]
      %v184 = vld [vmem:[%s138 + $0x9c] sm:$0xf]
      %v185 = vld [vmem:[%s138 + $0xa0] sm:$0xf]
      %v186 = vld [vmem:[%s138 + $0xa4] sm:$0xf]
      %v187 = vld [vmem:[%s138 + $0xa8] sm:$0xf]
      %v188 = vld [vmem:[%s138 + $0xac] sm:$0xf]
      %v189 = vld [vmem:[%s138 + $0xb0] sm:$0xf]
      %v190 = vld [vmem:[%s138 + $0xb4] sm:$0xf]
      %v191 = vld [vmem:[%s138 + $0xb8] sm:$0xf]
      %v192 = vld [vmem:[%s138 + $0xbc] sm:$0xf]
      %v193 = vld [vmem:[%s138 + $0xc0] sm:$0xf]
      %v194 = vld [vmem:[%s138 + $0xc4] sm:$0xf]
      %v195 = vld [vmem:[%s138 + $0xc8] sm:$0xf]
      %v196 = vld [vmem:[%s138 + $0xcc] sm:$0xf]
      %v197 = vld [vmem:[%s138 + $0xd0] sm:$0xf]
      %v198 = vld [vmem:[%s138 + $0xd4] sm:$0xf]
      %v199 = vld [vmem:[%s138 + $0xd8] sm:$0xf]
      %v200 = vld [vmem:[%s138 + $0xdc] sm:$0xf]
      %v201 = vld [vmem:[%s138 + $0xe0] sm:$0xf]
      %v202 = vld [vmem:[%s138 + $0xe4] sm:$0xf]
      %v203 = vld [vmem:[%s138 + $0xe8] sm:$0xf]
      %v204 = vld [vmem:[%s138 + $0xec] sm:$0xf]
      %v205 = vld [vmem:[%s138 + $0xf0] sm:$0xf]
      %v206 = vld [vmem:[%s138 + $0xf4] sm:$0xf]
      %v207 = vld [vmem:[%s138 + $0xf8] sm:$0xf]
      %v208 = vld [vmem:[%s138 + $0xfc] sm:$0xf]
      %v209 = vld [vmem:[%s138 + $0x100] sm:$0xf]
      %v210 = vld [vmem:[%s138 + $0x104] sm:$0xf]
      %v211 = vld [vmem:[%s138 + $0x108] sm:$0xf]
      %v212 = vld [vmem:[%s138 + $0x10c] sm:$0xf]
      %v213 = vld [vmem:[%s138 + $0x110] sm:$0xf]
      %v214 = vld [vmem:[%s138 + $0x114] sm:$0xf]
      %v215 = vld [vmem:[%s138 + $0x118] sm:$0xf]
      %v216 = vld [vmem:[%s138 + $0x11c] sm:$0xf]
      %v217 = vld [vmem:[%s138 + $0x120] sm:$0xf]
      %v218 = vld [vmem:[%s138 + $0x124] sm:$0xf]
      %v219 = vld [vmem:[%s138 + $0x128] sm:$0xf]
      %v220 = vld [vmem:[%s138 + $0x12c] sm:$0xf]
      %v221 = vld [vmem:[%s138 + $0x130] sm:$0xf]
      %v222 = vld [vmem:[%s138 + $0x134] sm:$0xf]
      %v223 = vld [vmem:[%s138 + $0x138] sm:$0xf]
      %v224 = vld [vmem:[%s138 + $0x13c] sm:$0xf]
      %v225 = vld [vmem:[%s138 + $0x140] sm:$0xf]
      %v226 = vld [vmem:[%s138 + $0x144] sm:$0xf]
      %v227 = vld [vmem:[%s138 + $0x148] sm:$0xf]
      %v228 = vld [vmem:[%s138 + $0x14c] sm:$0xf]
      %v229 = vld [vmem:[%s138 + $0x150] sm:$0xf]
      %v230 = vld [vmem:[%s138 + $0x154] sm:$0xf]
      %v231 = vld [vmem:[%s138 + $0x158] sm:$0xf]
      %v232 = vld [vmem:[%s138 + $0x15c] sm:$0xf]
      %v233 = vld [vmem:[%s138 + $0x160] sm:$0xf]
      %v234 = vld [vmem:[%s138 + $0x164] sm:$0xf]
      %v235 = vld [vmem:[%s138 + $0x168] sm:$0xf]
      %v236 = vld [vmem:[%s138 + $0x16c] sm:$0xf]
      %v237 = vld [vmem:[%s138 + $0x170] sm:$0xf]
      %v238 = vld [vmem:[%s138 + $0x174] sm:$0xf]
      %v239 = vld [vmem:[%s138 + $0x178] sm:$0xf]
      %v240 = vld [vmem:[%s138 + $0x17c] sm:$0xf]
      %v241 = vld [vmem:[%s138 + $0x180] sm:$0xf]
      %v242 = vld [vmem:[%s138 + $0x184] sm:$0xf]
      %v243 = vld [vmem:[%s138 + $0x188] sm:$0xf]
      %v244 = vld [vmem:[%s138 + $0x18c] sm:$0xf]
      %v245 = vld [vmem:[%s138 + $0x190] sm:$0xf]
      %v246 = vld [vmem:[%s138 + $0x194] sm:$0xf]
      %v247 = vld [vmem:[%s138 + $0x198] sm:$0xf]
      %v248 = vld [vmem:[%s138 + $0x19c] sm:$0xf]
      %v249 = vld [vmem:[%s138 + $0x1a0] sm:$0xf]
      %v250 = vld [vmem:[%s138 + $0x1a4] sm:$0xf]
      %v251 = vld [vmem:[%s138 + $0x1a8] sm:$0xf]
      %v252 = vld [vmem:[%s138 + $0x1ac] sm:$0xf]
      %v253 = vld [vmem:[%s138 + $0x1b0] sm:$0xf]
      %v254 = vld [vmem:[%s138 + $0x1b4] sm:$0xf]
      %v255 = vld [vmem:[%s138 + $0x1b8] sm:$0xf]
      %v256 = vld [vmem:[%s138 + $0x1bc] sm:$0xf]
      %v257 = vld [vmem:[%s138 + $0x1c0] sm:$0xf]
      %v258 = vld [vmem:[%s138 + $0x1c4] sm:$0xf]
      %v259 = vld [vmem:[%s138 + $0x1c8] sm:$0xf]
      %v260 = vld [vmem:[%s138 + $0x1cc] sm:$0xf]
      %v261 = vld [vmem:[%s138 + $0x1d0] sm:$0xf]
      %v262 = vld [vmem:[%s138 + $0x1d4] sm:$0xf]
      %v263 = vld [vmem:[%s138 + $0x1d8] sm:$0xf]
      %v264 = vld [vmem:[%s138 + $0x1dc] sm:$0xf]
      %v265 = vld [vmem:[%s138 + $0x1e0] sm:$0xf]
      %v266 = vld [vmem:[%s138 + $0x1e4] sm:$0xf]
      %v267 = vld [vmem:[%s138 + $0x1e8] sm:$0xf]
      %v268 = vld [vmem:[%s138 + $0x1ec] sm:$0xf]
      %v269 = vld [vmem:[%s138 + $0x1f0] sm:$0xf]
      %v270 = vld [vmem:[%s138 + $0x1f4] sm:$0xf]
      %v271 = vld [vmem:[%s138 + $0x1f8] sm:$0xf]
      %v272 = vld [vmem:[%s138 + $0x1fc] sm:$0xf]
      %v273 = vld [vmem:[%s1] sm:$0xf]
      %v274 = vld [vmem:[%s1 + $0x4] sm:$0xf]
      %v275 = vld [vmem:[%s1 + $0x8] sm:$0xf]
      %v276 = vld [vmem:[%s1 + $0xc] sm:$0xf]
      %v277 = vld [vmem:[%s1 + $0x10] sm:$0xf]
      %v278 = vld [vmem:[%s1 + $0x14] sm:$0xf]
      %v407 = vunpack.c.l.b16 %v145
      %v408 = vunpack.c.l.b16 %v146
      %v409 = vunpack.c.l.b16 %v147
      %v410 = vunpack.c.l.b16 %v148
      %v411 = vunpack.c.l.b16 %v149
      %v412 = vunpack.c.l.b16 %v150
      %v413 = vunpack.c.l.b16 %v151
      %v414 = vunpack.c.l.b16 %v152
      %v415 = vunpack.c.l.b16 %v153
      %v416 = vunpack.c.l.b16 %v154
      %v417 = vunpack.c.l.b16 %v155
      %v418 = vunpack.c.l.b16 %v156
      %v419 = vunpack.c.l.b16 %v157
      %v420 = vunpack.c.l.b16 %v158
      %v421 = vunpack.c.l.b16 %v159
      %v422 = vunpack.c.l.b16 %v160
      %v423 = vunpack.c.l.b16 %v161
      %v424 = vunpack.c.l.b16 %v162
      %v425 = vunpack.c.l.b16 %v163
      %v426 = vunpack.c.l.b16 %v164
      %v427 = vunpack.c.l.b16 %v165
      %v428 = vunpack.c.l.b16 %v166
      %v429 = vunpack.c.l.b16 %v167
      %v430 = vunpack.c.l.b16 %v168
      %v431 = vunpack.c.l.b16 %v169
      %v432 = vunpack.c.l.b16 %v170
      %v433 = vunpack.c.l.b16 %v171
      %v434 = vunpack.c.l.b16 %v172
      %v435 = vunpack.c.l.b16 %v173
      %v436 = vunpack.c.l.b16 %v174
      %v437 = vunpack.c.l.b16 %v175
      %v438 = vunpack.c.l.b16 %v176
      %v439 = vunpack.c.l.b16 %v177
      %v440 = vunpack.c.l.b16 %v178
      %v441 = vunpack.c.l.b16 %v179
      %v442 = vunpack.c.l.b16 %v180
      %v443 = vunpack.c.l.b16 %v181
      %v444 = vunpack.c.l.b16 %v182
      %v445 = vunpack.c.l.b16 %v183
      %v446 = vunpack.c.l.b16 %v184
      %v447 = vunpack.c.l.b16 %v185
      %v448 = vunpack.c.l.b16 %v186
      %v449 = vunpack.c.l.b16 %v187
      %v450 = vunpack.c.l.b16 %v188
      %v451 = vunpack.c.l.b16 %v189
      %v452 = vunpack.c.l.b16 %v190
      %v453 = vunpack.c.l.b16 %v191
      %v454 = vunpack.c.l.b16 %v192
      %v455 = vunpack.c.l.b16 %v193
      %v456 = vunpack.c.l.b16 %v194
      %v457 = vunpack.c.l.b16 %v195
      %v458 = vunpack.c.l.b16 %v196
      %v459 = vunpack.c.l.b16 %v197
      %v460 = vunpack.c.l.b16 %v198
      %v461 = vunpack.c.l.b16 %v199
      %v462 = vunpack.c.l.b16 %v200
      %v463 = vunpack.c.l.b16 %v201
      %v464 = vunpack.c.l.b16 %v202
      %v465 = vunpack.c.l.b16 %v203
      %v466 = vunpack.c.l.b16 %v204
      %v467 = vunpack.c.l.b16 %v205
      %v468 = vunpack.c.l.b16 %v206
      %v469 = vunpack.c.l.b16 %v207
      %v470 = vunpack.c.l.b16 %v208
      %v471 = vunpack.c.l.b16 %v209
      %v472 = vunpack.c.l.b16 %v210
      %v473 = vunpack.c.l.b16 %v211
      %v474 = vunpack.c.l.b16 %v212
      %v475 = vunpack.c.l.b16 %v213
      %v476 = vunpack.c.l.b16 %v214
      %v477 = vunpack.c.l.b16 %v215
      %v478 = vunpack.c.l.b16 %v216
      %v479 = vunpack.c.l.b16 %v217
      %v480 = vunpack.c.l.b16 %v218
      %v481 = vunpack.c.l.b16 %v219
      %v482 = vunpack.c.l.b16 %v220
      %v483 = vunpack.c.l.b16 %v221
      %v484 = vunpack.c.l.b16 %v222
      %v485 = vunpack.c.l.b16 %v223
      %v486 = vunpack.c.l.b16 %v224
      %v487 = vunpack.c.l.b16 %v225
      %v488 = vunpack.c.l.b16 %v226
      %v489 = vunpack.c.l.b16 %v227
      %v490 = vunpack.c.l.b16 %v228
      %v491 = vunpack.c.l.b16 %v229
      %v492 = vunpack.c.l.b16 %v230
      %v493 = vunpack.c.l.b16 %v231
      %v494 = vunpack.c.l.b16 %v232
      %v495 = vunpack.c.l.b16 %v233
      %v496 = vunpack.c.l.b16 %v234
      %v497 = vunpack.c.l.b16 %v235
      %v498 = vunpack.c.l.b16 %v236
      %v499 = vunpack.c.l.b16 %v237
      %v500 = vunpack.c.l.b16 %v238
      %v501 = vunpack.c.l.b16 %v239
      %v502 = vunpack.c.l.b16 %v240
      %v503 = vunpack.c.l.b16 %v241
      %v504 = vunpack.c.l.b16 %v242
      %v505 = vunpack.c.l.b16 %v243
      %v506 = vunpack.c.l.b16 %v244
      %v507 = vunpack.c.l.b16 %v245
      %v508 = vunpack.c.l.b16 %v246
      %v509 = vunpack.c.l.b16 %v247
      %v510 = vunpack.c.l.b16 %v248
      %v511 = vunpack.c.l.b16 %v249
      %v512 = vunpack.c.l.b16 %v250
      %v513 = vunpack.c.l.b16 %v251
      %v514 = vunpack.c.l.b16 %v252
      %v515 = vunpack.c.l.b16 %v253
      %v516 = vunpack.c.l.b16 %v254
      %v517 = vunpack.c.l.b16 %v255
      %v518 = vunpack.c.l.b16 %v256
      %v519 = vunpack.c.l.b16 %v257
      %v520 = vunpack.c.l.b16 %v258
      %v521 = vunpack.c.l.b16 %v259
      %v522 = vunpack.c.l.b16 %v260
      %v523 = vunpack.c.l.b16 %v261
      %v524 = vunpack.c.l.b16 %v262
      %v525 = vunpack.c.l.b16 %v263
      %v526 = vunpack.c.l.b16 %v264
      %v527 = vunpack.c.l.b16 %v265
      %v528 = vunpack.c.l.b16 %v266
      %v529 = vunpack.c.l.b16 %v267
      %v530 = vunpack.c.l.b16 %v268
      %v531 = vunpack.c.l.b16 %v269
      %v532 = vunpack.c.l.b16 %v270
      %v533 = vunpack.c.l.b16 %v271
      %v534 = vunpack.c.l.b16 %v272
      %v535 = vpack.c.b16 %v408, %v407
      %v536 = vpack.c.b16 %v410, %v409
      %v537 = vpack.c.b16 %v412, %v411
      %v538 = vpack.c.b16 %v414, %v413
      %v539 = vpack.c.b16 %v416, %v415
      %v540 = vpack.c.b16 %v418, %v417
      %v541 = vpack.c.b16 %v420, %v419
      %v542 = vpack.c.b16 %v422, %v421
      %v543 = vpack.c.b16 %v424, %v423
      %v544 = vpack.c.b16 %v426, %v425
      %v545 = vpack.c.b16 %v428, %v427
      %v546 = vpack.c.b16 %v430, %v429
      %v547 = vpack.c.b16 %v432, %v431
      %v548 = vpack.c.b16 %v434, %v433
      %v549 = vpack.c.b16 %v436, %v435
      %v550 = vpack.c.b16 %v438, %v437
      %v551 = vpack.c.b16 %v440, %v439
      %v552 = vpack.c.b16 %v442, %v441
      %v553 = vpack.c.b16 %v444, %v443
      %v554 = vpack.c.b16 %v446, %v445
      %v555 = vpack.c.b16 %v448, %v447
      %v556 = vpack.c.b16 %v450, %v449
      %v557 = vpack.c.b16 %v452, %v451
      %v558 = vpack.c.b16 %v454, %v453
      %v559 = vpack.c.b16 %v456, %v455
      %v560 = vpack.c.b16 %v458, %v457
      %v561 = vpack.c.b16 %v460, %v459
      %v562 = vpack.c.b16 %v462, %v461
      %v563 = vpack.c.b16 %v464, %v463
      %v564 = vpack.c.b16 %v466, %v465
      %v565 = vpack.c.b16 %v468, %v467
      %v566 = vpack.c.b16 %v470, %v469
      %v567 = vpack.c.b16 %v472, %v471
      %v568 = vpack.c.b16 %v474, %v473
      %v569 = vpack.c.b16 %v476, %v475
      %v570 = vpack.c.b16 %v478, %v477
      %v571 = vpack.c.b16 %v480, %v479
      %v572 = vpack.c.b16 %v482, %v481
      %v573 = vpack.c.b16 %v484, %v483
      %v574 = vpack.c.b16 %v486, %v485
      %v575 = vpack.c.b16 %v488, %v487
      %v576 = vpack.c.b16 %v490, %v489
      %v577 = vpack.c.b16 %v492, %v491
      %v578 = vpack.c.b16 %v494, %v493
      %v579 = vpack.c.b16 %v496, %v495
      %v580 = vpack.c.b16 %v498, %v497
      %v581 = vpack.c.b16 %v500, %v499
      %v582 = vpack.c.b16 %v502, %v501
      %v583 = vpack.c.b16 %v504, %v503
      %v584 = vpack.c.b16 %v506, %v505
      %v585 = vpack.c.b16 %v508, %v507
      %v586 = vpack.c.b16 %v510, %v509
      %v587 = vpack.c.b16 %v512, %v511
      %v588 = vpack.c.b16 %v514, %v513
      %v589 = vpack.c.b16 %v516, %v515
      %v590 = vpack.c.b16 %v518, %v517
      %v591 = vpack.c.b16 %v520, %v519
      %v592 = vpack.c.b16 %v522, %v521
      %v593 = vpack.c.b16 %v524, %v523
      %v594 = vpack.c.b16 %v526, %v525
      %v595 = vpack.c.b16 %v528, %v527
      %v596 = vpack.c.b16 %v530, %v529
      %v597 = vpack.c.b16 %v532, %v531
      %v598 = vpack.c.b16 %v534, %v533
      %v605 = vunpack.c.l.b16 %v273
      %v606 = vunpack.c.l.b16 %v274
      %v607 = vunpack.c.l.b16 %v275
      %v608 = vunpack.c.l.b16 %v276
      %v609 = vunpack.c.l.b16 %v277
      %v610 = vunpack.c.l.b16 %v278
      %v611 = vpack.c.b16 %v606, %v605
      %v612 = vpack.c.b16 %v608, %v607
      %v613 = vpack.c.b16 %v610, %v609
      %vm617 = vcmask 392192
      %v619 = vsel %vm617, %v535, 0
      %v622 = vsel %vm617, %v536, 0
      %v625 = vsel %vm617, %v537, 0
      %v628 = vsel %vm617, %v538, 0
      %v631 = vsel %vm617, %v539, 0
      %v634 = vsel %vm617, %v540, 0
      %v637 = vsel %vm617, %v541, 0
      %v640 = vsel %vm617, %v542, 0
      %v643 = vsel %vm617, %v543, 0
      %v646 = vsel %vm617, %v544, 0
      %v649 = vsel %vm617, %v545, 0
      %v652 = vsel %vm617, %v546, 0
      %v655 = vsel %vm617, %v547, 0
      %v658 = vsel %vm617, %v548, 0
      %v661 = vsel %vm617, %v549, 0
      %v664 = vsel %vm617, %v550, 0
      %v667 = vsel %vm617, %v551, 0
      %v670 = vsel %vm617, %v552, 0
      %v673 = vsel %vm617, %v553, 0
      %v676 = vsel %vm617, %v554, 0
      %v679 = vsel %vm617, %v555, 0
      %v682 = vsel %vm617, %v556, 0
      %v685 = vsel %vm617, %v557, 0
      %v688 = vsel %vm617, %v558, 0
      %v691 = vsel %vm617, %v559, 0
      %v694 = vsel %vm617, %v560, 0
      %v697 = vsel %vm617, %v561, 0
      %v700 = vsel %vm617, %v562, 0
      %v703 = vsel %vm617, %v563, 0
      %v706 = vsel %vm617, %v564, 0
      %v709 = vsel %vm617, %v565, 0
      %v712 = vsel %vm617, %v566, 0
      %v715 = vsel %vm617, %v567, 0
      %v718 = vsel %vm617, %v568, 0
      %v721 = vsel %vm617, %v569, 0
      %v724 = vsel %vm617, %v570, 0
      %v727 = vsel %vm617, %v571, 0
      %v730 = vsel %vm617, %v572, 0
      %v733 = vsel %vm617, %v573, 0
      %v736 = vsel %vm617, %v574, 0
      %v739 = vsel %vm617, %v575, 0
      %v742 = vsel %vm617, %v576, 0
      %v745 = vsel %vm617, %v577, 0
      %v748 = vsel %vm617, %v578, 0
      %v751 = vsel %vm617, %v579, 0
      %v754 = vsel %vm617, %v580, 0
      %v757 = vsel %vm617, %v581, 0
      %v760 = vsel %vm617, %v582, 0
      %v763 = vsel %vm617, %v583, 0
      %v766 = vsel %vm617, %v584, 0
      %v769 = vsel %vm617, %v585, 0
      %v772 = vsel %vm617, %v586, 0
      %v775 = vsel %vm617, %v587, 0
      %v778 = vsel %vm617, %v588, 0
      %v781 = vsel %vm617, %v589, 0
      %v784 = vsel %vm617, %v590, 0
      %v787 = vsel %vm617, %v591, 0
      %v790 = vsel %vm617, %v592, 0
      %v793 = vsel %vm617, %v593, 0
      %v796 = vsel %vm617, %v594, 0
      %v799 = vsel %vm617, %v595, 0
      %v802 = vsel %vm617, %v596, 0
      %v805 = vsel %vm617, %v597, 0
      %v808 = vsel %vm617, %v598, 0
      %810 = vmatprep.subr.bf16.mxu0 0
      %811 = vmatpush1.bf16.msra.mxu0 0
      %812 = vmatprep.subr.bf16.mxu0 0
      %813 = vmatpush1.bf16.msra.mxu0 0
      %814 = vmatprep.subr.bf16.mxu0 0
      %815 = vmatpush1.bf16.msra.mxu0 0
      %816 = vmatprep.subr.bf16.mxu0 0
      %817 = vmatpush1.bf16.msra.mxu0 0
      %818 = vmatprep.subr.bf16.mxu0 0
      %819 = vmatpush1.bf16.msra.mxu0 0
      %820 = vmatprep.subr.bf16.mxu0 0
      %821 = vmatpush1.bf16.msra.mxu0 %v613
      %822 = vmatprep.subr.bf16.mxu0 0
      %823 = vmatpush1.bf16.msra.mxu0 %v612
      %824 = vmatprep.subr.bf16.mxu0 0
      %825 = vmatpush1.bf16.msra.mxu0 %v611
      %826 = vmatprep.subr.bf16.mxu0 0
      %827 = vmatpush2.bf16.msra.mxu0 0
      %828 = vmatprep.subr.bf16.mxu0 0
      %829 = vmatpush2.bf16.msra.mxu0 0
      %830 = vmatprep.subr.bf16.mxu0 0
      %831 = vmatpush2.bf16.msra.mxu0 0
      %832 = vmatprep.subr.bf16.mxu0 0
      %833 = vmatpush2.bf16.msra.mxu0 0
      %834 = vmatprep.subr.bf16.mxu0 0
      %835 = vmatpush2.bf16.msra.mxu0 0
      %836 = vmatprep.subr.bf16.mxu0 0
      %837 = vmatpush2.bf16.msra.mxu0 0
      %838 = vmatprep.subr.bf16.mxu0 0
      %839 = vmatpush2.bf16.msra.mxu0 0
      %840 = vmatprep.subr.bf16.mxu0 0
      %841 = vmatpush2.bf16.msra.mxu0 0
      %842 = vmatprep.mubr.bf16.mxu0 0
      %843 = vmatmul.mubr.bf16.gmra.mxu0 %v619
      %v844 = vpop.f32.mrf.mxu0
      %v845 = vadd.f32 0.0, %v844
      %v846 = vpop.f32.mrf.mxu0
      %v847 = vpop.f32.mrf.mxu0
      %v848 = vadd.f32 0.0, %v847
      %v849 = vpop.f32.mrf.mxu0
      %850 = vmatprep.mubr.bf16.mxu0 0
      %851 = vmatmul.mubr.bf16.gmra.mxu0 %v622
      %v852 = vpop.f32.mrf.mxu0
      %v853 = vadd.f32 0.0, %v852
      %v854 = vpop.f32.mrf.mxu0
      %v855 = vpop.f32.mrf.mxu0
      %v856 = vadd.f32 0.0, %v855
      %v857 = vpop.f32.mrf.mxu0
      %858 = vmatprep.mubr.bf16.mxu0 0
      %859 = vmatmul.mubr.bf16.gmra.mxu0 %v625
      %v860 = vpop.f32.mrf.mxu0
      %v861 = vadd.f32 0.0, %v860
      %v862 = vpop.f32.mrf.mxu0
      %v863 = vpop.f32.mrf.mxu0
      %v864 = vadd.f32 0.0, %v863
      %v865 = vpop.f32.mrf.mxu0
      %866 = vmatprep.mubr.bf16.mxu0 0
      %867 = vmatmul.mubr.bf16.gmra.mxu0 %v628
      %v868 = vpop.f32.mrf.mxu0
      %v869 = vadd.f32 0.0, %v868
      %v870 = vpop.f32.mrf.mxu0
      %v871 = vpop.f32.mrf.mxu0
      %v872 = vadd.f32 0.0, %v871
      %v873 = vpop.f32.mrf.mxu0
      %874 = vmatprep.mubr.bf16.mxu0 0
      %875 = vmatmul.mubr.bf16.gmra.mxu0 %v631
      %v876 = vpop.f32.mrf.mxu0
      %v877 = vadd.f32 0.0, %v876
      %v878 = vpop.f32.mrf.mxu0
      %v879 = vpop.f32.mrf.mxu0
      %v880 = vadd.f32 0.0, %v879
      %v881 = vpop.f32.mrf.mxu0
      %882 = vmatprep.mubr.bf16.mxu0 0
      %883 = vmatmul.mubr.bf16.gmra.mxu0 %v634
      %v884 = vpop.f32.mrf.mxu0
      %v885 = vadd.f32 0.0, %v884
      %v886 = vpop.f32.mrf.mxu0
      %v887 = vpop.f32.mrf.mxu0
      %v888 = vadd.f32 0.0, %v887
      %v889 = vpop.f32.mrf.mxu0
      %890 = vmatprep.mubr.bf16.mxu0 0
      %891 = vmatmul.mubr.bf16.gmra.mxu0 %v637
      %v892 = vpop.f32.mrf.mxu0
      %v893 = vadd.f32 0.0, %v892
      %v894 = vpop.f32.mrf.mxu0
      %v895 = vpop.f32.mrf.mxu0
      %v896 = vadd.f32 0.0, %v895
      %v897 = vpop.f32.mrf.mxu0
      %898 = vmatprep.mubr.bf16.mxu0 0
      %899 = vmatmul.mubr.bf16.gmra.mxu0 %v640
      %v900 = vpop.f32.mrf.mxu0
      %v901 = vadd.f32 0.0, %v900
      %v902 = vpop.f32.mrf.mxu0
      %v903 = vpop.f32.mrf.mxu0
      %v904 = vadd.f32 0.0, %v903
      %v905 = vpop.f32.mrf.mxu0
      %906 = vmatprep.mubr.bf16.mxu0 0
      %907 = vmatmul.mubr.bf16.gmra.mxu0 %v643
      %v908 = vpop.f32.mrf.mxu0
      %v909 = vadd.f32 0.0, %v908
      %v910 = vpop.f32.mrf.mxu0
      %v911 = vpop.f32.mrf.mxu0
      %v912 = vadd.f32 0.0, %v911
      %v913 = vpop.f32.mrf.mxu0
      %914 = vmatprep.mubr.bf16.mxu0 0
      %915 = vmatmul.mubr.bf16.gmra.mxu0 %v646
      %v916 = vpop.f32.mrf.mxu0
      %v917 = vadd.f32 0.0, %v916
      %v918 = vpop.f32.mrf.mxu0
      %v919 = vpop.f32.mrf.mxu0
      %v920 = vadd.f32 0.0, %v919
      %v921 = vpop.f32.mrf.mxu0
      %922 = vmatprep.mubr.bf16.mxu0 0
      %923 = vmatmul.mubr.bf16.gmra.mxu0 %v649
      %v924 = vpop.f32.mrf.mxu0
      %v925 = vadd.f32 0.0, %v924
      %v926 = vpop.f32.mrf.mxu0
      %v927 = vpop.f32.mrf.mxu0
      %v928 = vadd.f32 0.0, %v927
      %v929 = vpop.f32.mrf.mxu0
      %930 = vmatprep.mubr.bf16.mxu0 0
      %931 = vmatmul.mubr.bf16.gmra.mxu0 %v652
      %v932 = vpop.f32.mrf.mxu0
      %v933 = vadd.f32 0.0, %v932
      %v934 = vpop.f32.mrf.mxu0
      %v935 = vpop.f32.mrf.mxu0
      %v936 = vadd.f32 0.0, %v935
      %v937 = vpop.f32.mrf.mxu0
      %938 = vmatprep.mubr.bf16.mxu0 0
      %939 = vmatmul.mubr.bf16.gmra.mxu0 %v655
      %v940 = vpop.f32.mrf.mxu0
      %v941 = vadd.f32 0.0, %v940
      %v942 = vpop.f32.mrf.mxu0
      %v943 = vpop.f32.mrf.mxu0
      %v944 = vadd.f32 0.0, %v943
      %v945 = vpop.f32.mrf.mxu0
      %946 = vmatprep.mubr.bf16.mxu0 0
      %947 = vmatmul.mubr.bf16.gmra.mxu0 %v658
      %v948 = vpop.f32.mrf.mxu0
      %v949 = vadd.f32 0.0, %v948
      %v950 = vpop.f32.mrf.mxu0
      %v951 = vpop.f32.mrf.mxu0
      %v952 = vadd.f32 0.0, %v951
      %v953 = vpop.f32.mrf.mxu0
      %954 = vmatprep.mubr.bf16.mxu0 0
      %955 = vmatmul.mubr.bf16.gmra.mxu0 %v661
      %v956 = vpop.f32.mrf.mxu0
      %v957 = vadd.f32 0.0, %v956
      %v958 = vpop.f32.mrf.mxu0
      %v959 = vpop.f32.mrf.mxu0
      %v960 = vadd.f32 0.0, %v959
      %v961 = vpop.f32.mrf.mxu0
      %962 = vmatprep.mubr.bf16.mxu0 0
      %963 = vmatmul.mubr.bf16.gmra.mxu0 %v664
      %v964 = vpop.f32.mrf.mxu0
      %v965 = vadd.f32 0.0, %v964
      %v966 = vpop.f32.mrf.mxu0
      %v967 = vpop.f32.mrf.mxu0
      %v968 = vadd.f32 0.0, %v967
      %v969 = vpop.f32.mrf.mxu0
      %970 = vmatprep.mubr.bf16.mxu0 0
      %971 = vmatmul.mubr.bf16.gmra.mxu0 %v667
      %v972 = vpop.f32.mrf.mxu0
      %v973 = vadd.f32 0.0, %v972
      %v974 = vpop.f32.mrf.mxu0
      %v975 = vpop.f32.mrf.mxu0
      %v976 = vadd.f32 0.0, %v975
      %v977 = vpop.f32.mrf.mxu0
      %978 = vmatprep.mubr.bf16.mxu0 0
      %979 = vmatmul.mubr.bf16.gmra.mxu0 %v670
      %v980 = vpop.f32.mrf.mxu0
      %v981 = vadd.f32 0.0, %v980
      %v982 = vpop.f32.mrf.mxu0
      %v983 = vpop.f32.mrf.mxu0
      %v984 = vadd.f32 0.0, %v983
      %v985 = vpop.f32.mrf.mxu0
      %986 = vmatprep.mubr.bf16.mxu0 0
      %987 = vmatmul.mubr.bf16.gmra.mxu0 %v673
      %v988 = vpop.f32.mrf.mxu0
      %v989 = vadd.f32 0.0, %v988
      %v990 = vpop.f32.mrf.mxu0
      %v991 = vpop.f32.mrf.mxu0
      %v992 = vadd.f32 0.0, %v991
      %v993 = vpop.f32.mrf.mxu0
      %994 = vmatprep.mubr.bf16.mxu0 0
      %995 = vmatmul.mubr.bf16.gmra.mxu0 %v676
      %v996 = vpop.f32.mrf.mxu0
      %v997 = vadd.f32 0.0, %v996
      %v998 = vpop.f32.mrf.mxu0
      %v999 = vpop.f32.mrf.mxu0
      %v1000 = vadd.f32 0.0, %v999
      %v1001 = vpop.f32.mrf.mxu0
      %1002 = vmatprep.mubr.bf16.mxu0 0
      %1003 = vmatmul.mubr.bf16.gmra.mxu0 %v679
      %v1004 = vpop.f32.mrf.mxu0
      %v1005 = vadd.f32 0.0, %v1004
      %v1006 = vpop.f32.mrf.mxu0
      %v1007 = vpop.f32.mrf.mxu0
      %v1008 = vadd.f32 0.0, %v1007
      %v1009 = vpop.f32.mrf.mxu0
      %1010 = vmatprep.mubr.bf16.mxu0 0
      %1011 = vmatmul.mubr.bf16.gmra.mxu0 %v682
      %v1012 = vpop.f32.mrf.mxu0
      %v1013 = vadd.f32 0.0, %v1012
      %v1014 = vpop.f32.mrf.mxu0
      %v1015 = vpop.f32.mrf.mxu0
      %v1016 = vadd.f32 0.0, %v1015
      %v1017 = vpop.f32.mrf.mxu0
      %1018 = vmatprep.mubr.bf16.mxu0 0
      %1019 = vmatmul.mubr.bf16.gmra.mxu0 %v685
      %v1020 = vpop.f32.mrf.mxu0
      %v1021 = vadd.f32 0.0, %v1020
      %v1022 = vpop.f32.mrf.mxu0
      %v1023 = vpop.f32.mrf.mxu0
      %v1024 = vadd.f32 0.0, %v1023
      %v1025 = vpop.f32.mrf.mxu0
      %1026 = vmatprep.mubr.bf16.mxu0 0
      %1027 = vmatmul.mubr.bf16.gmra.mxu0 %v688
      %v1028 = vpop.f32.mrf.mxu0
      %v1029 = vadd.f32 0.0, %v1028
      %v1030 = vpop.f32.mrf.mxu0
      %v1031 = vpop.f32.mrf.mxu0
      %v1032 = vadd.f32 0.0, %v1031
      %v1033 = vpop.f32.mrf.mxu0
      %1034 = vmatprep.mubr.bf16.mxu0 0
      %1035 = vmatmul.mubr.bf16.gmra.mxu0 %v691
      %v1036 = vpop.f32.mrf.mxu0
      %v1037 = vadd.f32 0.0, %v1036
      %v1038 = vpop.f32.mrf.mxu0
      %v1039 = vpop.f32.mrf.mxu0
      %v1040 = vadd.f32 0.0, %v1039
      %v1041 = vpop.f32.mrf.mxu0
      %1042 = vmatprep.mubr.bf16.mxu0 0
      %1043 = vmatmul.mubr.bf16.gmra.mxu0 %v694
      %v1044 = vpop.f32.mrf.mxu0
      %v1045 = vadd.f32 0.0, %v1044
      %v1046 = vpop.f32.mrf.mxu0
      %v1047 = vpop.f32.mrf.mxu0
      %v1048 = vadd.f32 0.0, %v1047
      %v1049 = vpop.f32.mrf.mxu0
      %1050 = vmatprep.mubr.bf16.mxu0 0
      %1051 = vmatmul.mubr.bf16.gmra.mxu0 %v697
      %v1052 = vpop.f32.mrf.mxu0
      %v1053 = vadd.f32 0.0, %v1052
      %v1054 = vpop.f32.mrf.mxu0
      %v1055 = vpop.f32.mrf.mxu0
      %v1056 = vadd.f32 0.0, %v1055
      %v1057 = vpop.f32.mrf.mxu0
      %1058 = vmatprep.mubr.bf16.mxu0 0
      %1059 = vmatmul.mubr.bf16.gmra.mxu0 %v700
      %v1060 = vpop.f32.mrf.mxu0
      %v1061 = vadd.f32 0.0, %v1060
      %v1062 = vpop.f32.mrf.mxu0
      %v1063 = vpop.f32.mrf.mxu0
      %v1064 = vadd.f32 0.0, %v1063
      %v1065 = vpop.f32.mrf.mxu0
      %1066 = vmatprep.mubr.bf16.mxu0 0
      %1067 = vmatmul.mubr.bf16.gmra.mxu0 %v703
      %v1068 = vpop.f32.mrf.mxu0
      %v1069 = vadd.f32 0.0, %v1068
      %v1070 = vpop.f32.mrf.mxu0
      %v1071 = vpop.f32.mrf.mxu0
      %v1072 = vadd.f32 0.0, %v1071
      %v1073 = vpop.f32.mrf.mxu0
      %1074 = vmatprep.mubr.bf16.mxu0 0
      %1075 = vmatmul.mubr.bf16.gmra.mxu0 %v706
      %v1076 = vpop.f32.mrf.mxu0
      %v1077 = vadd.f32 0.0, %v1076
      %v1078 = vpop.f32.mrf.mxu0
      %v1079 = vpop.f32.mrf.mxu0
      %v1080 = vadd.f32 0.0, %v1079
      %v1081 = vpop.f32.mrf.mxu0
      %1082 = vmatprep.mubr.bf16.mxu0 0
      %1083 = vmatmul.mubr.bf16.gmra.mxu0 %v709
      %v1084 = vpop.f32.mrf.mxu0
      %v1085 = vadd.f32 0.0, %v1084
      %v1086 = vpop.f32.mrf.mxu0
      %v1087 = vpop.f32.mrf.mxu0
      %v1088 = vadd.f32 0.0, %v1087
      %v1089 = vpop.f32.mrf.mxu0
      %1090 = vmatprep.mubr.bf16.mxu0 0
      %1091 = vmatmul.mubr.bf16.gmra.mxu0 %v712
      %v1092 = vpop.f32.mrf.mxu0
      %v1093 = vadd.f32 0.0, %v1092
      %v1094 = vpop.f32.mrf.mxu0
      %v1095 = vpop.f32.mrf.mxu0
      %v1096 = vadd.f32 0.0, %v1095
      %v1097 = vpop.f32.mrf.mxu0
      %1098 = vmatprep.mubr.bf16.mxu0 0
      %1099 = vmatmul.mubr.bf16.gmra.mxu0 %v715
      %v1100 = vpop.f32.mrf.mxu0
      %v1101 = vadd.f32 0.0, %v1100
      %v1102 = vpop.f32.mrf.mxu0
      %v1103 = vpop.f32.mrf.mxu0
      %v1104 = vadd.f32 0.0, %v1103
      %v1105 = vpop.f32.mrf.mxu0
      %1106 = vmatprep.mubr.bf16.mxu0 0
      %1107 = vmatmul.mubr.bf16.gmra.mxu0 %v718
      %v1108 = vpop.f32.mrf.mxu0
      %v1109 = vadd.f32 0.0, %v1108
      %v1110 = vpop.f32.mrf.mxu0
      %v1111 = vpop.f32.mrf.mxu0
      %v1112 = vadd.f32 0.0, %v1111
      %v1113 = vpop.f32.mrf.mxu0
      %1114 = vmatprep.mubr.bf16.mxu0 0
      %1115 = vmatmul.mubr.bf16.gmra.mxu0 %v721
      %v1116 = vpop.f32.mrf.mxu0
      %v1117 = vadd.f32 0.0, %v1116
      %v1118 = vpop.f32.mrf.mxu0
      %v1119 = vpop.f32.mrf.mxu0
      %v1120 = vadd.f32 0.0, %v1119
      %v1121 = vpop.f32.mrf.mxu0
      %1122 = vmatprep.mubr.bf16.mxu0 0
      %1123 = vmatmul.mubr.bf16.gmra.mxu0 %v724
      %v1124 = vpop.f32.mrf.mxu0
      %v1125 = vadd.f32 0.0, %v1124
      %v1126 = vpop.f32.mrf.mxu0
      %v1127 = vpop.f32.mrf.mxu0
      %v1128 = vadd.f32 0.0, %v1127
      %v1129 = vpop.f32.mrf.mxu0
      %1130 = vmatprep.mubr.bf16.mxu0 0
      %1131 = vmatmul.mubr.bf16.gmra.mxu0 %v727
      %v1132 = vpop.f32.mrf.mxu0
      %v1133 = vadd.f32 0.0, %v1132
      %v1134 = vpop.f32.mrf.mxu0
      %v1135 = vpop.f32.mrf.mxu0
      %v1136 = vadd.f32 0.0, %v1135
      %v1137 = vpop.f32.mrf.mxu0
      %1138 = vmatprep.mubr.bf16.mxu0 0
      %1139 = vmatmul.mubr.bf16.gmra.mxu0 %v730
      %v1140 = vpop.f32.mrf.mxu0
      %v1141 = vadd.f32 0.0, %v1140
      %v1142 = vpop.f32.mrf.mxu0
      %v1143 = vpop.f32.mrf.mxu0
      %v1144 = vadd.f32 0.0, %v1143
      %v1145 = vpop.f32.mrf.mxu0
      %1146 = vmatprep.mubr.bf16.mxu0 0
      %1147 = vmatmul.mubr.bf16.gmra.mxu0 %v733
      %v1148 = vpop.f32.mrf.mxu0
      %v1149 = vadd.f32 0.0, %v1148
      %v1150 = vpop.f32.mrf.mxu0
      %v1151 = vpop.f32.mrf.mxu0
      %v1152 = vadd.f32 0.0, %v1151
      %v1153 = vpop.f32.mrf.mxu0
      %1154 = vmatprep.mubr.bf16.mxu0 0
      %1155 = vmatmul.mubr.bf16.gmra.mxu0 %v736
      %v1156 = vpop.f32.mrf.mxu0
      %v1157 = vadd.f32 0.0, %v1156
      %v1158 = vpop.f32.mrf.mxu0
      %v1159 = vpop.f32.mrf.mxu0
      %v1160 = vadd.f32 0.0, %v1159
      %v1161 = vpop.f32.mrf.mxu0
      %1162 = vmatprep.mubr.bf16.mxu0 0
      %1163 = vmatmul.mubr.bf16.gmra.mxu0 %v739
      %v1164 = vpop.f32.mrf.mxu0
      %v1165 = vadd.f32 0.0, %v1164
      %v1166 = vpop.f32.mrf.mxu0
      %v1167 = vpop.f32.mrf.mxu0
      %v1168 = vadd.f32 0.0, %v1167
      %v1169 = vpop.f32.mrf.mxu0
      %1170 = vmatprep.mubr.bf16.mxu0 0
      %1171 = vmatmul.mubr.bf16.gmra.mxu0 %v742
      %v1172 = vpop.f32.mrf.mxu0
      %v1173 = vadd.f32 0.0, %v1172
      %v1174 = vpop.f32.mrf.mxu0
      %v1175 = vpop.f32.mrf.mxu0
      %v1176 = vadd.f32 0.0, %v1175
      %v1177 = vpop.f32.mrf.mxu0
      %1178 = vmatprep.mubr.bf16.mxu0 0
      %1179 = vmatmul.mubr.bf16.gmra.mxu0 %v745
      %v1180 = vpop.f32.mrf.mxu0
      %v1181 = vadd.f32 0.0, %v1180
      %v1182 = vpop.f32.mrf.mxu0
      %v1183 = vpop.f32.mrf.mxu0
      %v1184 = vadd.f32 0.0, %v1183
      %v1185 = vpop.f32.mrf.mxu0
      %1186 = vmatprep.mubr.bf16.mxu0 0
      %1187 = vmatmul.mubr.bf16.gmra.mxu0 %v748
      %v1188 = vpop.f32.mrf.mxu0
      %v1189 = vadd.f32 0.0, %v1188
      %v1190 = vpop.f32.mrf.mxu0
      %v1191 = vpop.f32.mrf.mxu0
      %v1192 = vadd.f32 0.0, %v1191
      %v1193 = vpop.f32.mrf.mxu0
      %1194 = vmatprep.mubr.bf16.mxu0 0
      %1195 = vmatmul.mubr.bf16.gmra.mxu0 %v751
      %v1196 = vpop.f32.mrf.mxu0
      %v1197 = vadd.f32 0.0, %v1196
      %v1198 = vpop.f32.mrf.mxu0
      %v1199 = vpop.f32.mrf.mxu0
      %v1200 = vadd.f32 0.0, %v1199
      %v1201 = vpop.f32.mrf.mxu0
      %1202 = vmatprep.mubr.bf16.mxu0 0
      %1203 = vmatmul.mubr.bf16.gmra.mxu0 %v754
      %v1204 = vpop.f32.mrf.mxu0
      %v1205 = vadd.f32 0.0, %v1204
      %v1206 = vpop.f32.mrf.mxu0
      %v1207 = vpop.f32.mrf.mxu0
      %v1208 = vadd.f32 0.0, %v1207
      %v1209 = vpop.f32.mrf.mxu0
      %1210 = vmatprep.mubr.bf16.mxu0 0
      %1211 = vmatmul.mubr.bf16.gmra.mxu0 %v757
      %v1212 = vpop.f32.mrf.mxu0
      %v1213 = vadd.f32 0.0, %v1212
      %v1214 = vpop.f32.mrf.mxu0
      %v1215 = vpop.f32.mrf.mxu0
      %v1216 = vadd.f32 0.0, %v1215
      %v1217 = vpop.f32.mrf.mxu0
      %1218 = vmatprep.mubr.bf16.mxu0 0
      %1219 = vmatmul.mubr.bf16.gmra.mxu0 %v760
      %v1220 = vpop.f32.mrf.mxu0
      %v1221 = vadd.f32 0.0, %v1220
      %v1222 = vpop.f32.mrf.mxu0
      %v1223 = vpop.f32.mrf.mxu0
      %v1224 = vadd.f32 0.0, %v1223
      %v1225 = vpop.f32.mrf.mxu0
      %1226 = vmatprep.mubr.bf16.mxu0 0
      %1227 = vmatmul.mubr.bf16.gmra.mxu0 %v763
      %v1228 = vpop.f32.mrf.mxu0
      %v1229 = vadd.f32 0.0, %v1228
      %v1230 = vpop.f32.mrf.mxu0
      %v1231 = vpop.f32.mrf.mxu0
      %v1232 = vadd.f32 0.0, %v1231
      %v1233 = vpop.f32.mrf.mxu0
      %1234 = vmatprep.mubr.bf16.mxu0 0
      %1235 = vmatmul.mubr.bf16.gmra.mxu0 %v766
      %v1236 = vpop.f32.mrf.mxu0
      %v1237 = vadd.f32 0.0, %v1236
      %v1238 = vpop.f32.mrf.mxu0
      %v1239 = vpop.f32.mrf.mxu0
      %v1240 = vadd.f32 0.0, %v1239
      %v1241 = vpop.f32.mrf.mxu0
      %1242 = vmatprep.mubr.bf16.mxu0 0
      %1243 = vmatmul.mubr.bf16.gmra.mxu0 %v769
      %v1244 = vpop.f32.mrf.mxu0
      %v1245 = vadd.f32 0.0, %v1244
      %v1246 = vpop.f32.mrf.mxu0
      %v1247 = vpop.f32.mrf.mxu0
      %v1248 = vadd.f32 0.0, %v1247
      %v1249 = vpop.f32.mrf.mxu0
      %1250 = vmatprep.mubr.bf16.mxu0 0
      %1251 = vmatmul.mubr.bf16.gmra.mxu0 %v772
      %v1252 = vpop.f32.mrf.mxu0
      %v1253 = vadd.f32 0.0, %v1252
      %v1254 = vpop.f32.mrf.mxu0
      %v1255 = vpop.f32.mrf.mxu0
      %v1256 = vadd.f32 0.0, %v1255
      %v1257 = vpop.f32.mrf.mxu0
      %1258 = vmatprep.mubr.bf16.mxu0 0
      %1259 = vmatmul.mubr.bf16.gmra.mxu0 %v775
      %v1260 = vpop.f32.mrf.mxu0
      %v1261 = vadd.f32 0.0, %v1260
      %v1262 = vpop.f32.mrf.mxu0
      %v1263 = vpop.f32.mrf.mxu0
      %v1264 = vadd.f32 0.0, %v1263
      %v1265 = vpop.f32.mrf.mxu0
      %1266 = vmatprep.mubr.bf16.mxu0 0
      %1267 = vmatmul.mubr.bf16.gmra.mxu0 %v778
      %v1268 = vpop.f32.mrf.mxu0
      %v1269 = vadd.f32 0.0, %v1268
      %v1270 = vpop.f32.mrf.mxu0
      %v1271 = vpop.f32.mrf.mxu0
      %v1272 = vadd.f32 0.0, %v1271
      %v1273 = vpop.f32.mrf.mxu0
      %1274 = vmatprep.mubr.bf16.mxu0 0
      %1275 = vmatmul.mubr.bf16.gmra.mxu0 %v781
      %v1276 = vpop.f32.mrf.mxu0
      %v1277 = vadd.f32 0.0, %v1276
      %v1278 = vpop.f32.mrf.mxu0
      %v1279 = vpop.f32.mrf.mxu0
      %v1280 = vadd.f32 0.0, %v1279
      %v1281 = vpop.f32.mrf.mxu0
      %1282 = vmatprep.mubr.bf16.mxu0 0
      %1283 = vmatmul.mubr.bf16.gmra.mxu0 %v784
      %v1284 = vpop.f32.mrf.mxu0
      %v1285 = vadd.f32 0.0, %v1284
      %v1286 = vpop.f32.mrf.mxu0
      %v1287 = vpop.f32.mrf.mxu0
      %v1288 = vadd.f32 0.0, %v1287
      %v1289 = vpop.f32.mrf.mxu0
      %1290 = vmatprep.mubr.bf16.mxu0 0
      %1291 = vmatmul.mubr.bf16.gmra.mxu0 %v787
      %v1292 = vpop.f32.mrf.mxu0
      %v1293 = vadd.f32 0.0, %v1292
      %v1294 = vpop.f32.mrf.mxu0
      %v1295 = vpop.f32.mrf.mxu0
      %v1296 = vadd.f32 0.0, %v1295
      %v1297 = vpop.f32.mrf.mxu0
      %1298 = vmatprep.mubr.bf16.mxu0 0
      %1299 = vmatmul.mubr.bf16.gmra.mxu0 %v790
      %v1300 = vpop.f32.mrf.mxu0
      %v1301 = vadd.f32 0.0, %v1300
      %v1302 = vpop.f32.mrf.mxu0
      %v1303 = vpop.f32.mrf.mxu0
      %v1304 = vadd.f32 0.0, %v1303
      %v1305 = vpop.f32.mrf.mxu0
      %1306 = vmatprep.mubr.bf16.mxu0 0
      %1307 = vmatmul.mubr.bf16.gmra.mxu0 %v793
      %v1308 = vpop.f32.mrf.mxu0
      %v1309 = vadd.f32 0.0, %v1308
      %v1310 = vpop.f32.mrf.mxu0
      %v1311 = vpop.f32.mrf.mxu0
      %v1312 = vadd.f32 0.0, %v1311
      %v1313 = vpop.f32.mrf.mxu0
      %1314 = vmatprep.mubr.bf16.mxu0 0
      %1315 = vmatmul.mubr.bf16.gmra.mxu0 %v796
      %v1316 = vpop.f32.mrf.mxu0
      %v1317 = vadd.f32 0.0, %v1316
      %v1318 = vpop.f32.mrf.mxu0
      %v1319 = vpop.f32.mrf.mxu0
      %v1320 = vadd.f32 0.0, %v1319
      %v1321 = vpop.f32.mrf.mxu0
      %1322 = vmatprep.mubr.bf16.mxu0 0
      %1323 = vmatmul.mubr.bf16.gmra.mxu0 %v799
      %v1324 = vpop.f32.mrf.mxu0
      %v1325 = vadd.f32 0.0, %v1324
      %v1326 = vpop.f32.mrf.mxu0
      %v1327 = vpop.f32.mrf.mxu0
      %v1328 = vadd.f32 0.0, %v1327
      %v1329 = vpop.f32.mrf.mxu0
      %1330 = vmatprep.mubr.bf16.mxu0 0
      %1331 = vmatmul.mubr.bf16.gmra.mxu0 %v802
      %v1332 = vpop.f32.mrf.mxu0
      %v1333 = vadd.f32 0.0, %v1332
      %v1334 = vpop.f32.mrf.mxu0
      %v1335 = vpop.f32.mrf.mxu0
      %v1336 = vadd.f32 0.0, %v1335
      %v1337 = vpop.f32.mrf.mxu0
      %1338 = vmatprep.mubr.bf16.mxu0 0
      %1339 = vmatmul.mubr.bf16.gmra.mxu0 %v805
      %v1340 = vpop.f32.mrf.mxu0
      %v1341 = vadd.f32 0.0, %v1340
      %v1342 = vpop.f32.mrf.mxu0
      %v1343 = vpop.f32.mrf.mxu0
      %v1344 = vadd.f32 0.0, %v1343
      %v1345 = vpop.f32.mrf.mxu0
      %1346 = vmatprep.mubr.bf16.mxu0 0
      %1347 = vmatmul.mubr.bf16.gmra.mxu0 %v808
      %v1348 = vpop.f32.mrf.mxu0
      %v1349 = vadd.f32 0.0, %v1348
      %v1350 = vpop.f32.mrf.mxu0
      %v1351 = vpop.f32.mrf.mxu0
      %v1352 = vadd.f32 0.0, %v1351
      %v1353 = vpop.f32.mrf.mxu0
      %1354 = vdwg.mxu0
      %vm1355 = vcmp.ge.f32.partialorder %v845, 0.0
      %vm1356 = vcmp.ge.f32.partialorder %v848, 0.0
      %vm1357 = vcmp.ge.f32.partialorder %v853, 0.0
      %vm1358 = vcmp.ge.f32.partialorder %v856, 0.0
      %vm1359 = vcmp.ge.f32.partialorder %v861, 0.0
      %vm1360 = vcmp.ge.f32.partialorder %v864, 0.0
      %vm1361 = vcmp.ge.f32.partialorder %v869, 0.0
      %vm1362 = vcmp.ge.f32.partialorder %v872, 0.0
      %vm1363 = vcmp.ge.f32.partialorder %v877, 0.0
      %vm1364 = vcmp.ge.f32.partialorder %v880, 0.0
      %vm1365 = vcmp.ge.f32.partialorder %v885, 0.0
      %vm1366 = vcmp.ge.f32.partialorder %v888, 0.0
      %vm1367 = vcmp.ge.f32.partialorder %v893, 0.0
      %vm1368 = vcmp.ge.f32.partialorder %v896, 0.0
      %vm1369 = vcmp.ge.f32.partialorder %v901, 0.0
      %vm1370 = vcmp.ge.f32.partialorder %v904, 0.0
      %vm1371 = vcmp.ge.f32.partialorder %v909, 0.0
      %vm1372 = vcmp.ge.f32.partialorder %v912, 0.0
      %vm1373 = vcmp.ge.f32.partialorder %v917, 0.0
      %vm1374 = vcmp.ge.f32.partialorder %v920, 0.0
      %vm1375 = vcmp.ge.f32.partialorder %v925, 0.0
      %vm1376 = vcmp.ge.f32.partialorder %v928, 0.0
      %vm1377 = vcmp.ge.f32.partialorder %v933, 0.0
      %vm1378 = vcmp.ge.f32.partialorder %v936, 0.0
      %vm1379 = vcmp.ge.f32.partialorder %v941, 0.0
      %vm1380 = vcmp.ge.f32.partialorder %v944, 0.0
      %vm1381 = vcmp.ge.f32.partialorder %v949, 0.0
      %vm1382 = vcmp.ge.f32.partialorder %v952, 0.0
      %vm1383 = vcmp.ge.f32.partialorder %v957, 0.0
      %vm1384 = vcmp.ge.f32.partialorder %v960, 0.0
      %vm1385 = vcmp.ge.f32.partialorder %v965, 0.0
      %vm1386 = vcmp.ge.f32.partialorder %v968, 0.0
      %vm1387 = vcmp.ge.f32.partialorder %v973, 0.0
      %vm1388 = vcmp.ge.f32.partialorder %v976, 0.0
      %vm1389 = vcmp.ge.f32.partialorder %v981, 0.0
      %vm1390 = vcmp.ge.f32.partialorder %v984, 0.0
      %vm1391 = vcmp.ge.f32.partialorder %v989, 0.0
      %vm1392 = vcmp.ge.f32.partialorder %v992, 0.0
      %vm1393 = vcmp.ge.f32.partialorder %v997, 0.0
      %vm1394 = vcmp.ge.f32.partialorder %v1000, 0.0
      %vm1395 = vcmp.ge.f32.partialorder %v1005, 0.0
      %vm1396 = vcmp.ge.f32.partialorder %v1008, 0.0
      %vm1397 = vcmp.ge.f32.partialorder %v1013, 0.0
      %vm1398 = vcmp.ge.f32.partialorder %v1016, 0.0
      %vm1399 = vcmp.ge.f32.partialorder %v1021, 0.0
      %vm1400 = vcmp.ge.f32.partialorder %v1024, 0.0
      %vm1401 = vcmp.ge.f32.partialorder %v1029, 0.0
      %vm1402 = vcmp.ge.f32.partialorder %v1032, 0.0
      %vm1403 = vcmp.ge.f32.partialorder %v1037, 0.0
      %vm1404 = vcmp.ge.f32.partialorder %v1040, 0.0
      %vm1405 = vcmp.ge.f32.partialorder %v1045, 0.0
      %vm1406 = vcmp.ge.f32.partialorder %v1048, 0.0
      %vm1407 = vcmp.ge.f32.partialorder %v1053, 0.0
      %vm1408 = vcmp.ge.f32.partialorder %v1056, 0.0
      %vm1409 = vcmp.ge.f32.partialorder %v1061, 0.0
      %vm1410 = vcmp.ge.f32.partialorder %v1064, 0.0
      %vm1411 = vcmp.ge.f32.partialorder %v1069, 0.0
      %vm1412 = vcmp.ge.f32.partialorder %v1072, 0.0
      %vm1413 = vcmp.ge.f32.partialorder %v1077, 0.0
      %vm1414 = vcmp.ge.f32.partialorder %v1080, 0.0
      %vm1415 = vcmp.ge.f32.partialorder %v1085, 0.0
      %vm1416 = vcmp.ge.f32.partialorder %v1088, 0.0
      %vm1417 = vcmp.ge.f32.partialorder %v1093, 0.0
      %vm1418 = vcmp.ge.f32.partialorder %v1096, 0.0
      %vm1419 = vcmp.ge.f32.partialorder %v1101, 0.0
      %vm1420 = vcmp.ge.f32.partialorder %v1104, 0.0
      %vm1421 = vcmp.ge.f32.partialorder %v1109, 0.0
      %vm1422 = vcmp.ge.f32.partialorder %v1112, 0.0
      %vm1423 = vcmp.ge.f32.partialorder %v1117, 0.0
      %vm1424 = vcmp.ge.f32.partialorder %v1120, 0.0
      %vm1425 = vcmp.ge.f32.partialorder %v1125, 0.0
      %vm1426 = vcmp.ge.f32.partialorder %v1128, 0.0
      %vm1427 = vcmp.ge.f32.partialorder %v1133, 0.0
      %vm1428 = vcmp.ge.f32.partialorder %v1136, 0.0
      %vm1429 = vcmp.ge.f32.partialorder %v1141, 0.0
      %vm1430 = vcmp.ge.f32.partialorder %v1144, 0.0
      %vm1431 = vcmp.ge.f32.partialorder %v1149, 0.0
      %vm1432 = vcmp.ge.f32.partialorder %v1152, 0.0
      %vm1433 = vcmp.ge.f32.partialorder %v1157, 0.0
      %vm1434 = vcmp.ge.f32.partialorder %v1160, 0.0
      %vm1435 = vcmp.ge.f32.partialorder %v1165, 0.0
      %vm1436 = vcmp.ge.f32.partialorder %v1168, 0.0
      %vm1437 = vcmp.ge.f32.partialorder %v1173, 0.0
      %vm1438 = vcmp.ge.f32.partialorder %v1176, 0.0
      %vm1439 = vcmp.ge.f32.partialorder %v1181, 0.0
      %vm1440 = vcmp.ge.f32.partialorder %v1184, 0.0
      %vm1441 = vcmp.ge.f32.partialorder %v1189, 0.0
      %vm1442 = vcmp.ge.f32.partialorder %v1192, 0.0
      %vm1443 = vcmp.ge.f32.partialorder %v1197, 0.0
      %vm1444 = vcmp.ge.f32.partialorder %v1200, 0.0
      %vm1445 = vcmp.ge.f32.partialorder %v1205, 0.0
      %vm1446 = vcmp.ge.f32.partialorder %v1208, 0.0
      %vm1447 = vcmp.ge.f32.partialorder %v1213, 0.0
      %vm1448 = vcmp.ge.f32.partialorder %v1216, 0.0
      %vm1449 = vcmp.ge.f32.partialorder %v1221, 0.0
      %vm1450 = vcmp.ge.f32.partialorder %v1224, 0.0
      %vm1451 = vcmp.ge.f32.partialorder %v1229, 0.0
      %vm1452 = vcmp.ge.f32.partialorder %v1232, 0.0
      %vm1453 = vcmp.ge.f32.partialorder %v1237, 0.0
      %vm1454 = vcmp.ge.f32.partialorder %v1240, 0.0
      %vm1455 = vcmp.ge.f32.partialorder %v1245, 0.0
      %vm1456 = vcmp.ge.f32.partialorder %v1248, 0.0
      %vm1457 = vcmp.ge.f32.partialorder %v1253, 0.0
      %vm1458 = vcmp.ge.f32.partialorder %v1256, 0.0
      %vm1459 = vcmp.ge.f32.partialorder %v1261, 0.0
      %vm1460 = vcmp.ge.f32.partialorder %v1264, 0.0
      %vm1461 = vcmp.ge.f32.partialorder %v1269, 0.0
      %vm1462 = vcmp.ge.f32.partialorder %v1272, 0.0
      %vm1463 = vcmp.ge.f32.partialorder %v1277, 0.0
      %vm1464 = vcmp.ge.f32.partialorder %v1280, 0.0
      %vm1465 = vcmp.ge.f32.partialorder %v1285, 0.0
      %vm1466 = vcmp.ge.f32.partialorder %v1288, 0.0
      %vm1467 = vcmp.ge.f32.partialorder %v1293, 0.0
      %vm1468 = vcmp.ge.f32.partialorder %v1296, 0.0
      %vm1469 = vcmp.ge.f32.partialorder %v1301, 0.0
      %vm1470 = vcmp.ge.f32.partialorder %v1304, 0.0
      %vm1471 = vcmp.ge.f32.partialorder %v1309, 0.0
      %vm1472 = vcmp.ge.f32.partialorder %v1312, 0.0
      %vm1473 = vcmp.ge.f32.partialorder %v1317, 0.0
      %vm1474 = vcmp.ge.f32.partialorder %v1320, 0.0
      %vm1475 = vcmp.ge.f32.partialorder %v1325, 0.0
      %vm1476 = vcmp.ge.f32.partialorder %v1328, 0.0
      %vm1477 = vcmp.ge.f32.partialorder %v1333, 0.0
      %vm1478 = vcmp.ge.f32.partialorder %v1336, 0.0
      %vm1479 = vcmp.ge.f32.partialorder %v1341, 0.0
      %vm1480 = vcmp.ge.f32.partialorder %v1344, 0.0
      %vm1481 = vcmp.ge.f32.partialorder %v1349, 0.0
      %vm1482 = vcmp.ge.f32.partialorder %v1352, 0.0
      %v1483 = vmul.f32 %v845, 0.2
      %v1484 = vmul.f32 %v848, 0.2
      %v1485 = vmul.f32 %v853, 0.2
      %v1486 = vmul.f32 %v856, 0.2
      %v1487 = vmul.f32 %v861, 0.2
      %v1488 = vmul.f32 %v864, 0.2
      %v1489 = vmul.f32 %v869, 0.2
      %v1490 = vmul.f32 %v872, 0.2
      %v1491 = vmul.f32 %v877, 0.2
      %v1492 = vmul.f32 %v880, 0.2
      %v1493 = vmul.f32 %v885, 0.2
      %v1494 = vmul.f32 %v888, 0.2
      %v1495 = vmul.f32 %v893, 0.2
      %v1496 = vmul.f32 %v896, 0.2
      %v1497 = vmul.f32 %v901, 0.2
      %v1498 = vmul.f32 %v904, 0.2
      %v1499 = vmul.f32 %v909, 0.2
      %v1500 = vmul.f32 %v912, 0.2
      %v1501 = vmul.f32 %v917, 0.2
      %v1502 = vmul.f32 %v920, 0.2
      %v1503 = vmul.f32 %v925, 0.2
      %v1504 = vmul.f32 %v928, 0.2
      %v1505 = vmul.f32 %v933, 0.2
      %v1506 = vmul.f32 %v936, 0.2
      %v1507 = vmul.f32 %v941, 0.2
      %v1508 = vmul.f32 %v944, 0.2
      %v1509 = vmul.f32 %v949, 0.2
      %v1510 = vmul.f32 %v952, 0.2
      %v1511 = vmul.f32 %v957, 0.2
      %v1512 = vmul.f32 %v960, 0.2
      %v1513 = vmul.f32 %v965, 0.2
      %v1514 = vmul.f32 %v968, 0.2
      %v1515 = vmul.f32 %v973, 0.2
      %v1516 = vmul.f32 %v976, 0.2
      %v1517 = vmul.f32 %v981, 0.2
      %v1518 = vmul.f32 %v984, 0.2
      %v1519 = vmul.f32 %v989, 0.2
      %v1520 = vmul.f32 %v992, 0.2
      %v1521 = vmul.f32 %v997, 0.2
      %v1522 = vmul.f32 %v1000, 0.2
      %v1523 = vmul.f32 %v1005, 0.2
      %v1524 = vmul.f32 %v1008, 0.2
      %v1525 = vmul.f32 %v1013, 0.2
      %v1526 = vmul.f32 %v1016, 0.2
      %v1527 = vmul.f32 %v1021, 0.2
      %v1528 = vmul.f32 %v1024, 0.2
      %v1529 = vmul.f32 %v1029, 0.2
      %v1530 = vmul.f32 %v1032, 0.2
      %v1531 = vmul.f32 %v1037, 0.2
      %v1532 = vmul.f32 %v1040, 0.2
      %v1533 = vmul.f32 %v1045, 0.2
      %v1534 = vmul.f32 %v1048, 0.2
      %v1535 = vmul.f32 %v1053, 0.2
      %v1536 = vmul.f32 %v1056, 0.2
      %v1537 = vmul.f32 %v1061, 0.2
      %v1538 = vmul.f32 %v1064, 0.2
      %v1539 = vmul.f32 %v1069, 0.2
      %v1540 = vmul.f32 %v1072, 0.2
      %v1541 = vmul.f32 %v1077, 0.2
      %v1542 = vmul.f32 %v1080, 0.2
      %v1543 = vmul.f32 %v1085, 0.2
      %v1544 = vmul.f32 %v1088, 0.2
      %v1545 = vmul.f32 %v1093, 0.2
      %v1546 = vmul.f32 %v1096, 0.2
      %v1547 = vmul.f32 %v1101, 0.2
      %v1548 = vmul.f32 %v1104, 0.2
      %v1549 = vmul.f32 %v1109, 0.2
      %v1550 = vmul.f32 %v1112, 0.2
      %v1551 = vmul.f32 %v1117, 0.2
      %v1552 = vmul.f32 %v1120, 0.2
      %v1553 = vmul.f32 %v1125, 0.2
      %v1554 = vmul.f32 %v1128, 0.2
      %v1555 = vmul.f32 %v1133, 0.2
      %v1556 = vmul.f32 %v1136, 0.2
      %v1557 = vmul.f32 %v1141, 0.2
      %v1558 = vmul.f32 %v1144, 0.2
      %v1559 = vmul.f32 %v1149, 0.2
      %v1560 = vmul.f32 %v1152, 0.2
      %v1561 = vmul.f32 %v1157, 0.2
      %v1562 = vmul.f32 %v1160, 0.2
      %v1563 = vmul.f32 %v1165, 0.2
      %v1564 = vmul.f32 %v1168, 0.2
      %v1565 = vmul.f32 %v1173, 0.2
      %v1566 = vmul.f32 %v1176, 0.2
      %v1567 = vmul.f32 %v1181, 0.2
      %v1568 = vmul.f32 %v1184, 0.2
      %v1569 = vmul.f32 %v1189, 0.2
      %v1570 = vmul.f32 %v1192, 0.2
      %v1571 = vmul.f32 %v1197, 0.2
      %v1572 = vmul.f32 %v1200, 0.2
      %v1573 = vmul.f32 %v1205, 0.2
      %v1574 = vmul.f32 %v1208, 0.2
      %v1575 = vmul.f32 %v1213, 0.2
      %v1576 = vmul.f32 %v1216, 0.2
      %v1577 = vmul.f32 %v1221, 0.2
      %v1578 = vmul.f32 %v1224, 0.2
      %v1579 = vmul.f32 %v1229, 0.2
      %v1580 = vmul.f32 %v1232, 0.2
      %v1581 = vmul.f32 %v1237, 0.2
      %v1582 = vmul.f32 %v1240, 0.2
      %v1583 = vmul.f32 %v1245, 0.2
      %v1584 = vmul.f32 %v1248, 0.2
      %v1585 = vmul.f32 %v1253, 0.2
      %v1586 = vmul.f32 %v1256, 0.2
      %v1587 = vmul.f32 %v1261, 0.2
      %v1588 = vmul.f32 %v1264, 0.2
      %v1589 = vmul.f32 %v1269, 0.2
      %v1590 = vmul.f32 %v1272, 0.2
      %v1591 = vmul.f32 %v1277, 0.2
      %v1592 = vmul.f32 %v1280, 0.2
      %v1593 = vmul.f32 %v1285, 0.2
      %v1594 = vmul.f32 %v1288, 0.2
      %v1595 = vmul.f32 %v1293, 0.2
      %v1596 = vmul.f32 %v1296, 0.2
      %v1597 = vmul.f32 %v1301, 0.2
      %v1598 = vmul.f32 %v1304, 0.2
      %v1599 = vmul.f32 %v1309, 0.2
      %v1600 = vmul.f32 %v1312, 0.2
      %v1601 = vmul.f32 %v1317, 0.2
      %v1602 = vmul.f32 %v1320, 0.2
      %v1603 = vmul.f32 %v1325, 0.2
      %v1604 = vmul.f32 %v1328, 0.2
      %v1605 = vmul.f32 %v1333, 0.2
      %v1606 = vmul.f32 %v1336, 0.2
      %v1607 = vmul.f32 %v1341, 0.2
      %v1608 = vmul.f32 %v1344, 0.2
      %v1609 = vmul.f32 %v1349, 0.2
      %v1610 = vmul.f32 %v1352, 0.2
      %v1611 = vsel %vm1355, %v845, %v1483
      %v1612 = vsel %vm1356, %v848, %v1484
      %v1613 = vsel %vm1357, %v853, %v1485
      %v1614 = vsel %vm1358, %v856, %v1486
      %v1615 = vsel %vm1359, %v861, %v1487
      %v1616 = vsel %vm1360, %v864, %v1488
      %v1617 = vsel %vm1361, %v869, %v1489
      %v1618 = vsel %vm1362, %v872, %v1490
      %v1619 = vsel %vm1363, %v877, %v1491
      %v1620 = vsel %vm1364, %v880, %v1492
      %v1621 = vsel %vm1365, %v885, %v1493
      %v1622 = vsel %vm1366, %v888, %v1494
      %v1623 = vsel %vm1367, %v893, %v1495
      %v1624 = vsel %vm1368, %v896, %v1496
      %v1625 = vsel %vm1369, %v901, %v1497
      %v1626 = vsel %vm1370, %v904, %v1498
      %v1627 = vsel %vm1371, %v909, %v1499
      %v1628 = vsel %vm1372, %v912, %v1500
      %v1629 = vsel %vm1373, %v917, %v1501
      %v1630 = vsel %vm1374, %v920, %v1502
      %v1631 = vsel %vm1375, %v925, %v1503
      %v1632 = vsel %vm1376, %v928, %v1504
      %v1633 = vsel %vm1377, %v933, %v1505
      %v1634 = vsel %vm1378, %v936, %v1506
      %v1635 = vsel %vm1379, %v941, %v1507
      %v1636 = vsel %vm1380, %v944, %v1508
      %v1637 = vsel %vm1381, %v949, %v1509
      %v1638 = vsel %vm1382, %v952, %v1510
      %v1639 = vsel %vm1383, %v957, %v1511
      %v1640 = vsel %vm1384, %v960, %v1512
      %v1641 = vsel %vm1385, %v965, %v1513
      %v1642 = vsel %vm1386, %v968, %v1514
      %v1643 = vsel %vm1387, %v973, %v1515
      %v1644 = vsel %vm1388, %v976, %v1516
      %v1645 = vsel %vm1389, %v981, %v1517
      %v1646 = vsel %vm1390, %v984, %v1518
      %v1647 = vsel %vm1391, %v989, %v1519
      %v1648 = vsel %vm1392, %v992, %v1520
      %v1649 = vsel %vm1393, %v997, %v1521
      %v1650 = vsel %vm1394, %v1000, %v1522
      %v1651 = vsel %vm1395, %v1005, %v1523
      %v1652 = vsel %vm1396, %v1008, %v1524
      %v1653 = vsel %vm1397, %v1013, %v1525
      %v1654 = vsel %vm1398, %v1016, %v1526
      %v1655 = vsel %vm1399, %v1021, %v1527
      %v1656 = vsel %vm1400, %v1024, %v1528
      %v1657 = vsel %vm1401, %v1029, %v1529
      %v1658 = vsel %vm1402, %v1032, %v1530
      %v1659 = vsel %vm1403, %v1037, %v1531
      %v1660 = vsel %vm1404, %v1040, %v1532
      %v1661 = vsel %vm1405, %v1045, %v1533
      %v1662 = vsel %vm1406, %v1048, %v1534
      %v1663 = vsel %vm1407, %v1053, %v1535
      %v1664 = vsel %vm1408, %v1056, %v1536
      %v1665 = vsel %vm1409, %v1061, %v1537
      %v1666 = vsel %vm1410, %v1064, %v1538
      %v1667 = vsel %vm1411, %v1069, %v1539
      %v1668 = vsel %vm1412, %v1072, %v1540
      %v1669 = vsel %vm1413, %v1077, %v1541
      %v1670 = vsel %vm1414, %v1080, %v1542
      %v1671 = vsel %vm1415, %v1085, %v1543
      %v1672 = vsel %vm1416, %v1088, %v1544
      %v1673 = vsel %vm1417, %v1093, %v1545
      %v1674 = vsel %vm1418, %v1096, %v1546
      %v1675 = vsel %vm1419, %v1101, %v1547
      %v1676 = vsel %vm1420, %v1104, %v1548
      %v1677 = vsel %vm1421, %v1109, %v1549
      %v1678 = vsel %vm1422, %v1112, %v1550
      %v1679 = vsel %vm1423, %v1117, %v1551
      %v1680 = vsel %vm1424, %v1120, %v1552
      %v1681 = vsel %vm1425, %v1125, %v1553
      %v1682 = vsel %vm1426, %v1128, %v1554
      %v1683 = vsel %vm1427, %v1133, %v1555
      %v1684 = vsel %vm1428, %v1136, %v1556
      %v1685 = vsel %vm1429, %v1141, %v1557
      %v1686 = vsel %vm1430, %v1144, %v1558
      %v1687 = vsel %vm1431, %v1149, %v1559
      %v1688 = vsel %vm1432, %v1152, %v1560
      %v1689 = vsel %vm1433, %v1157, %v1561
      %v1690 = vsel %vm1434, %v1160, %v1562
      %v1691 = vsel %vm1435, %v1165, %v1563
      %v1692 = vsel %vm1436, %v1168, %v1564
      %v1693 = vsel %vm1437, %v1173, %v1565
      %v1694 = vsel %vm1438, %v1176, %v1566
      %v1695 = vsel %vm1439, %v1181, %v1567
      %v1696 = vsel %vm1440, %v1184, %v1568
      %v1697 = vsel %vm1441, %v1189, %v1569
      %v1698 = vsel %vm1442, %v1192, %v1570
      %v1699 = vsel %vm1443, %v1197, %v1571
      %v1700 = vsel %vm1444, %v1200, %v1572
      %v1701 = vsel %vm1445, %v1205, %v1573
      %v1702 = vsel %vm1446, %v1208, %v1574
      %v1703 = vsel %vm1447, %v1213, %v1575
      %v1704 = vsel %vm1448, %v1216, %v1576
      %v1705 = vsel %vm1449, %v1221, %v1577
      %v1706 = vsel %vm1450, %v1224, %v1578
      %v1707 = vsel %vm1451, %v1229, %v1579
      %v1708 = vsel %vm1452, %v1232, %v1580
      %v1709 = vsel %vm1453, %v1237, %v1581
      %v1710 = vsel %vm1454, %v1240, %v1582
      %v1711 = vsel %vm1455, %v1245, %v1583
      %v1712 = vsel %vm1456, %v1248, %v1584
      %v1713 = vsel %vm1457, %v1253, %v1585
      %v1714 = vsel %vm1458, %v1256, %v1586
      %v1715 = vsel %vm1459, %v1261, %v1587
      %v1716 = vsel %vm1460, %v1264, %v1588
      %v1717 = vsel %vm1461, %v1269, %v1589
      %v1718 = vsel %vm1462, %v1272, %v1590
      %v1719 = vsel %vm1463, %v1277, %v1591
      %v1720 = vsel %vm1464, %v1280, %v1592
      %v1721 = vsel %vm1465, %v1285, %v1593
      %v1722 = vsel %vm1466, %v1288, %v1594
      %v1723 = vsel %vm1467, %v1293, %v1595
      %v1724 = vsel %vm1468, %v1296, %v1596
      %v1725 = vsel %vm1469, %v1301, %v1597
      %v1726 = vsel %vm1470, %v1304, %v1598
      %v1727 = vsel %vm1471, %v1309, %v1599
      %v1728 = vsel %vm1472, %v1312, %v1600
      %v1729 = vsel %vm1473, %v1317, %v1601
      %v1730 = vsel %vm1474, %v1320, %v1602
      %v1731 = vsel %vm1475, %v1325, %v1603
      %v1732 = vsel %vm1476, %v1328, %v1604
      %v1733 = vsel %vm1477, %v1333, %v1605
      %v1734 = vsel %vm1478, %v1336, %v1606
      %v1735 = vsel %vm1479, %v1341, %v1607
      %v1736 = vsel %vm1480, %v1344, %v1608
      %v1737 = vsel %vm1481, %v1349, %v1609
      %v1738 = vsel %vm1482, %v1352, %v1610
      %v1739 = vpack.c.bf16 %v1612, %v1611
      %v1740 = vpack.c.bf16 %v1614, %v1613
      %v1741 = vpack.c.bf16 %v1616, %v1615
      %v1742 = vpack.c.bf16 %v1618, %v1617
      %v1743 = vpack.c.bf16 %v1620, %v1619
      %v1744 = vpack.c.bf16 %v1622, %v1621
      %v1745 = vpack.c.bf16 %v1624, %v1623
      %v1746 = vpack.c.bf16 %v1626, %v1625
      %v1747 = vpack.c.bf16 %v1628, %v1627
      %v1748 = vpack.c.bf16 %v1630, %v1629
      %v1749 = vpack.c.bf16 %v1632, %v1631
      %v1750 = vpack.c.bf16 %v1634, %v1633
      %v1751 = vpack.c.bf16 %v1636, %v1635
      %v1752 = vpack.c.bf16 %v1638, %v1637
      %v1753 = vpack.c.bf16 %v1640, %v1639
      %v1754 = vpack.c.bf16 %v1642, %v1641
      %v1755 = vpack.c.bf16 %v1644, %v1643
      %v1756 = vpack.c.bf16 %v1646, %v1645
      %v1757 = vpack.c.bf16 %v1648, %v1647
      %v1758 = vpack.c.bf16 %v1650, %v1649
      %v1759 = vpack.c.bf16 %v1652, %v1651
      %v1760 = vpack.c.bf16 %v1654, %v1653
      %v1761 = vpack.c.bf16 %v1656, %v1655
      %v1762 = vpack.c.bf16 %v1658, %v1657
      %v1763 = vpack.c.bf16 %v1660, %v1659
      %v1764 = vpack.c.bf16 %v1662, %v1661
      %v1765 = vpack.c.bf16 %v1664, %v1663
      %v1766 = vpack.c.bf16 %v1666, %v1665
      %v1767 = vpack.c.bf16 %v1668, %v1667
      %v1768 = vpack.c.bf16 %v1670, %v1669
      %v1769 = vpack.c.bf16 %v1672, %v1671
      %v1770 = vpack.c.bf16 %v1674, %v1673
      %v1771 = vpack.c.bf16 %v1676, %v1675
      %v1772 = vpack.c.bf16 %v1678, %v1677
      %v1773 = vpack.c.bf16 %v1680, %v1679
      %v1774 = vpack.c.bf16 %v1682, %v1681
      %v1775 = vpack.c.bf16 %v1684, %v1683
      %v1776 = vpack.c.bf16 %v1686, %v1685
      %v1777 = vpack.c.bf16 %v1688, %v1687
      %v1778 = vpack.c.bf16 %v1690, %v1689
      %v1779 = vpack.c.bf16 %v1692, %v1691
      %v1780 = vpack.c.bf16 %v1694, %v1693
      %v1781 = vpack.c.bf16 %v1696, %v1695
      %v1782 = vpack.c.bf16 %v1698, %v1697
      %v1783 = vpack.c.bf16 %v1700, %v1699
      %v1784 = vpack.c.bf16 %v1702, %v1701
      %v1785 = vpack.c.bf16 %v1704, %v1703
      %v1786 = vpack.c.bf16 %v1706, %v1705
      %v1787 = vpack.c.bf16 %v1708, %v1707
      %v1788 = vpack.c.bf16 %v1710, %v1709
      %v1789 = vpack.c.bf16 %v1712, %v1711
      %v1790 = vpack.c.bf16 %v1714, %v1713
      %v1791 = vpack.c.bf16 %v1716, %v1715
      %v1792 = vpack.c.bf16 %v1718, %v1717
      %v1793 = vpack.c.bf16 %v1720, %v1719
      %v1794 = vpack.c.bf16 %v1722, %v1721
      %v1795 = vpack.c.bf16 %v1724, %v1723
      %v1796 = vpack.c.bf16 %v1726, %v1725
      %v1797 = vpack.c.bf16 %v1728, %v1727
      %v1798 = vpack.c.bf16 %v1730, %v1729
      %v1799 = vpack.c.bf16 %v1732, %v1731
      %v1800 = vpack.c.bf16 %v1734, %v1733
      %v1801 = vpack.c.bf16 %v1736, %v1735
      %v1802 = vpack.c.bf16 %v1738, %v1737
      %v1867 = vunpack.c.l.b16 %v1739
      %v1868 = vunpack.c.h.b16 %v1739
      %v1869 = vunpack.c.l.b16 %v1740
      %v1870 = vunpack.c.h.b16 %v1740
      %v1871 = vunpack.c.l.b16 %v1741
      %v1872 = vunpack.c.h.b16 %v1741
      %v1873 = vunpack.c.l.b16 %v1742
      %v1874 = vunpack.c.h.b16 %v1742
      %v1875 = vunpack.c.l.b16 %v1743
      %v1876 = vunpack.c.h.b16 %v1743
      %v1877 = vunpack.c.l.b16 %v1744
      %v1878 = vunpack.c.h.b16 %v1744
      %v1879 = vunpack.c.l.b16 %v1745
      %v1880 = vunpack.c.h.b16 %v1745
      %v1881 = vunpack.c.l.b16 %v1746
      %v1882 = vunpack.c.h.b16 %v1746
      %v1883 = vunpack.c.l.b16 %v1747
      %v1884 = vunpack.c.h.b16 %v1747
      %v1885 = vunpack.c.l.b16 %v1748
      %v1886 = vunpack.c.h.b16 %v1748
      %v1887 = vunpack.c.l.b16 %v1749
      %v1888 = vunpack.c.h.b16 %v1749
      %v1889 = vunpack.c.l.b16 %v1750
      %v1890 = vunpack.c.h.b16 %v1750
      %v1891 = vunpack.c.l.b16 %v1751
      %v1892 = vunpack.c.h.b16 %v1751
      %v1893 = vunpack.c.l.b16 %v1752
      %v1894 = vunpack.c.h.b16 %v1752
      %v1895 = vunpack.c.l.b16 %v1753
      %v1896 = vunpack.c.h.b16 %v1753
      %v1897 = vunpack.c.l.b16 %v1754
      %v1898 = vunpack.c.h.b16 %v1754
      %v1899 = vunpack.c.l.b16 %v1755
      %v1900 = vunpack.c.h.b16 %v1755
      %v1901 = vunpack.c.l.b16 %v1756
      %v1902 = vunpack.c.h.b16 %v1756
      %v1903 = vunpack.c.l.b16 %v1757
      %v1904 = vunpack.c.h.b16 %v1757
      %v1905 = vunpack.c.l.b16 %v1758
      %v1906 = vunpack.c.h.b16 %v1758
      %v1907 = vunpack.c.l.b16 %v1759
      %v1908 = vunpack.c.h.b16 %v1759
      %v1909 = vunpack.c.l.b16 %v1760
      %v1910 = vunpack.c.h.b16 %v1760
      %v1911 = vunpack.c.l.b16 %v1761
      %v1912 = vunpack.c.h.b16 %v1761
      %v1913 = vunpack.c.l.b16 %v1762
      %v1914 = vunpack.c.h.b16 %v1762
      %v1915 = vunpack.c.l.b16 %v1763
      %v1916 = vunpack.c.h.b16 %v1763
      %v1917 = vunpack.c.l.b16 %v1764
      %v1918 = vunpack.c.h.b16 %v1764
      %v1919 = vunpack.c.l.b16 %v1765
      %v1920 = vunpack.c.h.b16 %v1765
      %v1921 = vunpack.c.l.b16 %v1766
      %v1922 = vunpack.c.h.b16 %v1766
      %v1923 = vunpack.c.l.b16 %v1767
      %v1924 = vunpack.c.h.b16 %v1767
      %v1925 = vunpack.c.l.b16 %v1768
      %v1926 = vunpack.c.h.b16 %v1768
      %v1927 = vunpack.c.l.b16 %v1769
      %v1928 = vunpack.c.h.b16 %v1769
      %v1929 = vunpack.c.l.b16 %v1770
      %v1930 = vunpack.c.h.b16 %v1770
      %v1931 = vunpack.c.l.b16 %v1771
      %v1932 = vunpack.c.h.b16 %v1771
      %v1933 = vunpack.c.l.b16 %v1772
      %v1934 = vunpack.c.h.b16 %v1772
      %v1935 = vunpack.c.l.b16 %v1773
      %v1936 = vunpack.c.h.b16 %v1773
      %v1937 = vunpack.c.l.b16 %v1774
      %v1938 = vunpack.c.h.b16 %v1774
      %v1939 = vunpack.c.l.b16 %v1775
      %v1940 = vunpack.c.h.b16 %v1775
      %v1941 = vunpack.c.l.b16 %v1776
      %v1942 = vunpack.c.h.b16 %v1776
      %v1943 = vunpack.c.l.b16 %v1777
      %v1944 = vunpack.c.h.b16 %v1777
      %v1945 = vunpack.c.l.b16 %v1778
      %v1946 = vunpack.c.h.b16 %v1778
      %v1947 = vunpack.c.l.b16 %v1779
      %v1948 = vunpack.c.h.b16 %v1779
      %v1949 = vunpack.c.l.b16 %v1780
      %v1950 = vunpack.c.h.b16 %v1780
      %v1951 = vunpack.c.l.b16 %v1781
      %v1952 = vunpack.c.h.b16 %v1781
      %v1953 = vunpack.c.l.b16 %v1782
      %v1954 = vunpack.c.h.b16 %v1782
      %v1955 = vunpack.c.l.b16 %v1783
      %v1956 = vunpack.c.h.b16 %v1783
      %v1957 = vunpack.c.l.b16 %v1784
      %v1958 = vunpack.c.h.b16 %v1784
      %v1959 = vunpack.c.l.b16 %v1785
      %v1960 = vunpack.c.h.b16 %v1785
      %v1961 = vunpack.c.l.b16 %v1786
      %v1962 = vunpack.c.h.b16 %v1786
      %v1963 = vunpack.c.l.b16 %v1787
      %v1964 = vunpack.c.h.b16 %v1787
      %v1965 = vunpack.c.l.b16 %v1788
      %v1966 = vunpack.c.h.b16 %v1788
      %v1967 = vunpack.c.l.b16 %v1789
      %v1968 = vunpack.c.h.b16 %v1789
      %v1969 = vunpack.c.l.b16 %v1790
      %v1970 = vunpack.c.h.b16 %v1790
      %v1971 = vunpack.c.l.b16 %v1791
      %v1972 = vunpack.c.h.b16 %v1791
      %v1973 = vunpack.c.l.b16 %v1792
      %v1974 = vunpack.c.h.b16 %v1792
      %v1975 = vunpack.c.l.b16 %v1793
      %v1976 = vunpack.c.h.b16 %v1793
      %v1977 = vunpack.c.l.b16 %v1794
      %v1978 = vunpack.c.h.b16 %v1794
      %v1979 = vunpack.c.l.b16 %v1795
      %v1980 = vunpack.c.h.b16 %v1795
      %v1981 = vunpack.c.l.b16 %v1796
      %v1982 = vunpack.c.h.b16 %v1796
      %v1983 = vunpack.c.l.b16 %v1797
      %v1984 = vunpack.c.h.b16 %v1797
      %v1985 = vunpack.c.l.b16 %v1798
      %v1986 = vunpack.c.h.b16 %v1798
      %v1987 = vunpack.c.l.b16 %v1799
      %v1988 = vunpack.c.h.b16 %v1799
      %v1989 = vunpack.c.l.b16 %v1800
      %v1990 = vunpack.c.h.b16 %v1800
      %v1991 = vunpack.c.l.b16 %v1801
      %v1992 = vunpack.c.h.b16 %v1801
      %v1993 = vunpack.c.l.b16 %v1802
      %v1994 = vunpack.c.h.b16 %v1802
      %v1995 = vpack.c.b16 %v1867, %v1867
      %v1996 = vpack.c.b16 %v1868, %v1868
      %v1997 = vpack.c.b16 %v1869, %v1869
      %v1998 = vpack.c.b16 %v1870, %v1870
      %v1999 = vpack.c.b16 %v1871, %v1871
      %v2000 = vpack.c.b16 %v1872, %v1872
      %v2001 = vpack.c.b16 %v1873, %v1873
      %v2002 = vpack.c.b16 %v1874, %v1874
      %v2003 = vpack.c.b16 %v1875, %v1875
      %v2004 = vpack.c.b16 %v1876, %v1876
      %v2005 = vpack.c.b16 %v1877, %v1877
      %v2006 = vpack.c.b16 %v1878, %v1878
      %v2007 = vpack.c.b16 %v1879, %v1879
      %v2008 = vpack.c.b16 %v1880, %v1880
      %v2009 = vpack.c.b16 %v1881, %v1881
      %v2010 = vpack.c.b16 %v1882, %v1882
      %v2011 = vpack.c.b16 %v1883, %v1883
      %v2012 = vpack.c.b16 %v1884, %v1884
      %v2013 = vpack.c.b16 %v1885, %v1885
      %v2014 = vpack.c.b16 %v1886, %v1886
      %v2015 = vpack.c.b16 %v1887, %v1887
      %v2016 = vpack.c.b16 %v1888, %v1888
      %v2017 = vpack.c.b16 %v1889, %v1889
      %v2018 = vpack.c.b16 %v1890, %v1890
      %v2019 = vpack.c.b16 %v1891, %v1891
      %v2020 = vpack.c.b16 %v1892, %v1892
      %v2021 = vpack.c.b16 %v1893, %v1893
      %v2022 = vpack.c.b16 %v1894, %v1894
      %v2023 = vpack.c.b16 %v1895, %v1895
      %v2024 = vpack.c.b16 %v1896, %v1896
      %v2025 = vpack.c.b16 %v1897, %v1897
      %v2026 = vpack.c.b16 %v1898, %v1898
      %v2027 = vpack.c.b16 %v1899, %v1899
      %v2028 = vpack.c.b16 %v1900, %v1900
      %v2029 = vpack.c.b16 %v1901, %v1901
      %v2030 = vpack.c.b16 %v1902, %v1902
      %v2031 = vpack.c.b16 %v1903, %v1903
      %v2032 = vpack.c.b16 %v1904, %v1904
      %v2033 = vpack.c.b16 %v1905, %v1905
      %v2034 = vpack.c.b16 %v1906, %v1906
      %v2035 = vpack.c.b16 %v1907, %v1907
      %v2036 = vpack.c.b16 %v1908, %v1908
      %v2037 = vpack.c.b16 %v1909, %v1909
      %v2038 = vpack.c.b16 %v1910, %v1910
      %v2039 = vpack.c.b16 %v1911, %v1911
      %v2040 = vpack.c.b16 %v1912, %v1912
      %v2041 = vpack.c.b16 %v1913, %v1913
      %v2042 = vpack.c.b16 %v1914, %v1914
      %v2043 = vpack.c.b16 %v1915, %v1915
      %v2044 = vpack.c.b16 %v1916, %v1916
      %v2045 = vpack.c.b16 %v1917, %v1917
      %v2046 = vpack.c.b16 %v1918, %v1918
      %v2047 = vpack.c.b16 %v1919, %v1919
      %v2048 = vpack.c.b16 %v1920, %v1920
      %v2049 = vpack.c.b16 %v1921, %v1921
      %v2050 = vpack.c.b16 %v1922, %v1922
      %v2051 = vpack.c.b16 %v1923, %v1923
      %v2052 = vpack.c.b16 %v1924, %v1924
      %v2053 = vpack.c.b16 %v1925, %v1925
      %v2054 = vpack.c.b16 %v1926, %v1926
      %v2055 = vpack.c.b16 %v1927, %v1927
      %v2056 = vpack.c.b16 %v1928, %v1928
      %v2057 = vpack.c.b16 %v1929, %v1929
      %v2058 = vpack.c.b16 %v1930, %v1930
      %v2059 = vpack.c.b16 %v1931, %v1931
      %v2060 = vpack.c.b16 %v1932, %v1932
      %v2061 = vpack.c.b16 %v1933, %v1933
      %v2062 = vpack.c.b16 %v1934, %v1934
      %v2063 = vpack.c.b16 %v1935, %v1935
      %v2064 = vpack.c.b16 %v1936, %v1936
      %v2065 = vpack.c.b16 %v1937, %v1937
      %v2066 = vpack.c.b16 %v1938, %v1938
      %v2067 = vpack.c.b16 %v1939, %v1939
      %v2068 = vpack.c.b16 %v1940, %v1940
      %v2069 = vpack.c.b16 %v1941, %v1941
      %v2070 = vpack.c.b16 %v1942, %v1942
      %v2071 = vpack.c.b16 %v1943, %v1943
      %v2072 = vpack.c.b16 %v1944, %v1944
      %v2073 = vpack.c.b16 %v1945, %v1945
      %v2074 = vpack.c.b16 %v1946, %v1946
      %v2075 = vpack.c.b16 %v1947, %v1947
      %v2076 = vpack.c.b16 %v1948, %v1948
      %v2077 = vpack.c.b16 %v1949, %v1949
      %v2078 = vpack.c.b16 %v1950, %v1950
      %v2079 = vpack.c.b16 %v1951, %v1951
      %v2080 = vpack.c.b16 %v1952, %v1952
      %v2081 = vpack.c.b16 %v1953, %v1953
      %v2082 = vpack.c.b16 %v1954, %v1954
      %v2083 = vpack.c.b16 %v1955, %v1955
      %v2084 = vpack.c.b16 %v1956, %v1956
      %v2085 = vpack.c.b16 %v1957, %v1957
      %v2086 = vpack.c.b16 %v1958, %v1958
      %v2087 = vpack.c.b16 %v1959, %v1959
      %v2088 = vpack.c.b16 %v1960, %v1960
      %v2089 = vpack.c.b16 %v1961, %v1961
      %v2090 = vpack.c.b16 %v1962, %v1962
      %v2091 = vpack.c.b16 %v1963, %v1963
      %v2092 = vpack.c.b16 %v1964, %v1964
      %v2093 = vpack.c.b16 %v1965, %v1965
      %v2094 = vpack.c.b16 %v1966, %v1966
      %v2095 = vpack.c.b16 %v1967, %v1967
      %v2096 = vpack.c.b16 %v1968, %v1968
      %v2097 = vpack.c.b16 %v1969, %v1969
      %v2098 = vpack.c.b16 %v1970, %v1970
      %v2099 = vpack.c.b16 %v1971, %v1971
      %v2100 = vpack.c.b16 %v1972, %v1972
      %v2101 = vpack.c.b16 %v1973, %v1973
      %v2102 = vpack.c.b16 %v1974, %v1974
      %v2103 = vpack.c.b16 %v1975, %v1975
      %v2104 = vpack.c.b16 %v1976, %v1976
      %v2105 = vpack.c.b16 %v1977, %v1977
      %v2106 = vpack.c.b16 %v1978, %v1978
      %v2107 = vpack.c.b16 %v1979, %v1979
      %v2108 = vpack.c.b16 %v1980, %v1980
      %v2109 = vpack.c.b16 %v1981, %v1981
      %v2110 = vpack.c.b16 %v1982, %v1982
      %v2111 = vpack.c.b16 %v1983, %v1983
      %v2112 = vpack.c.b16 %v1984, %v1984
      %v2113 = vpack.c.b16 %v1985, %v1985
      %v2114 = vpack.c.b16 %v1986, %v1986
      %v2115 = vpack.c.b16 %v1987, %v1987
      %v2116 = vpack.c.b16 %v1988, %v1988
      %v2117 = vpack.c.b16 %v1989, %v1989
      %v2118 = vpack.c.b16 %v1990, %v1990
      %v2119 = vpack.c.b16 %v1991, %v1991
      %v2120 = vpack.c.b16 %v1992, %v1992
      %v2121 = vpack.c.b16 %v1993, %v1993
      %v2122 = vpack.c.b16 %v1994, %v1994
      %vm2251 = vcmask 60416
      %2252 = vst.msk [vmem:[%s143] sm:$0xf] %vm2251, %v1995
      %2253 = vst.msk [vmem:[%s143 + $0x4] sm:$0xf] %vm2251, %v1996
      %2254 = vst.msk [vmem:[%s143 + $0x8] sm:$0xf] %vm2251, %v1997
      %2255 = vst.msk [vmem:[%s143 + $0xc] sm:$0xf] %vm2251, %v1998
      %2256 = vst.msk [vmem:[%s143 + $0x10] sm:$0xf] %vm2251, %v1999
      %2257 = vst.msk [vmem:[%s143 + $0x14] sm:$0xf] %vm2251, %v2000
      %2258 = vst.msk [vmem:[%s143 + $0x18] sm:$0xf] %vm2251, %v2001
      %2259 = vst.msk [vmem:[%s143 + $0x1c] sm:$0xf] %vm2251, %v2002
      %2260 = vst.msk [vmem:[%s143 + $0x20] sm:$0xf] %vm2251, %v2003
      %2261 = vst.msk [vmem:[%s143 + $0x24] sm:$0xf] %vm2251, %v2004
      %2262 = vst.msk [vmem:[%s143 + $0x28] sm:$0xf] %vm2251, %v2005
      %2263 = vst.msk [vmem:[%s143 + $0x2c] sm:$0xf] %vm2251, %v2006
      %2264 = vst.msk [vmem:[%s143 + $0x30] sm:$0xf] %vm2251, %v2007
      %2265 = vst.msk [vmem:[%s143 + $0x34] sm:$0xf] %vm2251, %v2008
      %2266 = vst.msk [vmem:[%s143 + $0x38] sm:$0xf] %vm2251, %v2009
      %2267 = vst.msk [vmem:[%s143 + $0x3c] sm:$0xf] %vm2251, %v2010
      %2268 = vst.msk [vmem:[%s143 + $0x40] sm:$0xf] %vm2251, %v2011
      %2269 = vst.msk [vmem:[%s143 + $0x44] sm:$0xf] %vm2251, %v2012
      %2270 = vst.msk [vmem:[%s143 + $0x48] sm:$0xf] %vm2251, %v2013
      %2271 = vst.msk [vmem:[%s143 + $0x4c] sm:$0xf] %vm2251, %v2014
      %2272 = vst.msk [vmem:[%s143 + $0x50] sm:$0xf] %vm2251, %v2015
      %2273 = vst.msk [vmem:[%s143 + $0x54] sm:$0xf] %vm2251, %v2016
      %2274 = vst.msk [vmem:[%s143 + $0x58] sm:$0xf] %vm2251, %v2017
      %2275 = vst.msk [vmem:[%s143 + $0x5c] sm:$0xf] %vm2251, %v2018
      %2276 = vst.msk [vmem:[%s143 + $0x60] sm:$0xf] %vm2251, %v2019
      %2277 = vst.msk [vmem:[%s143 + $0x64] sm:$0xf] %vm2251, %v2020
      %2278 = vst.msk [vmem:[%s143 + $0x68] sm:$0xf] %vm2251, %v2021
      %2279 = vst.msk [vmem:[%s143 + $0x6c] sm:$0xf] %vm2251, %v2022
      %2280 = vst.msk [vmem:[%s143 + $0x70] sm:$0xf] %vm2251, %v2023
      %2281 = vst.msk [vmem:[%s143 + $0x74] sm:$0xf] %vm2251, %v2024
      %2282 = vst.msk [vmem:[%s143 + $0x78] sm:$0xf] %vm2251, %v2025
      %2283 = vst.msk [vmem:[%s143 + $0x7c] sm:$0xf] %vm2251, %v2026
      %2284 = vst.msk [vmem:[%s143 + $0x80] sm:$0xf] %vm2251, %v2027
      %2285 = vst.msk [vmem:[%s143 + $0x84] sm:$0xf] %vm2251, %v2028
      %2286 = vst.msk [vmem:[%s143 + $0x88] sm:$0xf] %vm2251, %v2029
      %2287 = vst.msk [vmem:[%s143 + $0x8c] sm:$0xf] %vm2251, %v2030
      %2288 = vst.msk [vmem:[%s143 + $0x90] sm:$0xf] %vm2251, %v2031
      %2289 = vst.msk [vmem:[%s143 + $0x94] sm:$0xf] %vm2251, %v2032
      %2290 = vst.msk [vmem:[%s143 + $0x98] sm:$0xf] %vm2251, %v2033
      %2291 = vst.msk [vmem:[%s143 + $0x9c] sm:$0xf] %vm2251, %v2034
      %2292 = vst.msk [vmem:[%s143 + $0xa0] sm:$0xf] %vm2251, %v2035
      %2293 = vst.msk [vmem:[%s143 + $0xa4] sm:$0xf] %vm2251, %v2036
      %2294 = vst.msk [vmem:[%s143 + $0xa8] sm:$0xf] %vm2251, %v2037
      %2295 = vst.msk [vmem:[%s143 + $0xac] sm:$0xf] %vm2251, %v2038
      %2296 = vst.msk [vmem:[%s143 + $0xb0] sm:$0xf] %vm2251, %v2039
      %2297 = vst.msk [vmem:[%s143 + $0xb4] sm:$0xf] %vm2251, %v2040
      %2298 = vst.msk [vmem:[%s143 + $0xb8] sm:$0xf] %vm2251, %v2041
      %2299 = vst.msk [vmem:[%s143 + $0xbc] sm:$0xf] %vm2251, %v2042
      %2300 = vst.msk [vmem:[%s143 + $0xc0] sm:$0xf] %vm2251, %v2043
      %2301 = vst.msk [vmem:[%s143 + $0xc4] sm:$0xf] %vm2251, %v2044
      %2302 = vst.msk [vmem:[%s143 + $0xc8] sm:$0xf] %vm2251, %v2045
      %2303 = vst.msk [vmem:[%s143 + $0xcc] sm:$0xf] %vm2251, %v2046
      %2304 = vst.msk [vmem:[%s143 + $0xd0] sm:$0xf] %vm2251, %v2047
      %2305 = vst.msk [vmem:[%s143 + $0xd4] sm:$0xf] %vm2251, %v2048
      %2306 = vst.msk [vmem:[%s143 + $0xd8] sm:$0xf] %vm2251, %v2049
      %2307 = vst.msk [vmem:[%s143 + $0xdc] sm:$0xf] %vm2251, %v2050
      %2308 = vst.msk [vmem:[%s143 + $0xe0] sm:$0xf] %vm2251, %v2051
      %2309 = vst.msk [vmem:[%s143 + $0xe4] sm:$0xf] %vm2251, %v2052
      %2310 = vst.msk [vmem:[%s143 + $0xe8] sm:$0xf] %vm2251, %v2053
      %2311 = vst.msk [vmem:[%s143 + $0xec] sm:$0xf] %vm2251, %v2054
      %2312 = vst.msk [vmem:[%s143 + $0xf0] sm:$0xf] %vm2251, %v2055
      %2313 = vst.msk [vmem:[%s143 + $0xf4] sm:$0xf] %vm2251, %v2056
      %2314 = vst.msk [vmem:[%s143 + $0xf8] sm:$0xf] %vm2251, %v2057
      %2315 = vst.msk [vmem:[%s143 + $0xfc] sm:$0xf] %vm2251, %v2058
      %2316 = vst.msk [vmem:[%s143 + $0x100] sm:$0xf] %vm2251, %v2059
      %2317 = vst.msk [vmem:[%s143 + $0x104] sm:$0xf] %vm2251, %v2060
      %2318 = vst.msk [vmem:[%s143 + $0x108] sm:$0xf] %vm2251, %v2061
      %2319 = vst.msk [vmem:[%s143 + $0x10c] sm:$0xf] %vm2251, %v2062
      %2320 = vst.msk [vmem:[%s143 + $0x110] sm:$0xf] %vm2251, %v2063
      %2321 = vst.msk [vmem:[%s143 + $0x114] sm:$0xf] %vm2251, %v2064
      %2322 = vst.msk [vmem:[%s143 + $0x118] sm:$0xf] %vm2251, %v2065
      %2323 = vst.msk [vmem:[%s143 + $0x11c] sm:$0xf] %vm2251, %v2066
      %2324 = vst.msk [vmem:[%s143 + $0x120] sm:$0xf] %vm2251, %v2067
      %2325 = vst.msk [vmem:[%s143 + $0x124] sm:$0xf] %vm2251, %v2068
      %2326 = vst.msk [vmem:[%s143 + $0x128] sm:$0xf] %vm2251, %v2069
      %2327 = vst.msk [vmem:[%s143 + $0x12c] sm:$0xf] %vm2251, %v2070
      %2328 = vst.msk [vmem:[%s143 + $0x130] sm:$0xf] %vm2251, %v2071
      %2329 = vst.msk [vmem:[%s143 + $0x134] sm:$0xf] %vm2251, %v2072
      %2330 = vst.msk [vmem:[%s143 + $0x138] sm:$0xf] %vm2251, %v2073
      %2331 = vst.msk [vmem:[%s143 + $0x13c] sm:$0xf] %vm2251, %v2074
      %2332 = vst.msk [vmem:[%s143 + $0x140] sm:$0xf] %vm2251, %v2075
      %2333 = vst.msk [vmem:[%s143 + $0x144] sm:$0xf] %vm2251, %v2076
      %2334 = vst.msk [vmem:[%s143 + $0x148] sm:$0xf] %vm2251, %v2077
      %2335 = vst.msk [vmem:[%s143 + $0x14c] sm:$0xf] %vm2251, %v2078
      %2336 = vst.msk [vmem:[%s143 + $0x150] sm:$0xf] %vm2251, %v2079
      %2337 = vst.msk [vmem:[%s143 + $0x154] sm:$0xf] %vm2251, %v2080
      %2338 = vst.msk [vmem:[%s143 + $0x158] sm:$0xf] %vm2251, %v2081
      %2339 = vst.msk [vmem:[%s143 + $0x15c] sm:$0xf] %vm2251, %v2082
      %2340 = vst.msk [vmem:[%s143 + $0x160] sm:$0xf] %vm2251, %v2083
      %2341 = vst.msk [vmem:[%s143 + $0x164] sm:$0xf] %vm2251, %v2084
      %2342 = vst.msk [vmem:[%s143 + $0x168] sm:$0xf] %vm2251, %v2085
      %2343 = vst.msk [vmem:[%s143 + $0x16c] sm:$0xf] %vm2251, %v2086
      %2344 = vst.msk [vmem:[%s143 + $0x170] sm:$0xf] %vm2251, %v2087
      %2345 = vst.msk [vmem:[%s143 + $0x174] sm:$0xf] %vm2251, %v2088
      %2346 = vst.msk [vmem:[%s143 + $0x178] sm:$0xf] %vm2251, %v2089
      %2347 = vst.msk [vmem:[%s143 + $0x17c] sm:$0xf] %vm2251, %v2090
      %2348 = vst.msk [vmem:[%s143 + $0x180] sm:$0xf] %vm2251, %v2091
      %2349 = vst.msk [vmem:[%s143 + $0x184] sm:$0xf] %vm2251, %v2092
      %2350 = vst.msk [vmem:[%s143 + $0x188] sm:$0xf] %vm2251, %v2093
      %2351 = vst.msk [vmem:[%s143 + $0x18c] sm:$0xf] %vm2251, %v2094
      %2352 = vst.msk [vmem:[%s143 + $0x190] sm:$0xf] %vm2251, %v2095
      %2353 = vst.msk [vmem:[%s143 + $0x194] sm:$0xf] %vm2251, %v2096
      %2354 = vst.msk [vmem:[%s143 + $0x198] sm:$0xf] %vm2251, %v2097
      %2355 = vst.msk [vmem:[%s143 + $0x19c] sm:$0xf] %vm2251, %v2098
      %2356 = vst.msk [vmem:[%s143 + $0x1a0] sm:$0xf] %vm2251, %v2099
      %2357 = vst.msk [vmem:[%s143 + $0x1a4] sm:$0xf] %vm2251, %v2100
      %2358 = vst.msk [vmem:[%s143 + $0x1a8] sm:$0xf] %vm2251, %v2101
      %2359 = vst.msk [vmem:[%s143 + $0x1ac] sm:$0xf] %vm2251, %v2102
      %2360 = vst.msk [vmem:[%s143 + $0x1b0] sm:$0xf] %vm2251, %v2103
      %2361 = vst.msk [vmem:[%s143 + $0x1b4] sm:$0xf] %vm2251, %v2104
      %2362 = vst.msk [vmem:[%s143 + $0x1b8] sm:$0xf] %vm2251, %v2105
      %2363 = vst.msk [vmem:[%s143 + $0x1bc] sm:$0xf] %vm2251, %v2106
      %2364 = vst.msk [vmem:[%s143 + $0x1c0] sm:$0xf] %vm2251, %v2107
      %2365 = vst.msk [vmem:[%s143 + $0x1c4] sm:$0xf] %vm2251, %v2108
      %2366 = vst.msk [vmem:[%s143 + $0x1c8] sm:$0xf] %vm2251, %v2109
      %2367 = vst.msk [vmem:[%s143 + $0x1cc] sm:$0xf] %vm2251, %v2110
      %2368 = vst.msk [vmem:[%s143 + $0x1d0] sm:$0xf] %vm2251, %v2111
      %2369 = vst.msk [vmem:[%s143 + $0x1d4] sm:$0xf] %vm2251, %v2112
      %2370 = vst.msk [vmem:[%s143 + $0x1d8] sm:$0xf] %vm2251, %v2113
      %2371 = vst.msk [vmem:[%s143 + $0x1dc] sm:$0xf] %vm2251, %v2114
      %2372 = vst.msk [vmem:[%s143 + $0x1e0] sm:$0xf] %vm2251, %v2115
      %2373 = vst.msk [vmem:[%s143 + $0x1e4] sm:$0xf] %vm2251, %v2116
      %2374 = vst.msk [vmem:[%s143 + $0x1e8] sm:$0xf] %vm2251, %v2117
      %2375 = vst.msk [vmem:[%s143 + $0x1ec] sm:$0xf] %vm2251, %v2118
      %2376 = vst.msk [vmem:[%s143 + $0x1f0] sm:$0xf] %vm2251, %v2119
      %2377 = vst.msk [vmem:[%s143 + $0x1f4] sm:$0xf] %vm2251, %v2120
      %2378 = vst.msk [vmem:[%s143 + $0x1f8] sm:$0xf] %vm2251, %v2121
      %2379 = vst.msk [vmem:[%s143 + $0x1fc] sm:$0xf] %vm2251, %v2122
      %p2380 = scmp.lt.s32.totalorder %s13, 1
      %s2381 = scalar_select %p2380, %s13, 1
      %s2382 = smul.addr %s2381, 128
      %s2383 = smul.addr %s2382, 4
      %s2384 = scalar_lea.vmem %s2, %s2383
      // Predicated region
      $region29: #{discriminator_forward.3} parent=27 // pred_check
        %p2385 = pneg %p78
      $region30: #{discriminator_forward.3} parent=27 // pred_check_branch
        %2387 = sbr.rel (%p2385) target = $region32
      $region31: #{discriminator_forward.3} parent=27 // pred_region
        _
      $region32: #{discriminator_forward.3} parent=27 // pred_fallthru
        _
    $region28: #{discriminator_forward.3} parent=5 // pred_fallthru
      _
    %p2388 = scmp.le.s32.totalorder 2, %s8
    // Predicated region
    $region33: #{discriminator_forward.3} parent=5 // pred_check
      %p2389 = pneg %p2388
    $region34: #{discriminator_forward.3} parent=5 // pred_check_branch
      %2391 = sbr.rel (%p2389) target = $region36
    $region35: #{discriminator_forward.3} parent=5 // pred_region
      %s2392 = ssub.s32 %s8, 2
      // Predicated region
      $region37: #{discriminator_forward.3} parent=35 // pred_check
        %p2393 = pneg %p84
      $region38: #{discriminator_forward.3} parent=35 // pred_check_branch
        %2395 = sbr.rel (%p2393) target = $region40
      $region39: #{discriminator_forward.3} parent=35 // pred_region
        %p2396 = scmp.lt.s32.totalorder %s14, 1
        %s2397 = scalar_select %p2396, %s14, 1
        %s2398 = smul.addr %s2397, 128
        %s2399 = smul.addr %s2398, 4
        %s2400 = scalar_lea.vmem %s2, %s2399
      $region40: #{discriminator_forward.3} parent=35 // pred_fallthru
        _
    $region36: #{discriminator_forward.3} parent=5 // pred_fallthru
      _
  $region6: #{discriminator_forward.3} parent=0 // loop_footer
    %s12 = sadd.s32 1, %s8
  $region7: #{discriminator_forward.3} parent=0 // loop_footer_branch
    %7 = sbr.rel target = $region3
  $region8: #{discriminator_forward.3} parent=0 // loop_exit
    _

// kernel: discriminator_forward.4
$region0: #{discriminator_forward.4}
  #allocation0 [shape = 'u32[]', space=smem, size = 0x4, offset = 0x4, fixed_abs, tag = 'smem constant byte address 0x4 - core index']
  #allocation1 [shape = 'u32[144,128]{1,0:T(1,128)}', space=vmem, size = 0x12000, scoped, tag = 'internal scratch']
  %s0 = inlined_call_operand.vmem [shape: bf16[2,256,128], index: 0, kind: input, shape index: {}]
  %s1 = inlined_call_operand.vmem [shape: bf16[128,16], index: 1, kind: input, shape index: {}]
  %s2 = inlined_call_operand.vmem [shape: f32[1,1,16], index: 2, kind: input, shape index: {}]
  %s3 = inlined_call_operand.vmem [shape: f32[1,1,16], index: 3, kind: input, shape index: {}]
  %s4 = inlined_call_operand.vmem [shape: bf16[2,256,16], index: 4, kind: output, shape index: {}]
  %s5 = sld [smem:[#allocation0]]
  $region49: #{discriminator_forward.4} parent=0
    _
  %s7 = ssub.s32 1, %s5
  %s8 = scalar_select 0, %s7, %s5
  loop: start=0, step=1, limit=4
  $region2: #{discriminator_forward.4} parent=0 // loop_pre_header
    _
  $region3: #{discriminator_forward.4} parent=0 // loop_header
    %s10 = sphi 0, %s14
    %p11 = scmp.ge.s32.totalorder %s10, 4
    %s20 = sphi 0, %s22
    %s23 = sphi 0, %s20
    %s24 = sphi 0, %s23
    %s40 = sphi 0, %s24
    %s44 = sphi 0, %s44
    %s46 = sphi 0, %s44
    %s47 = sphi 0, %s46
    %s61 = sphi 0, %s47
    %s65 = sphi 0, %s65
    %s67 = sphi 0, %s65
    %s68 = sphi 0, %s67
    %s82 = sphi 0, %s68
    %s86 = sphi 0, %s86
    %s88 = sphi 0, %s86
    %s89 = sphi 0, %s88
    %s103 = sphi 0, %s89
    %s109 = sphi 0, %s111
    %s112 = sphi 0, %s109
    %s113 = sphi 0, %s112
    %s129 = sphi 0, %s113
  $region4: #{discriminator_forward.4} parent=0 // loop_header_branch
    %13 = sbr.rel (%p11) target = $region8
  $region5: #{discriminator_forward.4} parent=0 // loop_body
    %s15 = ssub.s32 %s10, 1
    %s16 = ssub.s32 %s10, 2
    %s17 = sadd.s32 %s10, 1
    %s18 = ssub.s32 %s10, %s17
    %p19 = scmp.eq.s32.totalorder %s18, 0
    %s21 = sadd.s32 %s20, 1
    %s22 = scalar_select %p19, %s20, %s21
    %p25 = pneg %p19
    %p26 = scmp.eq.s32.totalorder %s10, 1
    %p27 = por %p25, %p26
    %p28 = scmp.ne.s32.totalorder %s20, %s23
    %p29 = scmp.eq.s32.totalorder %s10, 0
    %p30 = por %p28, %p29
    %p31 = scmp.ne.s32.totalorder %s20, %s23
    %p32 = scmp.eq.s32.totalorder %s15, 1
    %p33 = por %p31, %p32
    %p34 = scmp.ne.s32.totalorder %s23, %s24
    %p35 = scmp.eq.s32.totalorder %s15, 0
    %p36 = por %p34, %p35
    %p37 = scmp.ne.s32.totalorder %s23, %s24
    %p38 = scmp.eq.s32.totalorder %s16, 1
    %p39 = por %p37, %p38
    %p41 = scmp.ne.s32.totalorder %s24, %s40
    %p42 = scmp.eq.s32.totalorder %s16, 0
    %p43 = por %p41, %p42
    %s45 = sadd.s32 %s44, 1
    %p48 = scmp.eq.s32.totalorder %s10, 1
    %p49 = scmp.ne.s32.totalorder %s44, %s46
    %p50 = scmp.eq.s32.totalorder %s10, 0
    %p51 = por %p49, %p50
    %p52 = scmp.ne.s32.totalorder %s44, %s46
    %p53 = scmp.eq.s32.totalorder %s15, 1
    %p54 = por %p52, %p53
    %p55 = scmp.ne.s32.totalorder %s46, %s47
    %p56 = scmp.eq.s32.totalorder %s15, 0
    %p57 = por %p55, %p56
    %p58 = scmp.ne.s32.totalorder %s46, %s47
    %p59 = scmp.eq.s32.totalorder %s16, 1
    %p60 = por %p58, %p59
    %p62 = scmp.ne.s32.totalorder %s47, %s61
    %p63 = scmp.eq.s32.totalorder %s16, 0
    %p64 = por %p62, %p63
    %s66 = sadd.s32 %s65, 1
    %p69 = scmp.eq.s32.totalorder %s10, 1
    %p70 = scmp.ne.s32.totalorder %s65, %s67
    %p71 = scmp.eq.s32.totalorder %s10, 0
    %p72 = por %p70, %p71
    %p73 = scmp.ne.s32.totalorder %s65, %s67
    %p74 = scmp.eq.s32.totalorder %s15, 1
    %p75 = por %p73, %p74
    %p76 = scmp.ne.s32.totalorder %s67, %s68
    %p77 = scmp.eq.s32.totalorder %s15, 0
    %p78 = por %p76, %p77
    %p79 = scmp.ne.s32.totalorder %s67, %s68
    %p80 = scmp.eq.s32.totalorder %s16, 1
    %p81 = por %p79, %p80
    %p83 = scmp.ne.s32.totalorder %s68, %s82
    %p84 = scmp.eq.s32.totalorder %s16, 0
    %p85 = por %p83, %p84
    %s87 = sadd.s32 %s86, 1
    %p90 = scmp.eq.s32.totalorder %s10, 1
    %p91 = scmp.ne.s32.totalorder %s86, %s88
    %p92 = scmp.eq.s32.totalorder %s10, 0
    %p93 = por %p91, %p92
    %p94 = scmp.ne.s32.totalorder %s86, %s88
    %p95 = scmp.eq.s32.totalorder %s15, 1
    %p96 = por %p94, %p95
    %p97 = scmp.ne.s32.totalorder %s88, %s89
    %p98 = scmp.eq.s32.totalorder %s15, 0
    %p99 = por %p97, %p98
    %p100 = scmp.ne.s32.totalorder %s88, %s89
    %p101 = scmp.eq.s32.totalorder %s16, 1
    %p102 = por %p100, %p101
    %p104 = scmp.ne.s32.totalorder %s89, %s103
    %p105 = scmp.eq.s32.totalorder %s16, 0
    %p106 = por %p104, %p105
    %s107 = ssub.s32 %s10, %s17
    %p108 = scmp.eq.s32.totalorder %s107, 0
    %s110 = sadd.s32 %s109, 1
    %s111 = scalar_select %p108, %s109, %s110
    %p114 = pneg %p108
    %p115 = scmp.eq.s32.totalorder %s10, 1
    %p116 = por %p114, %p115
    %p117 = scmp.ne.s32.totalorder %s109, %s112
    %p118 = scmp.eq.s32.totalorder %s10, 0
    %p119 = por %p117, %p118
    %p120 = scmp.ne.s32.totalorder %s109, %s112
    %p121 = scmp.eq.s32.totalorder %s15, 1
    %p122 = por %p120, %p121
    %p123 = scmp.ne.s32.totalorder %s112, %s113
    %p124 = scmp.eq.s32.totalorder %s15, 0
    %p125 = por %p123, %p124
    %p126 = scmp.ne.s32.totalorder %s112, %s113
    %p127 = scmp.eq.s32.totalorder %s16, 1
    %p128 = por %p126, %p127
    %p130 = scmp.ne.s32.totalorder %s113, %s129
    %p131 = scmp.eq.s32.totalorder %s16, 0
    %p132 = por %p130, %p131
    %p133 = scmp.le.s32.totalorder 1, %s10
    %p134 = scmp.lt.s32.totalorder %s10, 3
    %p135 = pnand %p133, %p134
    %p136 = pneg %p135
    // Predicated region
    $region9: #{discriminator_forward.4} parent=5 // pred_check
      _
    $region10: #{discriminator_forward.4} parent=5 // pred_check_branch
      %138 = sbr.rel (%p135) target = $region12
    $region11: #{discriminator_forward.4} parent=5 // pred_region
      %s139 = ssub.s32 %s10, 1
      // Predicated region
      $region13: #{discriminator_forward.4} parent=11 // pred_check
        %p140 = pneg %p57
      $region14: #{discriminator_forward.4} parent=11 // pred_check_branch
        %142 = sbr.rel (%p140) target = $region16
      $region15: #{discriminator_forward.4} parent=11 // pred_region
        _
      $region16: #{discriminator_forward.4} parent=11 // pred_fallthru
        _
      // Predicated region
      $region17: #{discriminator_forward.4} parent=11 // pred_check
        %p143 = pneg %p78
      $region18: #{discriminator_forward.4} parent=11 // pred_check_branch
        %145 = sbr.rel (%p143) target = $region20
      $region19: #{discriminator_forward.4} parent=11 // pred_region
        _
      $region20: #{discriminator_forward.4} parent=11 // pred_fallthru
        _
      // Predicated region
      $region21: #{discriminator_forward.4} parent=11 // pred_check
        %p146 = pneg %p99
      $region22: #{discriminator_forward.4} parent=11 // pred_check_branch
        %148 = sbr.rel (%p146) target = $region24
      $region23: #{discriminator_forward.4} parent=11 // pred_region
        _
      $region24: #{discriminator_forward.4} parent=11 // pred_fallthru
        _
    $region12: #{discriminator_forward.4} parent=5 // pred_fallthru
      _
    %p149 = scmp.lt.s32.totalorder %s10, 2
    // Predicated region
    $region25: #{discriminator_forward.4} parent=5 // pred_check
      %p150 = pneg %p149
    $region26: #{discriminator_forward.4} parent=5 // pred_check_branch
      %152 = sbr.rel (%p150) target = $region28
    $region27: #{discriminator_forward.4} parent=5 // pred_region
      // Predicated region
      $region29: #{discriminator_forward.4} parent=27 // pred_check
        %p153 = pneg %p30
      $region30: #{discriminator_forward.4} parent=27 // pred_check_branch
        %155 = sbr.rel (%p153) target = $region32
      $region31: #{discriminator_forward.4} parent=27 // pred_region
        %p156 = scmp.lt.s32.totalorder %s10, 1
        %s157 = scalar_select %p156, %s10, 1
        %s158 = smul.addr %s157, 32
        %s159 = smul.addr %s158, 4
        %s160 = scalar_lea.vmem %s0, %s159
      $region32: #{discriminator_forward.4} parent=27 // pred_fallthru
        _
    $region28: #{discriminator_forward.4} parent=5 // pred_fallthru
      _
    %p161 = scmp.le.s32.totalorder 1, %s10
    %p162 = scmp.lt.s32.totalorder %s10, 3
    %p163 = pnand %p161, %p162
    %p164 = pneg %p163
    // Predicated region
    $region33: #{discriminator_forward.4} parent=5 // pred_check
      _
    $region34: #{discriminator_forward.4} parent=5 // pred_check_branch
      %166 = sbr.rel (%p163) target = $region36
    $region35: #{discriminator_forward.4} parent=5 // pred_region
      %s167 = ssub.s32 %s10, 1
      %p168 = scmp.lt.s32.totalorder %s15, 1
      %s169 = scalar_select %p168, %s15, 1
      %s170 = smul.addr %s169, 32
      %s171 = smul.addr %s170, 4
      %s172 = scalar_lea.vmem %s0, %s171
      %p173 = pneg %p36
      %p174 = pneg %p33
      %p175 = pneg %p57
      %p176 = pneg %p54
      %p177 = pneg %p78
      %p178 = pneg %p75
      %p179 = pneg %p99
      %p180 = pneg %p96
      %p181 = pneg %p125
      %p182 = pneg %p122
      %p183 = scmp.lt.s32.totalorder %s15, 1
      %s184 = scalar_select %p183, %s15, 1
      %s185 = smul.addr %s184, 32
      %s186 = smul.addr %s185, 4
      %s187 = scalar_lea.vmem %s4, %s186
      %p188 = scmp.lt.s32.totalorder %s15, 1
      %s189 = scalar_select %p188, %s15, 1
      %s190 = smul.addr %s189, 32
      %s191 = smul.addr %s190, 4
      %s192 = scalar_lea.vmem %s0, %s191
      %p193 = scmp.lt.s32.totalorder %s15, 1
      %s194 = scalar_select %p193, %s15, 1
      %s195 = smul.addr %s194, 32
      %s196 = smul.addr %s195, 4
      %s197 = scalar_lea.vmem %s4, %s196
      %v199 = vld [vmem:[%s192] sm:$0xf]
      %v200 = vld [vmem:[%s192 + $0x4] sm:$0xf]
      %v201 = vld [vmem:[%s192 + $0x8] sm:$0xf]
      %v202 = vld [vmem:[%s192 + $0xc] sm:$0xf]
      %v203 = vld [vmem:[%s192 + $0x10] sm:$0xf]
      %v204 = vld [vmem:[%s192 + $0x14] sm:$0xf]
      %v205 = vld [vmem:[%s192 + $0x18] sm:$0xf]
      %v206 = vld [vmem:[%s192 + $0x1c] sm:$0xf]
      %v207 = vld [vmem:[%s192 + $0x20] sm:$0xf]
      %v208 = vld [vmem:[%s192 + $0x24] sm:$0xf]
      %v209 = vld [vmem:[%s192 + $0x28] sm:$0xf]
      %v210 = vld [vmem:[%s192 + $0x2c] sm:$0xf]
      %v211 = vld [vmem:[%s192 + $0x30] sm:$0xf]
      %v212 = vld [vmem:[%s192 + $0x34] sm:$0xf]
      %v213 = vld [vmem:[%s192 + $0x38] sm:$0xf]
      %v214 = vld [vmem:[%s192 + $0x3c] sm:$0xf]
      %v215 = vld [vmem:[%s192 + $0x40] sm:$0xf]
      %v216 = vld [vmem:[%s192 + $0x44] sm:$0xf]
      %v217 = vld [vmem:[%s192 + $0x48] sm:$0xf]
      %v218 = vld [vmem:[%s192 + $0x4c] sm:$0xf]
      %v219 = vld [vmem:[%s192 + $0x50] sm:$0xf]
      %v220 = vld [vmem:[%s192 + $0x54] sm:$0xf]
      %v221 = vld [vmem:[%s192 + $0x58] sm:$0xf]
      %v222 = vld [vmem:[%s192 + $0x5c] sm:$0xf]
      %v223 = vld [vmem:[%s192 + $0x60] sm:$0xf]
      %v224 = vld [vmem:[%s192 + $0x64] sm:$0xf]
      %v225 = vld [vmem:[%s192 + $0x68] sm:$0xf]
      %v226 = vld [vmem:[%s192 + $0x6c] sm:$0xf]
      %v227 = vld [vmem:[%s192 + $0x70] sm:$0xf]
      %v228 = vld [vmem:[%s192 + $0x74] sm:$0xf]
      %v229 = vld [vmem:[%s192 + $0x78] sm:$0xf]
      %v230 = vld [vmem:[%s192 + $0x7c] sm:$0xf]
      %v231 = vld [vmem:[%s1] sm:$0xf]
      %v232 = vld [vmem:[%s1 + $0x4] sm:$0xf]
      %v233 = vld [vmem:[%s1 + $0x8] sm:$0xf]
      %v234 = vld [vmem:[%s1 + $0xc] sm:$0xf]
      %v235 = vld [vmem:[%s1 + $0x10] sm:$0xf]
      %v236 = vld [vmem:[%s1 + $0x14] sm:$0xf]
      %v237 = vld [vmem:[%s1 + $0x18] sm:$0xf]
      %v238 = vld [vmem:[%s1 + $0x1c] sm:$0xf]
      %v239 = vld [vmem:[%s1 + $0x20] sm:$0xf]
      %v240 = vld [vmem:[%s1 + $0x24] sm:$0xf]
      %v241 = vld [vmem:[%s1 + $0x28] sm:$0xf]
      %v242 = vld [vmem:[%s1 + $0x2c] sm:$0xf]
      %v243 = vld [vmem:[%s1 + $0x30] sm:$0xf]
      %v244 = vld [vmem:[%s1 + $0x34] sm:$0xf]
      %v245 = vld [vmem:[%s1 + $0x38] sm:$0xf]
      %v246 = vld [vmem:[%s1 + $0x3c] sm:$0xf]
      %v279 = vunpack.c.l.b16 %v199
      %v280 = vunpack.c.l.b16 %v200
      %v281 = vunpack.c.l.b16 %v201
      %v282 = vunpack.c.l.b16 %v202
      %v283 = vunpack.c.l.b16 %v203
      %v284 = vunpack.c.l.b16 %v204
      %v285 = vunpack.c.l.b16 %v205
      %v286 = vunpack.c.l.b16 %v206
      %v287 = vunpack.c.l.b16 %v207
      %v288 = vunpack.c.l.b16 %v208
      %v289 = vunpack.c.l.b16 %v209
      %v290 = vunpack.c.l.b16 %v210
      %v291 = vunpack.c.l.b16 %v211
      %v292 = vunpack.c.l.b16 %v212
      %v293 = vunpack.c.l.b16 %v213
      %v294 = vunpack.c.l.b16 %v214
      %v295 = vunpack.c.l.b16 %v215
      %v296 = vunpack.c.l.b16 %v216
      %v297 = vunpack.c.l.b16 %v217
      %v298 = vunpack.c.l.b16 %v218
      %v299 = vunpack.c.l.b16 %v219
      %v300 = vunpack.c.l.b16 %v220
      %v301 = vunpack.c.l.b16 %v221
      %v302 = vunpack.c.l.b16 %v222
      %v303 = vunpack.c.l.b16 %v223
      %v304 = vunpack.c.l.b16 %v224
      %v305 = vunpack.c.l.b16 %v225
      %v306 = vunpack.c.l.b16 %v226
      %v307 = vunpack.c.l.b16 %v227
      %v308 = vunpack.c.l.b16 %v228
      %v309 = vunpack.c.l.b16 %v229
      %v310 = vunpack.c.l.b16 %v230
      %v311 = vpack.c.b16 %v280, %v279
      %v312 = vpack.c.b16 %v282, %v281
      %v313 = vpack.c.b16 %v284, %v283
      %v314 = vpack.c.b16 %v286, %v285
      %v315 = vpack.c.b16 %v288, %v287
      %v316 = vpack.c.b16 %v290, %v289
      %v317 = vpack.c.b16 %v292, %v291
      %v318 = vpack.c.b16 %v294, %v293
      %v319 = vpack.c.b16 %v296, %v295
      %v320 = vpack.c.b16 %v298, %v297
      %v321 = vpack.c.b16 %v300, %v299
      %v322 = vpack.c.b16 %v302, %v301
      %v323 = vpack.c.b16 %v304, %v303
      %v324 = vpack.c.b16 %v306, %v305
      %v325 = vpack.c.b16 %v308, %v307
      %v326 = vpack.c.b16 %v310, %v309
      %v359 = vunpack.c.l.b16 %v231
      %v360 = vunpack.c.l.b16 %v232
      %v361 = vunpack.c.l.b16 %v233
      %v362 = vunpack.c.l.b16 %v234
      %v363 = vunpack.c.l.b16 %v235
      %v364 = vunpack.c.l.b16 %v236
      %v365 = vunpack.c.l.b16 %v237
      %v366 = vunpack.c.l.b16 %v238
      %v367 = vunpack.c.l.b16 %v239
      %v368 = vunpack.c.l.b16 %v240
      %v369 = vunpack.c.l.b16 %v241
      %v370 = vunpack.c.l.b16 %v242
      %v371 = vunpack.c.l.b16 %v243
      %v372 = vunpack.c.l.b16 %v244
      %v373 = vunpack.c.l.b16 %v245
      %v374 = vunpack.c.l.b16 %v246
      %v375 = vpack.c.b16 %v360, %v359
      %v376 = vpack.c.b16 %v362, %v361
      %v377 = vpack.c.b16 %v364, %v363
      %v378 = vpack.c.b16 %v366, %v365
      %v379 = vpack.c.b16 %v368, %v367
      %v380 = vpack.c.b16 %v370, %v369
      %v381 = vpack.c.b16 %v372, %v371
      %v382 = vpack.c.b16 %v374, %v373
      %391 = vmatprep.subr.bf16.mxu0 0
      %392 = vmatpush1.bf16.msra.mxu0 %v382
      %393 = vmatprep.subr.bf16.mxu0 0
      %394 = vmatpush1.bf16.msra.mxu0 %v381
      %395 = vmatprep.subr.bf16.mxu0 0
      %396 = vmatpush1.bf16.msra.mxu0 %v380
      %397 = vmatprep.subr.bf16.mxu0 0
      %398 = vmatpush1.bf16.msra.mxu0 %v379
      %399 = vmatprep.subr.bf16.mxu0 0
      %400 = vmatpush1.bf16.msra.mxu0 %v378
      %401 = vmatprep.subr.bf16.mxu0 0
      %402 = vmatpush1.bf16.msra.mxu0 %v377
      %403 = vmatprep.subr.bf16.mxu0 0
      %404 = vmatpush1.bf16.msra.mxu0 %v376
      %405 = vmatprep.subr.bf16.mxu0 0
      %406 = vmatpush1.bf16.msra.mxu0 %v375
      %407 = vmatprep.subr.bf16.mxu0 0
      %408 = vmatpush2.bf16.msra.mxu0 0
      %409 = vmatprep.subr.bf16.mxu0 0
      %410 = vmatpush2.bf16.msra.mxu0 0
      %411 = vmatprep.subr.bf16.mxu0 0
      %412 = vmatpush2.bf16.msra.mxu0 0
      %413 = vmatprep.subr.bf16.mxu0 0
      %414 = vmatpush2.bf16.msra.mxu0 0
      %415 = vmatprep.subr.bf16.mxu0 0
      %416 = vmatpush2.bf16.msra.mxu0 0
      %417 = vmatprep.subr.bf16.mxu0 0
      %418 = vmatpush2.bf16.msra.mxu0 0
      %419 = vmatprep.subr.bf16.mxu0 0
      %420 = vmatpush2.bf16.msra.mxu0 0
      %421 = vmatprep.subr.bf16.mxu0 0
      %422 = vmatpush2.bf16.msra.mxu0 0
      %423 = vmatprep.mubr.bf16.mxu0 0
      %424 = vmatmul.mubr.bf16.gmra.mxu0 %v311
      %v425 = vpop.f32.mrf.mxu0
      %v426 = vadd.f32 0.0, %v425
      %v427 = vpop.f32.mrf.mxu0
      %v428 = vpop.f32.mrf.mxu0
      %v429 = vadd.f32 0.0, %v428
      %v430 = vpop.f32.mrf.mxu0
      %431 = vmatprep.mubr.bf16.mxu0 0
      %432 = vmatmul.mubr.bf16.gmra.mxu0 %v312
      %v433 = vpop.f32.mrf.mxu0
      %v434 = vadd.f32 0.0, %v433
      %v435 = vpop.f32.mrf.mxu0
      %v436 = vpop.f32.mrf.mxu0
      %v437 = vadd.f32 0.0, %v436
      %v438 = vpop.f32.mrf.mxu0
      %439 = vmatprep.mubr.bf16.mxu0 0
      %440 = vmatmul.mubr.bf16.gmra.mxu0 %v313
      %v441 = vpop.f32.mrf.mxu0
      %v442 = vadd.f32 0.0, %v441
      %v443 = vpop.f32.mrf.mxu0
      %v444 = vpop.f32.mrf.mxu0
      %v445 = vadd.f32 0.0, %v444
      %v446 = vpop.f32.mrf.mxu0
      %447 = vmatprep.mubr.bf16.mxu0 0
      %448 = vmatmul.mubr.bf16.gmra.mxu0 %v314
      %v449 = vpop.f32.mrf.mxu0
      %v450 = vadd.f32 0.0, %v449
      %v451 = vpop.f32.mrf.mxu0
      %v452 = vpop.f32.mrf.mxu0
      %v453 = vadd.f32 0.0, %v452
      %v454 = vpop.f32.mrf.mxu0
      %455 = vmatprep.mubr.bf16.mxu0 0
      %456 = vmatmul.mubr.bf16.gmra.mxu0 %v315
      %v457 = vpop.f32.mrf.mxu0
      %v458 = vadd.f32 0.0, %v457
      %v459 = vpop.f32.mrf.mxu0
      %v460 = vpop.f32.mrf.mxu0
      %v461 = vadd.f32 0.0, %v460
      %v462 = vpop.f32.mrf.mxu0
      %463 = vmatprep.mubr.bf16.mxu0 0
      %464 = vmatmul.mubr.bf16.gmra.mxu0 %v316
      %v465 = vpop.f32.mrf.mxu0
      %v466 = vadd.f32 0.0, %v465
      %v467 = vpop.f32.mrf.mxu0
      %v468 = vpop.f32.mrf.mxu0
      %v469 = vadd.f32 0.0, %v468
      %v470 = vpop.f32.mrf.mxu0
      %471 = vmatprep.mubr.bf16.mxu0 0
      %472 = vmatmul.mubr.bf16.gmra.mxu0 %v317
      %v473 = vpop.f32.mrf.mxu0
      %v474 = vadd.f32 0.0, %v473
      %v475 = vpop.f32.mrf.mxu0
      %v476 = vpop.f32.mrf.mxu0
      %v477 = vadd.f32 0.0, %v476
      %v478 = vpop.f32.mrf.mxu0
      %479 = vmatprep.mubr.bf16.mxu0 0
      %480 = vmatmul.mubr.bf16.gmra.mxu0 %v318
      %v481 = vpop.f32.mrf.mxu0
      %v482 = vadd.f32 0.0, %v481
      %v483 = vpop.f32.mrf.mxu0
      %v484 = vpop.f32.mrf.mxu0
      %v485 = vadd.f32 0.0, %v484
      %v486 = vpop.f32.mrf.mxu0
      %487 = vmatprep.mubr.bf16.mxu0 0
      %488 = vmatmul.mubr.bf16.gmra.mxu0 %v319
      %v489 = vpop.f32.mrf.mxu0
      %v490 = vadd.f32 0.0, %v489
      %v491 = vpop.f32.mrf.mxu0
      %v492 = vpop.f32.mrf.mxu0
      %v493 = vadd.f32 0.0, %v492
      %v494 = vpop.f32.mrf.mxu0
      %495 = vmatprep.mubr.bf16.mxu0 0
      %496 = vmatmul.mubr.bf16.gmra.mxu0 %v320
      %v497 = vpop.f32.mrf.mxu0
      %v498 = vadd.f32 0.0, %v497
      %v499 = vpop.f32.mrf.mxu0
      %v500 = vpop.f32.mrf.mxu0
      %v501 = vadd.f32 0.0, %v500
      %v502 = vpop.f32.mrf.mxu0
      %503 = vmatprep.mubr.bf16.mxu0 0
      %504 = vmatmul.mubr.bf16.gmra.mxu0 %v321
      %v505 = vpop.f32.mrf.mxu0
      %v506 = vadd.f32 0.0, %v505
      %v507 = vpop.f32.mrf.mxu0
      %v508 = vpop.f32.mrf.mxu0
      %v509 = vadd.f32 0.0, %v508
      %v510 = vpop.f32.mrf.mxu0
      %511 = vmatprep.mubr.bf16.mxu0 0
      %512 = vmatmul.mubr.bf16.gmra.mxu0 %v322
      %v513 = vpop.f32.mrf.mxu0
      %v514 = vadd.f32 0.0, %v513
      %v515 = vpop.f32.mrf.mxu0
      %v516 = vpop.f32.mrf.mxu0
      %v517 = vadd.f32 0.0, %v516
      %v518 = vpop.f32.mrf.mxu0
      %519 = vmatprep.mubr.bf16.mxu0 0
      %520 = vmatmul.mubr.bf16.gmra.mxu0 %v323
      %v521 = vpop.f32.mrf.mxu0
      %v522 = vadd.f32 0.0, %v521
      %v523 = vpop.f32.mrf.mxu0
      %v524 = vpop.f32.mrf.mxu0
      %v525 = vadd.f32 0.0, %v524
      %v526 = vpop.f32.mrf.mxu0
      %527 = vmatprep.mubr.bf16.mxu0 0
      %528 = vmatmul.mubr.bf16.gmra.mxu0 %v324
      %v529 = vpop.f32.mrf.mxu0
      %v530 = vadd.f32 0.0, %v529
      %v531 = vpop.f32.mrf.mxu0
      %v532 = vpop.f32.mrf.mxu0
      %v533 = vadd.f32 0.0, %v532
      %v534 = vpop.f32.mrf.mxu0
      %535 = vmatprep.mubr.bf16.mxu0 0
      %536 = vmatmul.mubr.bf16.gmra.mxu0 %v325
      %v537 = vpop.f32.mrf.mxu0
      %v538 = vadd.f32 0.0, %v537
      %v539 = vpop.f32.mrf.mxu0
      %v540 = vpop.f32.mrf.mxu0
      %v541 = vadd.f32 0.0, %v540
      %v542 = vpop.f32.mrf.mxu0
      %543 = vmatprep.mubr.bf16.mxu0 0
      %544 = vmatmul.mubr.bf16.gmra.mxu0 %v326
      %v545 = vpop.f32.mrf.mxu0
      %v546 = vadd.f32 0.0, %v545
      %v547 = vpop.f32.mrf.mxu0
      %v548 = vpop.f32.mrf.mxu0
      %v549 = vadd.f32 0.0, %v548
      %v550 = vpop.f32.mrf.mxu0
      %551 = vdwg.mxu0
      %v552 = vld [vmem:[%s2] sm:$0x1]
      %v553 = vld [vmem:[%s3] sm:$0x1]
      %vm554 = vcmask 130048
      %v555 = vsel %vm554, %v426, 0.0
      %v556 = vsel %vm554, %v429, 0.0
      %v557 = vadd.f32 %v555, %v556
      %v558 = vsel %vm554, %v434, 0.0
      %v559 = vadd.f32 %v557, %v558
      %v560 = vsel %vm554, %v437, 0.0
      %v561 = vadd.f32 %v559, %v560
      %v562 = vsel %vm554, %v442, 0.0
      %v563 = vadd.f32 %v561, %v562
      %v564 = vsel %vm554, %v445, 0.0
      %v565 = vadd.f32 %v563, %v564
      %v566 = vsel %vm554, %v450, 0.0
      %v567 = vadd.f32 %v565, %v566
      %v568 = vsel %vm554, %v453, 0.0
      %v569 = vadd.f32 %v567, %v568
      %v570 = vsel %vm554, %v458, 0.0
      %v571 = vadd.f32 %v569, %v570
      %v572 = vsel %vm554, %v461, 0.0
      %v573 = vadd.f32 %v571, %v572
      %v574 = vsel %vm554, %v466, 0.0
      %v575 = vadd.f32 %v573, %v574
      %v576 = vsel %vm554, %v469, 0.0
      %v577 = vadd.f32 %v575, %v576
      %v578 = vsel %vm554, %v474, 0.0
      %v579 = vadd.f32 %v577, %v578
      %v580 = vsel %vm554, %v477, 0.0
      %v581 = vadd.f32 %v579, %v580
      %v582 = vsel %vm554, %v482, 0.0
      %v583 = vadd.f32 %v581, %v582
      %v584 = vsel %vm554, %v485, 0.0
      %v585 = vadd.f32 %v583, %v584
      %v586 = vsel %vm554, %v490, 0.0
      %v587 = vadd.f32 %v585, %v586
      %v588 = vsel %vm554, %v493, 0.0
      %v589 = vadd.f32 %v587, %v588
      %v590 = vsel %vm554, %v498, 0.0
      %v591 = vadd.f32 %v589, %v590
      %v592 = vsel %vm554, %v501, 0.0
      %v593 = vadd.f32 %v591, %v592
      %v594 = vsel %vm554, %v506, 0.0
      %v595 = vadd.f32 %v593, %v594
      %v596 = vsel %vm554, %v509, 0.0
      %v597 = vadd.f32 %v595, %v596
      %v598 = vsel %vm554, %v514, 0.0
      %v599 = vadd.f32 %v597, %v598
      %v600 = vsel %vm554, %v517, 0.0
      %v601 = vadd.f32 %v599, %v600
      %v602 = vsel %vm554, %v522, 0.0
      %v603 = vadd.f32 %v601, %v602
      %v604 = vsel %vm554, %v525, 0.0
      %v605 = vadd.f32 %v603, %v604
      %v606 = vsel %vm554, %v530, 0.0
      %v607 = vadd.f32 %v605, %v606
      %v608 = vsel %vm554, %v533, 0.0
      %v609 = vadd.f32 %v607, %v608
      %v610 = vsel %vm554, %v538, 0.0
      %v611 = vadd.f32 %v609, %v610
      %v612 = vsel %vm554, %v541, 0.0
      %v613 = vadd.f32 %v611, %v612
      %v614 = vsel %vm554, %v546, 0.0
      %v615 = vadd.f32 %v613, %v614
      %v616 = vsel %vm554, %v549, 0.0
      %v617 = vadd.f32 %v615, %v616
      %v618 = vrot.slane %v617, 4
      %v619 = vadd.f32 %v617, %v618
      %v620 = vrot.slane %v619, 2
      %v621 = vadd.f32 %v619, %v620
      %v622 = vrot.slane %v621, 1
      %v623 = vadd.f32 %v621, %v622
      %v624 = vrcp.pop 256.0
      %v625 = vmul.f32 %v623, %v624
      %v626 = vsub.f32 %v426, %v625
      %v627 = vsub.f32 %v429, %v625
      %v628 = vsub.f32 %v434, %v625
      %v629 = vsub.f32 %v437, %v625
      %v630 = vsub.f32 %v442, %v625
      %v631 = vsub.f32 %v445, %v625
      %v632 = vsub.f32 %v450, %v625
      %v633 = vsub.f32 %v453, %v625
      %v634 = vsub.f32 %v458, %v625
      %v635 = vsub.f32 %v461, %v625
      %v636 = vsub.f32 %v466, %v625
      %v637 = vsub.f32 %v469, %v625
      %v638 = vsub.f32 %v474, %v625
      %v639 = vsub.f32 %v477, %v625
      %v640 = vsub.f32 %v482, %v625
      %v641 = vsub.f32 %v485, %v625
      %v642 = vsub.f32 %v490, %v625
      %v643 = vsub.f32 %v493, %v625
      %v644 = vsub.f32 %v498, %v625
      %v645 = vsub.f32 %v501, %v625
      %v646 = vsub.f32 %v506, %v625
      %v647 = vsub.f32 %v509, %v625
      %v648 = vsub.f32 %v514, %v625
      %v649 = vsub.f32 %v517, %v625
      %v650 = vsub.f32 %v522, %v625
      %v651 = vsub.f32 %v525, %v625
      %v652 = vsub.f32 %v530, %v625
      %v653 = vsub.f32 %v533, %v625
      %v654 = vsub.f32 %v538, %v625
      %v655 = vsub.f32 %v541, %v625
      %v656 = vsub.f32 %v546, %v625
      %v657 = vsub.f32 %v549, %v625
      %v658 = vmul.f32 %v626, %v626
      %v659 = vmul.f32 %v627, %v627
      %v660 = vmul.f32 %v628, %v628
      %v661 = vmul.f32 %v629, %v629
      %v662 = vmul.f32 %v630, %v630
      %v663 = vmul.f32 %v631, %v631
      %v664 = vmul.f32 %v632, %v632
      %v665 = vmul.f32 %v633, %v633
      %v666 = vmul.f32 %v634, %v634
      %v667 = vmul.f32 %v635, %v635
      %v668 = vmul.f32 %v636, %v636
      %v669 = vmul.f32 %v637, %v637
      %v670 = vmul.f32 %v638, %v638
      %v671 = vmul.f32 %v639, %v639
      %v672 = vmul.f32 %v640, %v640
      %v673 = vmul.f32 %v641, %v641
      %v674 = vmul.f32 %v642, %v642
      %v675 = vmul.f32 %v643, %v643
      %v676 = vmul.f32 %v644, %v644
      %v677 = vmul.f32 %v645, %v645
      %v678 = vmul.f32 %v646, %v646
      %v679 = vmul.f32 %v647, %v647
      %v680 = vmul.f32 %v648, %v648
      %v681 = vmul.f32 %v649, %v649
      %v682 = vmul.f32 %v650, %v650
      %v683 = vmul.f32 %v651, %v651
      %v684 = vmul.f32 %v652, %v652
      %v685 = vmul.f32 %v653, %v653
      %v686 = vmul.f32 %v654, %v654
      %v687 = vmul.f32 %v655, %v655
      %v688 = vmul.f32 %v656, %v656
      %v689 = vmul.f32 %v657, %v657
      %v690 = vsel %vm554, %v658, 0.0
      %v691 = vsel %vm554, %v659, 0.0
      %v692 = vadd.f32 %v690, %v691
      %v693 = vsel %vm554, %v660, 0.0
      %v694 = vadd.f32 %v692, %v693
      %v695 = vsel %vm554, %v661, 0.0
      %v696 = vadd.f32 %v694, %v695
      %v697 = vsel %vm554, %v662, 0.0
      %v698 = vadd.f32 %v696, %v697
      %v699 = vsel %vm554, %v663, 0.0
      %v700 = vadd.f32 %v698, %v699
      %v701 = vsel %vm554, %v664, 0.0
      %v702 = vadd.f32 %v700, %v701
      %v703 = vsel %vm554, %v665, 0.0
      %v704 = vadd.f32 %v702, %v703
      %v705 = vsel %vm554, %v666, 0.0
      %v706 = vadd.f32 %v704, %v705
      %v707 = vsel %vm554, %v667, 0.0
      %v708 = vadd.f32 %v706, %v707
      %v709 = vsel %vm554, %v668, 0.0
      %v710 = vadd.f32 %v708, %v709
      %v711 = vsel %vm554, %v669, 0.0
      %v712 = vadd.f32 %v710, %v711
      %v713 = vsel %vm554, %v670, 0.0
      %v714 = vadd.f32 %v712, %v713
      %v715 = vsel %vm554, %v671, 0.0
      %v716 = vadd.f32 %v714, %v715
      %v717 = vsel %vm554, %v672, 0.0
      %v718 = vadd.f32 %v716, %v717
      %v719 = vsel %vm554, %v673, 0.0
      %v720 = vadd.f32 %v718, %v719
      %v721 = vsel %vm554, %v674, 0.0
      %v722 = vadd.f32 %v720, %v721
      %v723 = vsel %vm554, %v675, 0.0
      %v724 = vadd.f32 %v722, %v723
      %v725 = vsel %vm554, %v676, 0.0
      %v726 = vadd.f32 %v724, %v725
      %v727 = vsel %vm554, %v677, 0.0
      %v728 = vadd.f32 %v726, %v727
      %v729 = vsel %vm554, %v678, 0.0
      %v730 = vadd.f32 %v728, %v729
      %v731 = vsel %vm554, %v679, 0.0
      %v732 = vadd.f32 %v730, %v731
      %v733 = vsel %vm554, %v680, 0.0
      %v734 = vadd.f32 %v732, %v733
      %v735 = vsel %vm554, %v681, 0.0
      %v736 = vadd.f32 %v734, %v735
      %v737 = vsel %vm554, %v682, 0.0
      %v738 = vadd.f32 %v736, %v737
      %v739 = vsel %vm554, %v683, 0.0
      %v740 = vadd.f32 %v738, %v739
      %v741 = vsel %vm554, %v684, 0.0
      %v742 = vadd.f32 %v740, %v741
      %v743 = vsel %vm554, %v685, 0.0
      %v744 = vadd.f32 %v742, %v743
      %v745 = vsel %vm554, %v686, 0.0
      %v746 = vadd.f32 %v744, %v745
      %v747 = vsel %vm554, %v687, 0.0
      %v748 = vadd.f32 %v746, %v747
      %v749 = vsel %vm554, %v688, 0.0
      %v750 = vadd.f32 %v748, %v749
      %v751 = vsel %vm554, %v689, 0.0
      %v752 = vadd.f32 %v750, %v751
      %v753 = vrot.slane %v752, 4
      %v754 = vadd.f32 %v752, %v753
      %v755 = vrot.slane %v754, 2
      %v756 = vadd.f32 %v754, %v755
      %v757 = vrot.slane %v756, 1
      %v758 = vadd.f32 %v756, %v757
      %v759 = vmul.f32 %v758, %v624
      %v760 = vadd.f32 %v759, 1e-05
      %v761 = vrsqrt.pop %v760
      %v762 = vmul.f32 %v552, %v761
      %v764 = vlaneseq
      %v765 = vshrl.u32 %v764, 7
      %v766 = vsub.s32 0, %v765
      %v767 = vrot.slane %v762, %v766
      %v769 = vmul.f32 %v626, %v767
      %v770 = vmul.f32 %v627, %v767
      %v771 = vmul.f32 %v628, %v767
      %v772 = vmul.f32 %v629, %v767
      %v773 = vmul.f32 %v630, %v767
      %v774 = vmul.f32 %v631, %v767
      %v775 = vmul.f32 %v632, %v767
      %v776 = vmul.f32 %v633, %v767
      %v777 = vmul.f32 %v634, %v767
      %v778 = vmul.f32 %v635, %v767
      %v779 = vmul.f32 %v636, %v767
      %v780 = vmul.f32 %v637, %v767
      %v781 = vmul.f32 %v638, %v767
      %v782 = vmul.f32 %v639, %v767
      %v783 = vmul.f32 %v640, %v767
      %v784 = vmul.f32 %v641, %v767
      %v785 = vmul.f32 %v642, %v767
      %v786 = vmul.f32 %v643, %v767
      %v787 = vmul.f32 %v644, %v767
      %v788 = vmul.f32 %v645, %v767
      %v789 = vmul.f32 %v646, %v767
      %v790 = vmul.f32 %v647, %v767
      %v791 = vmul.f32 %v648, %v767
      %v792 = vmul.f32 %v649, %v767
      %v793 = vmul.f32 %v650, %v767
      %v794 = vmul.f32 %v651, %v767
      %v795 = vmul.f32 %v652, %v767
      %v796 = vmul.f32 %v653, %v767
      %v797 = vmul.f32 %v654, %v767
      %v798 = vmul.f32 %v655, %v767
      %v799 = vmul.f32 %v656, %v767
      %v800 = vmul.f32 %v657, %v767
      %v802 = vlaneseq
      %v803 = vshrl.u32 %v802, 7
      %v804 = vsub.s32 0, %v803
      %v805 = vrot.slane %v553, %v804
      %v807 = vadd.f32 %v769, %v805
      %v808 = vadd.f32 %v770, %v805
      %v809 = vadd.f32 %v771, %v805
      %v810 = vadd.f32 %v772, %v805
      %v811 = vadd.f32 %v773, %v805
      %v812 = vadd.f32 %v774, %v805
      %v813 = vadd.f32 %v775, %v805
      %v814 = vadd.f32 %v776, %v805
      %v815 = vadd.f32 %v777, %v805
      %v816 = vadd.f32 %v778, %v805
      %v817 = vadd.f32 %v779, %v805
      %v818 = vadd.f32 %v780, %v805
      %v819 = vadd.f32 %v781, %v805
      %v820 = vadd.f32 %v782, %v805
      %v821 = vadd.f32 %v783, %v805
      %v822 = vadd.f32 %v784, %v805
      %v823 = vadd.f32 %v785, %v805
      %v824 = vadd.f32 %v786, %v805
      %v825 = vadd.f32 %v787, %v805
      %v826 = vadd.f32 %v788, %v805
      %v827 = vadd.f32 %v789, %v805
      %v828 = vadd.f32 %v790, %v805
      %v829 = vadd.f32 %v791, %v805
      %v830 = vadd.f32 %v792, %v805
      %v831 = vadd.f32 %v793, %v805
      %v832 = vadd.f32 %v794, %v805
      %v833 = vadd.f32 %v795, %v805
      %v834 = vadd.f32 %v796, %v805
      %v835 = vadd.f32 %v797, %v805
      %v836 = vadd.f32 %v798, %v805
      %v837 = vadd.f32 %v799, %v805
      %v838 = vadd.f32 %v800, %v805
      %vm839 = vcmp.ge.f32.partialorder %v807, 0.0
      %vm840 = vcmp.ge.f32.partialorder %v808, 0.0
      %vm841 = vcmp.ge.f32.partialorder %v809, 0.0
      %vm842 = vcmp.ge.f32.partialorder %v810, 0.0
      %vm843 = vcmp.ge.f32.partialorder %v811, 0.0
      %vm844 = vcmp.ge.f32.partialorder %v812, 0.0
      %vm845 = vcmp.ge.f32.partialorder %v813, 0.0
      %vm846 = vcmp.ge.f32.partialorder %v814, 0.0
      %vm847 = vcmp.ge.f32.partialorder %v815, 0.0
      %vm848 = vcmp.ge.f32.partialorder %v816, 0.0
      %vm849 = vcmp.ge.f32.partialorder %v817, 0.0
      %vm850 = vcmp.ge.f32.partialorder %v818, 0.0
      %vm851 = vcmp.ge.f32.partialorder %v819, 0.0
      %vm852 = vcmp.ge.f32.partialorder %v820, 0.0
      %vm853 = vcmp.ge.f32.partialorder %v821, 0.0
      %vm854 = vcmp.ge.f32.partialorder %v822, 0.0
      %vm855 = vcmp.ge.f32.partialorder %v823, 0.0
      %vm856 = vcmp.ge.f32.partialorder %v824, 0.0
      %vm857 = vcmp.ge.f32.partialorder %v825, 0.0
      %vm858 = vcmp.ge.f32.partialorder %v826, 0.0
      %vm859 = vcmp.ge.f32.partialorder %v827, 0.0
      %vm860 = vcmp.ge.f32.partialorder %v828, 0.0
      %vm861 = vcmp.ge.f32.partialorder %v829, 0.0
      %vm862 = vcmp.ge.f32.partialorder %v830, 0.0
      %vm863 = vcmp.ge.f32.partialorder %v831, 0.0
      %vm864 = vcmp.ge.f32.partialorder %v832, 0.0
      %vm865 = vcmp.ge.f32.partialorder %v833, 0.0
      %vm866 = vcmp.ge.f32.partialorder %v834, 0.0
      %vm867 = vcmp.ge.f32.partialorder %v835, 0.0
      %vm868 = vcmp.ge.f32.partialorder %v836, 0.0
      %vm869 = vcmp.ge.f32.partialorder %v837, 0.0
      %vm870 = vcmp.ge.f32.partialorder %v838, 0.0
      %v871 = vmul.f32 %v807, 0.2
      %v872 = vmul.f32 %v808, 0.2
      %v873 = vmul.f32 %v809, 0.2
      %v874 = vmul.f32 %v810, 0.2
      %v875 = vmul.f32 %v811, 0.2
      %v876 = vmul.f32 %v812, 0.2
      %v877 = vmul.f32 %v813, 0.2
      %v878 = vmul.f32 %v814, 0.2
      %v879 = vmul.f32 %v815, 0.2
      %v880 = vmul.f32 %v816, 0.2
      %v881 = vmul.f32 %v817, 0.2
      %v882 = vmul.f32 %v818, 0.2
      %v883 = vmul.f32 %v819, 0.2
      %v884 = vmul.f32 %v820, 0.2
      %v885 = vmul.f32 %v821, 0.2
      %v886 = vmul.f32 %v822, 0.2
      %v887 = vmul.f32 %v823, 0.2
      %v888 = vmul.f32 %v824, 0.2
      %v889 = vmul.f32 %v825, 0.2
      %v890 = vmul.f32 %v826, 0.2
      %v891 = vmul.f32 %v827, 0.2
      %v892 = vmul.f32 %v828, 0.2
      %v893 = vmul.f32 %v829, 0.2
      %v894 = vmul.f32 %v830, 0.2
      %v895 = vmul.f32 %v831, 0.2
      %v896 = vmul.f32 %v832, 0.2
      %v897 = vmul.f32 %v833, 0.2
      %v898 = vmul.f32 %v834, 0.2
      %v899 = vmul.f32 %v835, 0.2
      %v900 = vmul.f32 %v836, 0.2
      %v901 = vmul.f32 %v837, 0.2
      %v902 = vmul.f32 %v838, 0.2
      %v903 = vsel %vm839, %v807, %v871
      %v904 = vsel %vm840, %v808, %v872
      %v905 = vsel %vm841, %v809, %v873
      %v906 = vsel %vm842, %v810, %v874
      %v907 = vsel %vm843, %v811, %v875
      %v908 = vsel %vm844, %v812, %v876
      %v909 = vsel %vm845, %v813, %v877
      %v910 = vsel %vm846, %v814, %v878
      %v911 = vsel %vm847, %v815, %v879
      %v912 = vsel %vm848, %v816, %v880
      %v913 = vsel %vm849, %v817, %v881
      %v914 = vsel %vm850, %v818, %v882
      %v915 = vsel %vm851, %v819, %v883
      %v916 = vsel %vm852, %v820, %v884
      %v917 = vsel %vm853, %v821, %v885
      %v918 = vsel %vm854, %v822, %v886
      %v919 = vsel %vm855, %v823, %v887
      %v920 = vsel %vm856, %v824, %v888
      %v921 = vsel %vm857, %v825, %v889
      %v922 = vsel %vm858, %v826, %v890
      %v923 = vsel %vm859, %v827, %v891
      %v924 = vsel %vm860, %v828, %v892
      %v925 = vsel %vm861, %v829, %v893
      %v926 = vsel %vm862, %v830, %v894
      %v927 = vsel %vm863, %v831, %v895
      %v928 = vsel %vm864, %v832, %v896
      %v929 = vsel %vm865, %v833, %v897
      %v930 = vsel %vm866, %v834, %v898
      %v931 = vsel %vm867, %v835, %v899
      %v932 = vsel %vm868, %v836, %v900
      %v933 = vsel %vm869, %v837, %v901
      %v934 = vsel %vm870, %v838, %v902
      %v935 = vpack.c.bf16 %v904, %v903
      %v936 = vpack.c.bf16 %v906, %v905
      %v937 = vpack.c.bf16 %v908, %v907
      %v938 = vpack.c.bf16 %v910, %v909
      %v939 = vpack.c.bf16 %v912, %v911
      %v940 = vpack.c.bf16 %v914, %v913
      %v941 = vpack.c.bf16 %v916, %v915
      %v942 = vpack.c.bf16 %v918, %v917
      %v943 = vpack.c.bf16 %v920, %v919
      %v944 = vpack.c.bf16 %v922, %v921
      %v945 = vpack.c.bf16 %v924, %v923
      %v946 = vpack.c.bf16 %v926, %v925
      %v947 = vpack.c.bf16 %v928, %v927
      %v948 = vpack.c.bf16 %v930, %v929
      %v949 = vpack.c.bf16 %v932, %v931
      %v950 = vpack.c.bf16 %v934, %v933
      %v967 = vunpack.c.l.b16 %v935
      %v968 = vunpack.c.h.b16 %v935
      %v969 = vunpack.c.l.b16 %v936
      %v970 = vunpack.c.h.b16 %v936
      %v971 = vunpack.c.l.b16 %v937
      %v972 = vunpack.c.h.b16 %v937
      %v973 = vunpack.c.l.b16 %v938
      %v974 = vunpack.c.h.b16 %v938
      %v975 = vunpack.c.l.b16 %v939
      %v976 = vunpack.c.h.b16 %v939
      %v977 = vunpack.c.l.b16 %v940
      %v978 = vunpack.c.h.b16 %v940
      %v979 = vunpack.c.l.b16 %v941
      %v980 = vunpack.c.h.b16 %v941
      %v981 = vunpack.c.l.b16 %v942
      %v982 = vunpack.c.h.b16 %v942
      %v983 = vunpack.c.l.b16 %v943
      %v984 = vunpack.c.h.b16 %v943
      %v985 = vunpack.c.l.b16 %v944
      %v986 = vunpack.c.h.b16 %v944
      %v987 = vunpack.c.l.b16 %v945
      %v988 = vunpack.c.h.b16 %v945
      %v989 = vunpack.c.l.b16 %v946
      %v990 = vunpack.c.h.b16 %v946
      %v991 = vunpack.c.l.b16 %v947
      %v992 = vunpack.c.h.b16 %v947
      %v993 = vunpack.c.l.b16 %v948
      %v994 = vunpack.c.h.b16 %v948
      %v995 = vunpack.c.l.b16 %v949
      %v996 = vunpack.c.h.b16 %v949
      %v997 = vunpack.c.l.b16 %v950
      %v998 = vunpack.c.h.b16 %v950
      %v999 = vpack.c.b16 %v967, %v967
      %v1000 = vpack.c.b16 %v968, %v968
      %v1001 = vpack.c.b16 %v969, %v969
      %v1002 = vpack.c.b16 %v970, %v970
      %v1003 = vpack.c.b16 %v971, %v971
      %v1004 = vpack.c.b16 %v972, %v972
      %v1005 = vpack.c.b16 %v973, %v973
      %v1006 = vpack.c.b16 %v974, %v974
      %v1007 = vpack.c.b16 %v975, %v975
      %v1008 = vpack.c.b16 %v976, %v976
      %v1009 = vpack.c.b16 %v977, %v977
      %v1010 = vpack.c.b16 %v978, %v978
      %v1011 = vpack.c.b16 %v979, %v979
      %v1012 = vpack.c.b16 %v980, %v980
      %v1013 = vpack.c.b16 %v981, %v981
      %v1014 = vpack.c.b16 %v982, %v982
      %v1015 = vpack.c.b16 %v983, %v983
      %v1016 = vpack.c.b16 %v984, %v984
      %v1017 = vpack.c.b16 %v985, %v985
      %v1018 = vpack.c.b16 %v986, %v986
      %v1019 = vpack.c.b16 %v987, %v987
      %v1020 = vpack.c.b16 %v988, %v988
      %v1021 = vpack.c.b16 %v989, %v989
      %v1022 = vpack.c.b16 %v990, %v990
      %v1023 = vpack.c.b16 %v991, %v991
      %v1024 = vpack.c.b16 %v992, %v992
      %v1025 = vpack.c.b16 %v993, %v993
      %v1026 = vpack.c.b16 %v994, %v994
      %v1027 = vpack.c.b16 %v995, %v995
      %v1028 = vpack.c.b16 %v996, %v996
      %v1029 = vpack.c.b16 %v997, %v997
      %v1030 = vpack.c.b16 %v998, %v998
      %vm1063 = vcmask 125952
      %1064 = vst.msk [vmem:[%s197] sm:$0xf] %vm1063, %v999
      %1065 = vst.msk [vmem:[%s197 + $0x4] sm:$0xf] %vm1063, %v1000
      %1066 = vst.msk [vmem:[%s197 + $0x8] sm:$0xf] %vm1063, %v1001
      %1067 = vst.msk [vmem:[%s197 + $0xc] sm:$0xf] %vm1063, %v1002
      %1068 = vst.msk [vmem:[%s197 + $0x10] sm:$0xf] %vm1063, %v1003
      %1069 = vst.msk [vmem:[%s197 + $0x14] sm:$0xf] %vm1063, %v1004
      %1070 = vst.msk [vmem:[%s197 + $0x18] sm:$0xf] %vm1063, %v1005
      %1071 = vst.msk [vmem:[%s197 + $0x1c] sm:$0xf] %vm1063, %v1006
      %1072 = vst.msk [vmem:[%s197 + $0x20] sm:$0xf] %vm1063, %v1007
      %1073 = vst.msk [vmem:[%s197 + $0x24] sm:$0xf] %vm1063, %v1008
      %1074 = vst.msk [vmem:[%s197 + $0x28] sm:$0xf] %vm1063, %v1009
      %1075 = vst.msk [vmem:[%s197 + $0x2c] sm:$0xf] %vm1063, %v1010
      %1076 = vst.msk [vmem:[%s197 + $0x30] sm:$0xf] %vm1063, %v1011
      %1077 = vst.msk [vmem:[%s197 + $0x34] sm:$0xf] %vm1063, %v1012
      %1078 = vst.msk [vmem:[%s197 + $0x38] sm:$0xf] %vm1063, %v1013
      %1079 = vst.msk [vmem:[%s197 + $0x3c] sm:$0xf] %vm1063, %v1014
      %1080 = vst.msk [vmem:[%s197 + $0x40] sm:$0xf] %vm1063, %v1015
      %1081 = vst.msk [vmem:[%s197 + $0x44] sm:$0xf] %vm1063, %v1016
      %1082 = vst.msk [vmem:[%s197 + $0x48] sm:$0xf] %vm1063, %v1017
      %1083 = vst.msk [vmem:[%s197 + $0x4c] sm:$0xf] %vm1063, %v1018
      %1084 = vst.msk [vmem:[%s197 + $0x50] sm:$0xf] %vm1063, %v1019
      %1085 = vst.msk [vmem:[%s197 + $0x54] sm:$0xf] %vm1063, %v1020
      %1086 = vst.msk [vmem:[%s197 + $0x58] sm:$0xf] %vm1063, %v1021
      %1087 = vst.msk [vmem:[%s197 + $0x5c] sm:$0xf] %vm1063, %v1022
      %1088 = vst.msk [vmem:[%s197 + $0x60] sm:$0xf] %vm1063, %v1023
      %1089 = vst.msk [vmem:[%s197 + $0x64] sm:$0xf] %vm1063, %v1024
      %1090 = vst.msk [vmem:[%s197 + $0x68] sm:$0xf] %vm1063, %v1025
      %1091 = vst.msk [vmem:[%s197 + $0x6c] sm:$0xf] %vm1063, %v1026
      %1092 = vst.msk [vmem:[%s197 + $0x70] sm:$0xf] %vm1063, %v1027
      %1093 = vst.msk [vmem:[%s197 + $0x74] sm:$0xf] %vm1063, %v1028
      %1094 = vst.msk [vmem:[%s197 + $0x78] sm:$0xf] %vm1063, %v1029
      %1095 = vst.msk [vmem:[%s197 + $0x7c] sm:$0xf] %vm1063, %v1030
      %p1096 = scmp.lt.s32.totalorder %s15, 1
      %s1097 = scalar_select %p1096, %s15, 1
      %s1098 = smul.addr %s1097, 32
      %s1099 = smul.addr %s1098, 4
      %s1100 = scalar_lea.vmem %s4, %s1099
      // Predicated region
      $region37: #{discriminator_forward.4} parent=35 // pred_check
        %p1101 = pneg %p122
      $region38: #{discriminator_forward.4} parent=35 // pred_check_branch
        %1103 = sbr.rel (%p1101) target = $region40
      $region39: #{discriminator_forward.4} parent=35 // pred_region
        _
      $region40: #{discriminator_forward.4} parent=35 // pred_fallthru
        _
    $region36: #{discriminator_forward.4} parent=5 // pred_fallthru
      _
    %p1104 = scmp.le.s32.totalorder 2, %s10
    // Predicated region
    $region41: #{discriminator_forward.4} parent=5 // pred_check
      %p1105 = pneg %p1104
    $region42: #{discriminator_forward.4} parent=5 // pred_check_branch
      %1107 = sbr.rel (%p1105) target = $region44
    $region43: #{discriminator_forward.4} parent=5 // pred_region
      %s1108 = ssub.s32 %s10, 2
      // Predicated region
      $region45: #{discriminator_forward.4} parent=43 // pred_check
        %p1109 = pneg %p128
      $region46: #{discriminator_forward.4} parent=43 // pred_check_branch
        %1111 = sbr.rel (%p1109) target = $region48
      $region47: #{discriminator_forward.4} parent=43 // pred_region
        %p1112 = scmp.lt.s32.totalorder %s16, 1
        %s1113 = scalar_select %p1112, %s16, 1
        %s1114 = smul.addr %s1113, 32
        %s1115 = smul.addr %s1114, 4
        %s1116 = scalar_lea.vmem %s4, %s1115
      $region48: #{discriminator_forward.4} parent=43 // pred_fallthru
        _
    $region44: #{discriminator_forward.4} parent=5 // pred_fallthru
      _
  $region6: #{discriminator_forward.4} parent=0 // loop_footer
    %s14 = sadd.s32 1, %s10
  $region7: #{discriminator_forward.4} parent=0 // loop_footer_branch
    %9 = sbr.rel target = $region3
  $region8: #{discriminator_forward.4} parent=0 // loop_exit
    _

// kernel: discriminator_forward.5
$region0: #{discriminator_forward.5}
  #allocation0 [shape = 'u32[]', space=smem, size = 0x4, offset = 0x4, fixed_abs, tag = 'smem constant byte address 0x4 - core index']
  #allocation1 [shape = 'u32[144,128]{1,0:T(1,128)}', space=vmem, size = 0x12000, scoped, tag = 'internal scratch']
  #allocation2 [shape = 'bf16[1,256,32]{2,1,0:T(8,128)(2,1)}', space=vmem, size = 0x10000, scoped, tag = 'scratch operand']
  %s0 = inlined_call_operand.vmem [shape: bf16[2,64,256], index: 0, kind: input, shape index: {}]
  %s1 = inlined_call_operand.vmem [shape: bf16[256,32], index: 1, kind: input, shape index: {}]
  %s2 = inlined_call_operand.vmem [shape: f32[1,1,32], index: 2, kind: input, shape index: {}]
  %s3 = inlined_call_operand.vmem [shape: f32[1,1,32], index: 3, kind: input, shape index: {}]
  %s4 = inlined_call_operand.vmem [shape: bf16[256,64], index: 4, kind: input, shape index: {}]
  %s5 = inlined_call_operand.vmem [shape: bf16[16,32,64], index: 5, kind: input, shape index: {}]
  %s6 = inlined_call_operand.vmem [shape: f32[1,1,64], index: 6, kind: input, shape index: {}]
  %s7 = inlined_call_operand.vmem [shape: f32[1,1,64], index: 7, kind: input, shape index: {}]
  %s8 = inlined_call_operand.vmem [shape: f32[1,16,64], index: 8, kind: input, shape index: {}]
  %s9 = inlined_call_operand.vmem [shape: f32[2,1,1], index: 9, kind: output, shape index: {}]
  %s10 = sld [smem:[#allocation0]]
  $region69: #{discriminator_forward.5} parent=0
    _
  %s12 = ssub.s32 1, %s10
  %s13 = scalar_select 0, %s12, %s10
  loop: start=0, step=1, limit=4
  $region2: #{discriminator_forward.5} parent=0 // loop_pre_header
    _
  $region3: #{discriminator_forward.5} parent=0 // loop_header
    %s15 = sphi 0, %s19
    %p16 = scmp.ge.s32.totalorder %s15, 4
    %s25 = sphi 0, %s27
    %s28 = sphi 0, %s25
    %s29 = sphi 0, %s28
    %s45 = sphi 0, %s29
    %s49 = sphi 0, %s49
    %s51 = sphi 0, %s49
    %s52 = sphi 0, %s51
    %s66 = sphi 0, %s52
    %s70 = sphi 0, %s70
    %s72 = sphi 0, %s70
    %s73 = sphi 0, %s72
    %s87 = sphi 0, %s73
    %s91 = sphi 0, %s91
    %s93 = sphi 0, %s91
    %s94 = sphi 0, %s93
    %s108 = sphi 0, %s94
    %s112 = sphi 0, %s112
    %s114 = sphi 0, %s112
    %s115 = sphi 0, %s114
    %s129 = sphi 0, %s115
    %s133 = sphi 0, %s133
    %s135 = sphi 0, %s133
    %s136 = sphi 0, %s135
    %s150 = sphi 0, %s136
    %s154 = sphi 0, %s154
    %s156 = sphi 0, %s154
    %s157 = sphi 0, %s156
    %s171 = sphi 0, %s157
    %s175 = sphi 0, %s175
    %s177 = sphi 0, %s175
    %s178 = sphi 0, %s177
    %s192 = sphi 0, %s178
    %s196 = sphi 0, %s196
    %s198 = sphi 0, %s196
    %s199 = sphi 0, %s198
    %s213 = sphi 0, %s199
    %s219 = sphi 0, %s221
    %s222 = sphi 0, %s219
    %s223 = sphi 0, %s222
    %s239 = sphi 0, %s223
  $region4: #{discriminator_forward.5} parent=0 // loop_header_branch
    %18 = sbr.rel (%p16) target = $region8
  $region5: #{discriminator_forward.5} parent=0 // loop_body
    %s20 = ssub.s32 %s15, 1
    %s21 = ssub.s32 %s15, 2
    %s22 = sadd.s32 %s15, 1
    %s23 = ssub.s32 %s15, %s22
    %p24 = scmp.eq.s32.totalorder %s23, 0
    %s26 = sadd.s32 %s25, 1
    %s27 = scalar_select %p24, %s25, %s26
    %p30 = pneg %p24
    %p31 = scmp.eq.s32.totalorder %s15, 1
    %p32 = por %p30, %p31
    %p33 = scmp.ne.s32.totalorder %s25, %s28
    %p34 = scmp.eq.s32.totalorder %s15, 0
    %p35 = por %p33, %p34
    %p36 = scmp.ne.s32.totalorder %s25, %s28
    %p37 = scmp.eq.s32.totalorder %s20, 1
    %p38 = por %p36, %p37
    %p39 = scmp.ne.s32.totalorder %s28, %s29
    %p40 = scmp.eq.s32.totalorder %s20, 0
    %p41 = por %p39, %p40
    %p42 = scmp.ne.s32.totalorder %s28, %s29
    %p43 = scmp.eq.s32.totalorder %s21, 1
    %p44 = por %p42, %p43
    %p46 = scmp.ne.s32.totalorder %s29, %s45
    %p47 = scmp.eq.s32.totalorder %s21, 0
    %p48 = por %p46, %p47
    %s50 = sadd.s32 %s49, 1
    %p53 = scmp.eq.s32.totalorder %s15, 1
    %p54 = scmp.ne.s32.totalorder %s49, %s51
    %p55 = scmp.eq.s32.totalorder %s15, 0
    %p56 = por %p54, %p55
    %p57 = scmp.ne.s32.totalorder %s49, %s51
    %p58 = scmp.eq.s32.totalorder %s20, 1
    %p59 = por %p57, %p58
    %p60 = scmp.ne.s32.totalorder %s51, %s52
    %p61 = scmp.eq.s32.totalorder %s20, 0
    %p62 = por %p60, %p61
    %p63 = scmp.ne.s32.totalorder %s51, %s52
    %p64 = scmp.eq.s32.totalorder %s21, 1
    %p65 = por %p63, %p64
    %p67 = scmp.ne.s32.totalorder %s52, %s66
    %p68 = scmp.eq.s32.totalorder %s21, 0
    %p69 = por %p67, %p68
    %s71 = sadd.s32 %s70, 1
    %p74 = scmp.eq.s32.totalorder %s15, 1
    %p75 = scmp.ne.s32.totalorder %s70, %s72
    %p76 = scmp.eq.s32.totalorder %s15, 0
    %p77 = por %p75, %p76
    %p78 = scmp.ne.s32.totalorder %s70, %s72
    %p79 = scmp.eq.s32.totalorder %s20, 1
    %p80 = por %p78, %p79
    %p81 = scmp.ne.s32.totalorder %s72, %s73
    %p82 = scmp.eq.s32.totalorder %s20, 0
    %p83 = por %p81, %p82
    %p84 = scmp.ne.s32.totalorder %s72, %s73
    %p85 = scmp.eq.s32.totalorder %s21, 1
    %p86 = por %p84, %p85
    %p88 = scmp.ne.s32.totalorder %s73, %s87
    %p89 = scmp.eq.s32.totalorder %s21, 0
    %p90 = por %p88, %p89
    %s92 = sadd.s32 %s91, 1
    %p95 = scmp.eq.s32.totalorder %s15, 1
    %p96 = scmp.ne.s32.totalorder %s91, %s93
    %p97 = scmp.eq.s32.totalorder %s15, 0
    %p98 = por %p96, %p97
    %p99 = scmp.ne.s32.totalorder %s91, %s93
    %p100 = scmp.eq.s32.totalorder %s20, 1
    %p101 = por %p99, %p100
    %p102 = scmp.ne.s32.totalorder %s93, %s94
    %p103 = scmp.eq.s32.totalorder %s20, 0
    %p104 = por %p102, %p103
    %p105 = scmp.ne.s32.totalorder %s93, %s94
    %p106 = scmp.eq.s32.totalorder %s21, 1
    %p107 = por %p105, %p106
    %p109 = scmp.ne.s32.totalorder %s94, %s108
    %p110 = scmp.eq.s32.totalorder %s21, 0
    %p111 = por %p109, %p110
    %s113 = sadd.s32 %s112, 1
    %p116 = scmp.eq.s32.totalorder %s15, 1
    %p117 = scmp.ne.s32.totalorder %s112, %s114
    %p118 = scmp.eq.s32.totalorder %s15, 0
    %p119 = por %p117, %p118
    %p120 = scmp.ne.s32.totalorder %s112, %s114
    %p121 = scmp.eq.s32.totalorder %s20, 1
    %p122 = por %p120, %p121
    %p123 = scmp.ne.s32.totalorder %s114, %s115
    %p124 = scmp.eq.s32.totalorder %s20, 0
    %p125 = por %p123, %p124
    %p126 = scmp.ne.s32.totalorder %s114, %s115
    %p127 = scmp.eq.s32.totalorder %s21, 1
    %p128 = por %p126, %p127
    %p130 = scmp.ne.s32.totalorder %s115, %s129
    %p131 = scmp.eq.s32.totalorder %s21, 0
    %p132 = por %p130, %p131
    %s134 = sadd.s32 %s133, 1
    %p137 = scmp.eq.s32.totalorder %s15, 1
    %p138 = scmp.ne.s32.totalorder %s133, %s135
    %p139 = scmp.eq.s32.totalorder %s15, 0
    %p140 = por %p138, %p139
    %p141 = scmp.ne.s32.totalorder %s133, %s135
    %p142 = scmp.eq.s32.totalorder %s20, 1
    %p143 = por %p141, %p142
    %p144 = scmp.ne.s32.totalorder %s135, %s136
    %p145 = scmp.eq.s32.totalorder %s20, 0
    %p146 = por %p144, %p145
    %p147 = scmp.ne.s32.totalorder %s135, %s136
    %p148 = scmp.eq.s32.totalorder %s21, 1
    %p149 = por %p147, %p148
    %p151 = scmp.ne.s32.totalorder %s136, %s150
    %p152 = scmp.eq.s32.totalorder %s21, 0
    %p153 = por %p151, %p152
    %s155 = sadd.s32 %s154, 1
    %p158 = scmp.eq.s32.totalorder %s15, 1
    %p159 = scmp.ne.s32.totalorder %s154, %s156
    %p160 = scmp.eq.s32.totalorder %s15, 0
    %p161 = por %p159, %p160
    %p162 = scmp.ne.s32.totalorder %s154, %s156
    %p163 = scmp.eq.s32.totalorder %s20, 1
    %p164 = por %p162, %p163
    %p165 = scmp.ne.s32.totalorder %s156, %s157
    %p166 = scmp.eq.s32.totalorder %s20, 0
    %p167 = por %p165, %p166
    %p168 = scmp.ne.s32.totalorder %s156, %s157
    %p169 = scmp.eq.s32.totalorder %s21, 1
    %p170 = por %p168, %p169
    %p172 = scmp.ne.s32.totalorder %s157, %s171
    %p173 = scmp.eq.s32.totalorder %s21, 0
    %p174 = por %p172, %p173
    %s176 = sadd.s32 %s175, 1
    %p179 = scmp.eq.s32.totalorder %s15, 1
    %p180 = scmp.ne.s32.totalorder %s175, %s177
    %p181 = scmp.eq.s32.totalorder %s15, 0
    %p182 = por %p180, %p181
    %p183 = scmp.ne.s32.totalorder %s175, %s177
    %p184 = scmp.eq.s32.totalorder %s20, 1
    %p185 = por %p183, %p184
    %p186 = scmp.ne.s32.totalorder %s177, %s178
    %p187 = scmp.eq.s32.totalorder %s20, 0
    %p188 = por %p186, %p187
    %p189 = scmp.ne.s32.totalorder %s177, %s178
    %p190 = scmp.eq.s32.totalorder %s21, 1
    %p191 = por %p189, %p190
    %p193 = scmp.ne.s32.totalorder %s178, %s192
    %p194 = scmp.eq.s32.totalorder %s21, 0
    %p195 = por %p193, %p194
    %s197 = sadd.s32 %s196, 1
    %p200 = scmp.eq.s32.totalorder %s15, 1
    %p201 = scmp.ne.s32.totalorder %s196, %s198
    %p202 = scmp.eq.s32.totalorder %s15, 0
    %p203 = por %p201, %p202
    %p204 = scmp.ne.s32.totalorder %s196, %s198
    %p205 = scmp.eq.s32.totalorder %s20, 1
    %p206 = por %p204, %p205
    %p207 = scmp.ne.s32.totalorder %s198, %s199
    %p208 = scmp.eq.s32.totalorder %s20, 0
    %p209 = por %p207, %p208
    %p210 = scmp.ne.s32.totalorder %s198, %s199
    %p211 = scmp.eq.s32.totalorder %s21, 1
    %p212 = por %p210, %p211
    %p214 = scmp.ne.s32.totalorder %s199, %s213
    %p215 = scmp.eq.s32.totalorder %s21, 0
    %p216 = por %p214, %p215
    %s217 = ssub.s32 %s15, %s22
    %p218 = scmp.eq.s32.totalorder %s217, 0
    %s220 = sadd.s32 %s219, 1
    %s221 = scalar_select %p218, %s219, %s220
    %p224 = pneg %p218
    %p225 = scmp.eq.s32.totalorder %s15, 1
    %p226 = por %p224, %p225
    %p227 = scmp.ne.s32.totalorder %s219, %s222
    %p228 = scmp.eq.s32.totalorder %s15, 0
    %p229 = por %p227, %p228
    %p230 = scmp.ne.s32.totalorder %s219, %s222
    %p231 = scmp.eq.s32.totalorder %s20, 1
    %p232 = por %p230, %p231
    %p233 = scmp.ne.s32.totalorder %s222, %s223
    %p234 = scmp.eq.s32.totalorder %s20, 0
    %p235 = por %p233, %p234
    %p236 = scmp.ne.s32.totalorder %s222, %s223
    %p237 = scmp.eq.s32.totalorder %s21, 1
    %p238 = por %p236, %p237
    %p240 = scmp.ne.s32.totalorder %s223, %s239
    %p241 = scmp.eq.s32.totalorder %s21, 0
    %p242 = por %p240, %p241
    %p243 = scmp.le.s32.totalorder 1, %s15
    %p244 = scmp.lt.s32.totalorder %s15, 3
    %p245 = pnand %p243, %p244
    %p246 = pneg %p245
    // Predicated region
    $region9: #{discriminator_forward.5} parent=5 // pred_check
      _
    $region10: #{discriminator_forward.5} parent=5 // pred_check_branch
      %248 = sbr.rel (%p245) target = $region12
    $region11: #{discriminator_forward.5} parent=5 // pred_region
      %s249 = ssub.s32 %s15, 1
      // Predicated region
      $region13: #{discriminator_forward.5} parent=11 // pred_check
        %p250 = pneg %p62
      $region14: #{discriminator_forward.5} parent=11 // pred_check_branch
        %252 = sbr.rel (%p250) target = $region16
      $region15: #{discriminator_forward.5} parent=11 // pred_region
        _
      $region16: #{discriminator_forward.5} parent=11 // pred_fallthru
        _
      // Predicated region
      $region17: #{discriminator_forward.5} parent=11 // pred_check
        %p253 = pneg %p83
      $region18: #{discriminator_forward.5} parent=11 // pred_check_branch
        %255 = sbr.rel (%p253) target = $region20
      $region19: #{discriminator_forward.5} parent=11 // pred_region
        _
      $region20: #{discriminator_forward.5} parent=11 // pred_fallthru
        _
      // Predicated region
      $region21: #{discriminator_forward.5} parent=11 // pred_check
        %p256 = pneg %p104
      $region22: #{discriminator_forward.5} parent=11 // pred_check_branch
        %258 = sbr.rel (%p256) target = $region24
      $region23: #{discriminator_forward.5} parent=11 // pred_region
        _
      $region24: #{discriminator_forward.5} parent=11 // pred_fallthru
        _
      // Predicated region
      $region25: #{discriminator_forward.5} parent=11 // pred_check
        %p259 = pneg %p125
      $region26: #{discriminator_forward.5} parent=11 // pred_check_branch
        %261 = sbr.rel (%p259) target = $region28
      $region27: #{discriminator_forward.5} parent=11 // pred_region
        _
      $region28: #{discriminator_forward.5} parent=11 // pred_fallthru
        _
      // Predicated region
      $region29: #{discriminator_forward.5} parent=11 // pred_check
        %p262 = pneg %p146
      $region30: #{discriminator_forward.5} parent=11 // pred_check_branch
        %264 = sbr.rel (%p262) target = $region32
      $region31: #{discriminator_forward.5} parent=11 // pred_region
        _
      $region32: #{discriminator_forward.5} parent=11 // pred_fallthru
        _
      // Predicated region
      $region33: #{discriminator_forward.5} parent=11 // pred_check
        %p265 = pneg %p167
      $region34: #{discriminator_forward.5} parent=11 // pred_check_branch
        %267 = sbr.rel (%p265) target = $region36
      $region35: #{discriminator_forward.5} parent=11 // pred_region
        _
      $region36: #{discriminator_forward.5} parent=11 // pred_fallthru
        _
      // Predicated region
      $region37: #{discriminator_forward.5} parent=11 // pred_check
        %p268 = pneg %p188
      $region38: #{discriminator_forward.5} parent=11 // pred_check_branch
        %270 = sbr.rel (%p268) target = $region40
      $region39: #{discriminator_forward.5} parent=11 // pred_region
        _
      $region40: #{discriminator_forward.5} parent=11 // pred_fallthru
        _
      // Predicated region
      $region41: #{discriminator_forward.5} parent=11 // pred_check
        %p271 = pneg %p209
      $region42: #{discriminator_forward.5} parent=11 // pred_check_branch
        %273 = sbr.rel (%p271) target = $region44
      $region43: #{discriminator_forward.5} parent=11 // pred_region
        _
      $region44: #{discriminator_forward.5} parent=11 // pred_fallthru
        _
    $region12: #{discriminator_forward.5} parent=5 // pred_fallthru
      _
    %p274 = scmp.lt.s32.totalorder %s15, 2
    // Predicated region
    $region45: #{discriminator_forward.5} parent=5 // pred_check
      %p275 = pneg %p274
    $region46: #{discriminator_forward.5} parent=5 // pred_check_branch
      %277 = sbr.rel (%p275) target = $region48
    $region47: #{discriminator_forward.5} parent=5 // pred_region
      // Predicated region
      $region49: #{discriminator_forward.5} parent=47 // pred_check
        %p278 = pneg %p35
      $region50: #{discriminator_forward.5} parent=47 // pred_check_branch
        %280 = sbr.rel (%p278) target = $region52
      $region51: #{discriminator_forward.5} parent=47 // pred_region
        %p281 = scmp.lt.s32.totalorder %s15, 1
        %s282 = scalar_select %p281, %s15, 1
        %s283 = smul.addr %s282, 16
        %s284 = smul.addr %s283, 4
        %s285 = scalar_lea.vmem %s0, %s284
      $region52: #{discriminator_forward.5} parent=47 // pred_fallthru
        _
    $region48: #{discriminator_forward.5} parent=5 // pred_fallthru
      _
    %p286 = scmp.le.s32.totalorder 1, %s15
    %p287 = scmp.lt.s32.totalorder %s15, 3
    %p288 = pnand %p286, %p287
    %p289 = pneg %p288
    // Predicated region
    $region53: #{discriminator_forward.5} parent=5 // pred_check
      _
    $region54: #{discriminator_forward.5} parent=5 // pred_check_branch
      %291 = sbr.rel (%p288) target = $region56
    $region55: #{discriminator_forward.5} parent=5 // pred_region
      %s292 = ssub.s32 %s15, 1
      %p293 = scmp.lt.s32.totalorder %s20, 1
      %s294 = scalar_select %p293, %s20, 1
      %s295 = smul.addr %s294, 16
      %s296 = smul.addr %s295, 4
      %s297 = scalar_lea.vmem %s0, %s296
      %p298 = pneg %p41
      %p299 = pneg %p38
      %p300 = pneg %p62
      %p301 = pneg %p59
      %p302 = pneg %p83
      %p303 = pneg %p80
      %p304 = pneg %p104
      %p305 = pneg %p101
      %p306 = pneg %p125
      %p307 = pneg %p122
      %p308 = pneg %p146
      %p309 = pneg %p143
      %p310 = pneg %p167
      %p311 = pneg %p164
      %p312 = pneg %p188
      %p313 = pneg %p185
      %p314 = pneg %p209
      %p315 = pneg %p206
      %p316 = pneg %p235
      %p317 = pneg %p232
      %p318 = scmp.lt.s32.totalorder %s20, 1
      %s319 = scalar_select %p318, %s20, 1
      %s320 = scalar_lea.vmem %s9, %s319
      %p321 = scmp.lt.s32.totalorder %s20, 1
      %s322 = scalar_select %p321, %s20, 1
      %s323 = smul.addr %s322, 16
      %s324 = smul.addr %s323, 4
      %s325 = scalar_lea.vmem %s0, %s324
      %p326 = scmp.lt.s32.totalorder %s20, 1
      %s327 = scalar_select %p326, %s20, 1
      %s328 = scalar_lea.vmem %s9, %s327
      %v330 = vld [vmem:[%s325] sm:$0xff]
      %v331 = vld [vmem:[%s325 + $0x8] sm:$0xff]
      %v332 = vld [vmem:[%s325 + $0x10] sm:$0xff]
      %v333 = vld [vmem:[%s325 + $0x18] sm:$0xff]
      %v334 = vld [vmem:[%s325 + $0x20] sm:$0xff]
      %v335 = vld [vmem:[%s325 + $0x28] sm:$0xff]
      %v336 = vld [vmem:[%s325 + $0x30] sm:$0xff]
      %v337 = vld [vmem:[%s325 + $0x38] sm:$0xff]
      %v338 = vld [vmem:[%s1] sm:$0xf]
      %v339 = vld [vmem:[%s1 + $0x4] sm:$0xf]
      %v340 = vld [vmem:[%s1 + $0x8] sm:$0xf]
      %v341 = vld [vmem:[%s1 + $0xc] sm:$0xf]
      %v342 = vld [vmem:[%s1 + $0x10] sm:$0xf]
      %v343 = vld [vmem:[%s1 + $0x14] sm:$0xf]
      %v344 = vld [vmem:[%s1 + $0x18] sm:$0xf]
      %v345 = vld [vmem:[%s1 + $0x1c] sm:$0xf]
      %v346 = vld [vmem:[%s1 + $0x20] sm:$0xf]
      %v347 = vld [vmem:[%s1 + $0x24] sm:$0xf]
      %v348 = vld [vmem:[%s1 + $0x28] sm:$0xf]
      %v349 = vld [vmem:[%s1 + $0x2c] sm:$0xf]
      %v350 = vld [vmem:[%s1 + $0x30] sm:$0xf]
      %v351 = vld [vmem:[%s1 + $0x34] sm:$0xf]
      %v352 = vld [vmem:[%s1 + $0x38] sm:$0xf]
      %v353 = vld [vmem:[%s1 + $0x3c] sm:$0xf]
      %v354 = vld [vmem:[%s1 + $0x40] sm:$0xf]
      %v355 = vld [vmem:[%s1 + $0x44] sm:$0xf]
      %v356 = vld [vmem:[%s1 + $0x48] sm:$0xf]
      %v357 = vld [vmem:[%s1 + $0x4c] sm:$0xf]
      %v358 = vld [vmem:[%s1 + $0x50] sm:$0xf]
      %v359 = vld [vmem:[%s1 + $0x54] sm:$0xf]
      %v360 = vld [vmem:[%s1 + $0x58] sm:$0xf]
      %v361 = vld [vmem:[%s1 + $0x5c] sm:$0xf]
      %v362 = vld [vmem:[%s1 + $0x60] sm:$0xf]
      %v363 = vld [vmem:[%s1 + $0x64] sm:$0xf]
      %v364 = vld [vmem:[%s1 + $0x68] sm:$0xf]
      %v365 = vld [vmem:[%s1 + $0x6c] sm:$0xf]
      %v366 = vld [vmem:[%s1 + $0x70] sm:$0xf]
      %v367 = vld [vmem:[%s1 + $0x74] sm:$0xf]
      %v368 = vld [vmem:[%s1 + $0x78] sm:$0xf]
      %v369 = vld [vmem:[%s1 + $0x7c] sm:$0xf]
      %v378 = vunpack.c.l.b16 %v330
      %v379 = vunpack.c.h.b16 %v330
      %v380 = vunpack.c.l.b16 %v331
      %v381 = vunpack.c.h.b16 %v331
      %v382 = vunpack.c.l.b16 %v332
      %v383 = vunpack.c.h.b16 %v332
      %v384 = vunpack.c.l.b16 %v333
      %v385 = vunpack.c.h.b16 %v333
      %v386 = vunpack.c.l.b16 %v334
      %v387 = vunpack.c.h.b16 %v334
      %v388 = vunpack.c.l.b16 %v335
      %v389 = vunpack.c.h.b16 %v335
      %v390 = vunpack.c.l.b16 %v336
      %v391 = vunpack.c.h.b16 %v336
      %v392 = vunpack.c.l.b16 %v337
      %v393 = vunpack.c.h.b16 %v337
      %v394 = vpack.c.b16 %v380, %v378
      %v395 = vpack.c.b16 %v381, %v379
      %v396 = vpack.c.b16 %v384, %v382
      %v397 = vpack.c.b16 %v385, %v383
      %v398 = vpack.c.b16 %v388, %v386
      %v399 = vpack.c.b16 %v389, %v387
      %v400 = vpack.c.b16 %v392, %v390
      %v401 = vpack.c.b16 %v393, %v391
      %v442 = vunpack.c.l.b16 %v338
      %v443 = vunpack.c.l.b16 %v339
      %v444 = vunpack.c.l.b16 %v340
      %v445 = vunpack.c.l.b16 %v341
      %v446 = vunpack.c.l.b16 %v342
      %v447 = vunpack.c.l.b16 %v343
      %v448 = vunpack.c.l.b16 %v344
      %v449 = vunpack.c.l.b16 %v345
      %v450 = vunpack.c.l.b16 %v346
      %v451 = vunpack.c.l.b16 %v347
      %v452 = vunpack.c.l.b16 %v348
      %v453 = vunpack.c.l.b16 %v349
      %v454 = vunpack.c.l.b16 %v350
      %v455 = vunpack.c.l.b16 %v351
      %v456 = vunpack.c.l.b16 %v352
      %v457 = vunpack.c.l.b16 %v353
      %v458 = vunpack.c.l.b16 %v354
      %v459 = vunpack.c.l.b16 %v355
      %v460 = vunpack.c.l.b16 %v356
      %v461 = vunpack.c.l.b16 %v357
      %v462 = vunpack.c.l.b16 %v358
      %v463 = vunpack.c.l.b16 %v359
      %v464 = vunpack.c.l.b16 %v360
      %v465 = vunpack.c.l.b16 %v361
      %v466 = vunpack.c.l.b16 %v362
      %v467 = vunpack.c.l.b16 %v363
      %v468 = vunpack.c.l.b16 %v364
      %v469 = vunpack.c.l.b16 %v365
      %v470 = vunpack.c.l.b16 %v366
      %v471 = vunpack.c.l.b16 %v367
      %v472 = vunpack.c.l.b16 %v368
      %v473 = vunpack.c.l.b16 %v369
      %v474 = vpack.c.b16 %v443, %v442
      %v475 = vpack.c.b16 %v445, %v444
      %v476 = vpack.c.b16 %v447, %v446
      %v477 = vpack.c.b16 %v449, %v448
      %v478 = vpack.c.b16 %v451, %v450
      %v479 = vpack.c.b16 %v453, %v452
      %v480 = vpack.c.b16 %v455, %v454
      %v481 = vpack.c.b16 %v457, %v456
      %v482 = vpack.c.b16 %v459, %v458
      %v483 = vpack.c.b16 %v461, %v460
      %v484 = vpack.c.b16 %v463, %v462
      %v485 = vpack.c.b16 %v465, %v464
      %v486 = vpack.c.b16 %v467, %v466
      %v487 = vpack.c.b16 %v469, %v468
      %v488 = vpack.c.b16 %v471, %v470
      %v489 = vpack.c.b16 %v473, %v472
      %506 = vmatprep.subr.bf16.mxu0 0
      %507 = vmatpush1.bf16.msra.mxu0 %v481
      %508 = vmatprep.subr.bf16.mxu0 0
      %509 = vmatpush1.bf16.msra.mxu0 %v480
      %510 = vmatprep.subr.bf16.mxu0 0
      %511 = vmatpush1.bf16.msra.mxu0 %v479
      %512 = vmatprep.subr.bf16.mxu0 0
      %513 = vmatpush1.bf16.msra.mxu0 %v478
      %514 = vmatprep.subr.bf16.mxu0 0
      %515 = vmatpush1.bf16.msra.mxu0 %v477
      %516 = vmatprep.subr.bf16.mxu0 0
      %517 = vmatpush1.bf16.msra.mxu0 %v476
      %518 = vmatprep.subr.bf16.mxu0 0
      %519 = vmatpush1.bf16.msra.mxu0 %v475
      %520 = vmatprep.subr.bf16.mxu0 0
      %521 = vmatpush1.bf16.msra.mxu0 %v474
      %522 = vmatprep.subr.bf16.mxu0 0
      %523 = vmatpush2.bf16.msra.mxu0 %v489
      %524 = vmatprep.subr.bf16.mxu0 0
      %525 = vmatpush2.bf16.msra.mxu0 %v488
      %526 = vmatprep.subr.bf16.mxu0 0
      %527 = vmatpush2.bf16.msra.mxu0 %v487
      %528 = vmatprep.subr.bf16.mxu0 0
      %529 = vmatpush2.bf16.msra.mxu0 %v486
      %530 = vmatprep.subr.bf16.mxu0 0
      %531 = vmatpush2.bf16.msra.mxu0 %v485
      %532 = vmatprep.subr.bf16.mxu0 0
      %533 = vmatpush2.bf16.msra.mxu0 %v484
      %534 = vmatprep.subr.bf16.mxu0 0
      %535 = vmatpush2.bf16.msra.mxu0 %v483
      %536 = vmatprep.subr.bf16.mxu0 0
      %537 = vmatpush2.bf16.msra.mxu0 %v482
      %538 = vmatprep.mubr.bf16.mxu0 %v395
      %539 = vmatmul.mubr.bf16.gmra.mxu0 %v394
      %v540 = vpop.f32.mrf.mxu0
      %v541 = vadd.f32 0.0, %v540
      %v542 = vpop.f32.mrf.mxu0
      %v543 = vpop.f32.mrf.mxu0
      %v544 = vadd.f32 0.0, %v543
      %v545 = vpop.f32.mrf.mxu0
      %546 = vmatprep.mubr.bf16.mxu0 %v397
      %547 = vmatmul.mubr.bf16.gmra.mxu0 %v396
      %v548 = vpop.f32.mrf.mxu0
      %v549 = vadd.f32 0.0, %v548
      %v550 = vpop.f32.mrf.mxu0
      %v551 = vpop.f32.mrf.mxu0
      %v552 = vadd.f32 0.0, %v551
      %v553 = vpop.f32.mrf.mxu0
      %554 = vmatprep.mubr.bf16.mxu0 %v399
      %555 = vmatmul.mubr.bf16.gmra.mxu0 %v398
      %v556 = vpop.f32.mrf.mxu0
      %v557 = vadd.f32 0.0, %v556
      %v558 = vpop.f32.mrf.mxu0
      %v559 = vpop.f32.mrf.mxu0
      %v560 = vadd.f32 0.0, %v559
      %v561 = vpop.f32.mrf.mxu0
      %562 = vmatprep.mubr.bf16.mxu0 %v401
      %563 = vmatmul.mubr.bf16.gmra.mxu0 %v400
      %v564 = vpop.f32.mrf.mxu0
      %v565 = vadd.f32 0.0, %v564
      %v566 = vpop.f32.mrf.mxu0
      %v567 = vpop.f32.mrf.mxu0
      %v568 = vadd.f32 0.0, %v567
      %v569 = vpop.f32.mrf.mxu0
      %570 = vdwg.mxu0
      %v571 = vld [vmem:[%s2] sm:$0x1]
      %v572 = vld [vmem:[%s3] sm:$0x1]
      %vm573 = vcmask 261120
      %v574 = vsel %vm573, %v541, 0.0
      %v575 = vsel %vm573, %v544, 0.0
      %v576 = vadd.f32 %v574, %v575
      %v577 = vsel %vm573, %v549, 0.0
      %v578 = vadd.f32 %v576, %v577
      %v579 = vsel %vm573, %v552, 0.0
      %v580 = vadd.f32 %v578, %v579
      %v581 = vsel %vm573, %v557, 0.0
      %v582 = vadd.f32 %v580, %v581
      %v583 = vsel %vm573, %v560, 0.0
      %v584 = vadd.f32 %v582, %v583
      %v585 = vsel %vm573, %v565, 0.0
      %v586 = vadd.f32 %v584, %v585
      %v587 = vsel %vm573, %v568, 0.0
      %v588 = vadd.f32 %v586, %v587
      %v589 = vrot.slane %v588, 4
      %v590 = vadd.f32 %v588, %v589
      %v591 = vrot.slane %v590, 2
      %v592 = vadd.f32 %v590, %v591
      %v593 = vrot.slane %v592, 1
      %v594 = vadd.f32 %v592, %v593
      %v595 = vrcp.pop 64.0
      %v596 = vmul.f32 %v594, %v595
      %v597 = vsub.f32 %v541, %v596
      %v598 = vsub.f32 %v544, %v596
      %v599 = vsub.f32 %v549, %v596
      %v600 = vsub.f32 %v552, %v596
      %v601 = vsub.f32 %v557, %v596
      %v602 = vsub.f32 %v560, %v596
      %v603 = vsub.f32 %v565, %v596
      %v604 = vsub.f32 %v568, %v596
      %v605 = vmul.f32 %v597, %v597
      %v606 = vmul.f32 %v598, %v598
      %v607 = vmul.f32 %v599, %v599
      %v608 = vmul.f32 %v600, %v600
      %v609 = vmul.f32 %v601, %v601
      %v610 = vmul.f32 %v602, %v602
      %v611 = vmul.f32 %v603, %v603
      %v612 = vmul.f32 %v604, %v604
      %v613 = vsel %vm573, %v605, 0.0
      %v614 = vsel %vm573, %v606, 0.0
      %v615 = vadd.f32 %v613, %v614
      %v616 = vsel %vm573, %v607, 0.0
      %v617 = vadd.f32 %v615, %v616
      %v618 = vsel %vm573, %v608, 0.0
      %v619 = vadd.f32 %v617, %v618
      %v620 = vsel %vm573, %v609, 0.0
      %v621 = vadd.f32 %v619, %v620
      %v622 = vsel %vm573, %v610, 0.0
      %v623 = vadd.f32 %v621, %v622
      %v624 = vsel %vm573, %v611, 0.0
      %v625 = vadd.f32 %v623, %v624
      %v626 = vsel %vm573, %v612, 0.0
      %v627 = vadd.f32 %v625, %v626
      %v628 = vrot.slane %v627, 4
      %v629 = vadd.f32 %v627, %v628
      %v630 = vrot.slane %v629, 2
      %v631 = vadd.f32 %v629, %v630
      %v632 = vrot.slane %v631, 1
      %v633 = vadd.f32 %v631, %v632
      %v634 = vmul.f32 %v633, %v595
      %v635 = vadd.f32 %v634, 1e-05
      %v636 = vrsqrt.pop %v635
      %v637 = vmul.f32 %v571, %v636
      %v639 = vlaneseq
      %v640 = vshrl.u32 %v639, 7
      %v641 = vsub.s32 0, %v640
      %v642 = vrot.slane %v637, %v641
      %v644 = vmul.f32 %v597, %v642
      %v645 = vmul.f32 %v598, %v642
      %v646 = vmul.f32 %v599, %v642
      %v647 = vmul.f32 %v600, %v642
      %v648 = vmul.f32 %v601, %v642
      %v649 = vmul.f32 %v602, %v642
      %v650 = vmul.f32 %v603, %v642
      %v651 = vmul.f32 %v604, %v642
      %v653 = vlaneseq
      %v654 = vshrl.u32 %v653, 7
      %v655 = vsub.s32 0, %v654
      %v656 = vrot.slane %v572, %v655
      %v658 = vadd.f32 %v644, %v656
      %v659 = vadd.f32 %v645, %v656
      %v660 = vadd.f32 %v646, %v656
      %v661 = vadd.f32 %v647, %v656
      %v662 = vadd.f32 %v648, %v656
      %v663 = vadd.f32 %v649, %v656
      %v664 = vadd.f32 %v650, %v656
      %v665 = vadd.f32 %v651, %v656
      %vm666 = vcmp.ge.f32.partialorder %v658, 0.0
      %vm667 = vcmp.ge.f32.partialorder %v659, 0.0
      %vm668 = vcmp.ge.f32.partialorder %v660, 0.0
      %vm669 = vcmp.ge.f32.partialorder %v661, 0.0
      %vm670 = vcmp.ge.f32.partialorder %v662, 0.0
      %vm671 = vcmp.ge.f32.partialorder %v663, 0.0
      %vm672 = vcmp.ge.f32.partialorder %v664, 0.0
      %vm673 = vcmp.ge.f32.partialorder %v665, 0.0
      %v674 = vmul.f32 %v658, 0.2
      %v675 = vmul.f32 %v659, 0.2
      %v676 = vmul.f32 %v660, 0.2
      %v677 = vmul.f32 %v661, 0.2
      %v678 = vmul.f32 %v662, 0.2
      %v679 = vmul.f32 %v663, 0.2
      %v680 = vmul.f32 %v664, 0.2
      %v681 = vmul.f32 %v665, 0.2
      %v682 = vsel %vm666, %v658, %v674
      %v683 = vsel %vm667, %v659, %v675
      %v684 = vsel %vm668, %v660, %v676
      %v685 = vsel %vm669, %v661, %v677
      %v686 = vsel %vm670, %v662, %v678
      %v687 = vsel %vm671, %v663, %v679
      %v688 = vsel %vm672, %v664, %v680
      %v689 = vsel %vm673, %v665, %v681
      %v690 = vpack.c.bf16 %v683, %v682
      %v691 = vpack.c.bf16 %v685, %v684
      %v692 = vpack.c.bf16 %v687, %v686
      %v693 = vpack.c.bf16 %v689, %v688
      %v694 = vld [vmem:[%s4] sm:$0xf]
      %v695 = vld [vmem:[%s4 + $0x4] sm:$0xf]
      %v696 = vld [vmem:[%s4 + $0x8] sm:$0xf]
      %v697 = vld [vmem:[%s4 + $0xc] sm:$0xf]
      %v698 = vld [vmem:[%s4 + $0x10] sm:$0xf]
      %v699 = vld [vmem:[%s4 + $0x14] sm:$0xf]
      %v700 = vld [vmem:[%s4 + $0x18] sm:$0xf]
      %v701 = vld [vmem:[%s4 + $0x1c] sm:$0xf]
      %v702 = vld [vmem:[%s4 + $0x20] sm:$0xf]
      %v703 = vld [vmem:[%s4 + $0x24] sm:$0xf]
      %v704 = vld [vmem:[%s4 + $0x28] sm:$0xf]
      %v705 = vld [vmem:[%s4 + $0x2c] sm:$0xf]
      %v706 = vld [vmem:[%s4 + $0x30] sm:$0xf]
      %v707 = vld [vmem:[%s4 + $0x34] sm:$0xf]
      %v708 = vld [vmem:[%s4 + $0x38] sm:$0xf]
      %v709 = vld [vmem:[%s4 + $0x3c] sm:$0xf]
      %v710 = vld [vmem:[%s4 + $0x40] sm:$0xf]
      %v711 = vld [vmem:[%s4 + $0x44] sm:$0xf]
      %v712 = vld [vmem:[%s4 + $0x48] sm:$0xf]
      %v713 = vld [vmem:[%s4 + $0x4c] sm:$0xf]
      %v714 = vld [vmem:[%s4 + $0x50] sm:$0xf]
      %v715 = vld [vmem:[%s4 + $0x54] sm:$0xf]
      %v716 = vld [vmem:[%s4 + $0x58] sm:$0xf]
      %v717 = vld [vmem:[%s4 + $0x5c] sm:$0xf]
      %v718 = vld [vmem:[%s4 + $0x60] sm:$0xf]
      %v719 = vld [vmem:[%s4 + $0x64] sm:$0xf]
      %v720 = vld [vmem:[%s4 + $0x68] sm:$0xf]
      %v721 = vld [vmem:[%s4 + $0x6c] sm:$0xf]
      %v722 = vld [vmem:[%s4 + $0x70] sm:$0xf]
      %v723 = vld [vmem:[%s4 + $0x74] sm:$0xf]
      %v724 = vld [vmem:[%s4 + $0x78] sm:$0xf]
      %v725 = vld [vmem:[%s4 + $0x7c] sm:$0xf]
      %v758 = vunpack.c.l.b16 %v694
      %v759 = vunpack.c.l.b16 %v695
      %v760 = vunpack.c.l.b16 %v696
      %v761 = vunpack.c.l.b16 %v697
      %v762 = vunpack.c.l.b16 %v698
      %v763 = vunpack.c.l.b16 %v699
      %v764 = vunpack.c.l.b16 %v700
      %v765 = vunpack.c.l.b16 %v701
      %v766 = vunpack.c.l.b16 %v702
      %v767 = vunpack.c.l.b16 %v703
      %v768 = vunpack.c.l.b16 %v704
      %v769 = vunpack.c.l.b16 %v705
      %v770 = vunpack.c.l.b16 %v706
      %v771 = vunpack.c.l.b16 %v707
      %v772 = vunpack.c.l.b16 %v708
      %v773 = vunpack.c.l.b16 %v709
      %v774 = vunpack.c.l.b16 %v710
      %v775 = vunpack.c.l.b16 %v711
      %v776 = vunpack.c.l.b16 %v712
      %v777 = vunpack.c.l.b16 %v713
      %v778 = vunpack.c.l.b16 %v714
      %v779 = vunpack.c.l.b16 %v715
      %v780 = vunpack.c.l.b16 %v716
      %v781 = vunpack.c.l.b16 %v717
      %v782 = vunpack.c.l.b16 %v718
      %v783 = vunpack.c.l.b16 %v719
      %v784 = vunpack.c.l.b16 %v720
      %v785 = vunpack.c.l.b16 %v721
      %v786 = vunpack.c.l.b16 %v722
      %v787 = vunpack.c.l.b16 %v723
      %v788 = vunpack.c.l.b16 %v724
      %v789 = vunpack.c.l.b16 %v725
      %v790 = vpack.c.b16 %v759, %v758
      %v791 = vpack.c.b16 %v761, %v760
      %v792 = vpack.c.b16 %v763, %v762
      %v793 = vpack.c.b16 %v765, %v764
      %v794 = vpack.c.b16 %v767, %v766
      %v795 = vpack.c.b16 %v769, %v768
      %v796 = vpack.c.b16 %v771, %v770
      %v797 = vpack.c.b16 %v773, %v772
      %v798 = vpack.c.b16 %v775, %v774
      %v799 = vpack.c.b16 %v777, %v776
      %v800 = vpack.c.b16 %v779, %v778
      %v801 = vpack.c.b16 %v781, %v780
      %v802 = vpack.c.b16 %v783, %v782
      %v803 = vpack.c.b16 %v785, %v784
      %v804 = vpack.c.b16 %v787, %v786
      %v805 = vpack.c.b16 %v789, %v788
      %vm806 = vcmask 523264
      %v808 = vsel %vm806, %v790, 0
      %v811 = vsel %vm806, %v791, 0
      %v814 = vsel %vm806, %v792, 0
      %v817 = vsel %vm806, %v793, 0
      %v820 = vsel %vm806, %v794, 0
      %v823 = vsel %vm806, %v795, 0
      %v826 = vsel %vm806, %v796, 0
      %v829 = vsel %vm806, %v797, 0
      %v832 = vsel %vm806, %v798, 0
      %v835 = vsel %vm806, %v799, 0
      %v838 = vsel %vm806, %v800, 0
      %v841 = vsel %vm806, %v801, 0
      %v844 = vsel %vm806, %v802, 0
      %v847 = vsel %vm806, %v803, 0
      %v850 = vsel %vm806, %v804, 0
      %v853 = vsel %vm806, %v805, 0
      %855 = vmatprep.subr.bf16.mxu0 0
      %856 = vmatpush1.bf16.msra.mxu0 0
      %857 = vmatprep.subr.bf16.mxu0 0
      %858 = vmatpush1.bf16.msra.mxu0 0
      %859 = vmatprep.subr.bf16.mxu0 0
      %860 = vmatpush1.bf16.msra.mxu0 0
      %861 = vmatprep.subr.bf16.mxu0 0
      %862 = vmatpush1.bf16.msra.mxu0 0
      %863 = vmatprep.subr.bf16.mxu0 0
      %864 = vmatpush1.bf16.msra.mxu0 %v693
      %865 = vmatprep.subr.bf16.mxu0 0
      %866 = vmatpush1.bf16.msra.mxu0 %v692
      %867 = vmatprep.subr.bf16.mxu0 0
      %868 = vmatpush1.bf16.msra.mxu0 %v691
      %869 = vmatprep.subr.bf16.mxu0 0
      %870 = vmatpush1.bf16.msra.mxu0 %v690
      %871 = vmatprep.subr.bf16.mxu0 0
      %872 = vmatpush2.bf16.msra.mxu0 0
      %873 = vmatprep.subr.bf16.mxu0 0
      %874 = vmatpush2.bf16.msra.mxu0 0
      %875 = vmatprep.subr.bf16.mxu0 0
      %876 = vmatpush2.bf16.msra.mxu0 0
      %877 = vmatprep.subr.bf16.mxu0 0
      %878 = vmatpush2.bf16.msra.mxu0 0
      %879 = vmatprep.subr.bf16.mxu0 0
      %880 = vmatpush2.bf16.msra.mxu0 0
      %881 = vmatprep.subr.bf16.mxu0 0
      %882 = vmatpush2.bf16.msra.mxu0 0
      %883 = vmatprep.subr.bf16.mxu0 0
      %884 = vmatpush2.bf16.msra.mxu0 0
      %885 = vmatprep.subr.bf16.mxu0 0
      %886 = vmatpush2.bf16.msra.mxu0 0
      %887 = vmatprep.mubr.bf16.mxu0 0
      %888 = vmatmul.mubr.bf16.gmra.mxu0 %v808
      %v889 = vpop.f32.mrf.mxu0
      %v890 = vadd.f32 0.0, %v889
      %v891 = vpop.f32.mrf.mxu0
      %v892 = vpop.f32.mrf.mxu0
      %v893 = vadd.f32 0.0, %v892
      %v894 = vpop.f32.mrf.mxu0
      %895 = vmatprep.mubr.bf16.mxu0 0
      %896 = vmatmul.mubr.bf16.gmra.mxu0 %v811
      %v897 = vpop.f32.mrf.mxu0
      %v898 = vadd.f32 0.0, %v897
      %v899 = vpop.f32.mrf.mxu0
      %v900 = vpop.f32.mrf.mxu0
      %v901 = vadd.f32 0.0, %v900
      %v902 = vpop.f32.mrf.mxu0
      %903 = vmatprep.mubr.bf16.mxu0 0
      %904 = vmatmul.mubr.bf16.gmra.mxu0 %v814
      %v905 = vpop.f32.mrf.mxu0
      %v906 = vadd.f32 0.0, %v905
      %v907 = vpop.f32.mrf.mxu0
      %v908 = vpop.f32.mrf.mxu0
      %v909 = vadd.f32 0.0, %v908
      %v910 = vpop.f32.mrf.mxu0
      %911 = vmatprep.mubr.bf16.mxu0 0
      %912 = vmatmul.mubr.bf16.gmra.mxu0 %v817
      %v913 = vpop.f32.mrf.mxu0
      %v914 = vadd.f32 0.0, %v913
      %v915 = vpop.f32.mrf.mxu0
      %v916 = vpop.f32.mrf.mxu0
      %v917 = vadd.f32 0.0, %v916
      %v918 = vpop.f32.mrf.mxu0
      %919 = vmatprep.mubr.bf16.mxu0 0
      %920 = vmatmul.mubr.bf16.gmra.mxu0 %v820
      %v921 = vpop.f32.mrf.mxu0
      %v922 = vadd.f32 0.0, %v921
      %v923 = vpop.f32.mrf.mxu0
      %v924 = vpop.f32.mrf.mxu0
      %v925 = vadd.f32 0.0, %v924
      %v926 = vpop.f32.mrf.mxu0
      %927 = vmatprep.mubr.bf16.mxu0 0
      %928 = vmatmul.mubr.bf16.gmra.mxu0 %v823
      %v929 = vpop.f32.mrf.mxu0
      %v930 = vadd.f32 0.0, %v929
      %v931 = vpop.f32.mrf.mxu0
      %v932 = vpop.f32.mrf.mxu0
      %v933 = vadd.f32 0.0, %v932
      %v934 = vpop.f32.mrf.mxu0
      %935 = vmatprep.mubr.bf16.mxu0 0
      %936 = vmatmul.mubr.bf16.gmra.mxu0 %v826
      %v937 = vpop.f32.mrf.mxu0
      %v938 = vadd.f32 0.0, %v937
      %v939 = vpop.f32.mrf.mxu0
      %v940 = vpop.f32.mrf.mxu0
      %v941 = vadd.f32 0.0, %v940
      %v942 = vpop.f32.mrf.mxu0
      %943 = vmatprep.mubr.bf16.mxu0 0
      %944 = vmatmul.mubr.bf16.gmra.mxu0 %v829
      %v945 = vpop.f32.mrf.mxu0
      %v946 = vadd.f32 0.0, %v945
      %v947 = vpop.f32.mrf.mxu0
      %v948 = vpop.f32.mrf.mxu0
      %v949 = vadd.f32 0.0, %v948
      %v950 = vpop.f32.mrf.mxu0
      %951 = vmatprep.mubr.bf16.mxu0 0
      %952 = vmatmul.mubr.bf16.gmra.mxu0 %v832
      %v953 = vpop.f32.mrf.mxu0
      %v954 = vadd.f32 0.0, %v953
      %v955 = vpop.f32.mrf.mxu0
      %v956 = vpop.f32.mrf.mxu0
      %v957 = vadd.f32 0.0, %v956
      %v958 = vpop.f32.mrf.mxu0
      %959 = vmatprep.mubr.bf16.mxu0 0
      %960 = vmatmul.mubr.bf16.gmra.mxu0 %v835
      %v961 = vpop.f32.mrf.mxu0
      %v962 = vadd.f32 0.0, %v961
      %v963 = vpop.f32.mrf.mxu0
      %v964 = vpop.f32.mrf.mxu0
      %v965 = vadd.f32 0.0, %v964
      %v966 = vpop.f32.mrf.mxu0
      %967 = vmatprep.mubr.bf16.mxu0 0
      %968 = vmatmul.mubr.bf16.gmra.mxu0 %v838
      %v969 = vpop.f32.mrf.mxu0
      %v970 = vadd.f32 0.0, %v969
      %v971 = vpop.f32.mrf.mxu0
      %v972 = vpop.f32.mrf.mxu0
      %v973 = vadd.f32 0.0, %v972
      %v974 = vpop.f32.mrf.mxu0
      %975 = vmatprep.mubr.bf16.mxu0 0
      %976 = vmatmul.mubr.bf16.gmra.mxu0 %v841
      %v977 = vpop.f32.mrf.mxu0
      %v978 = vadd.f32 0.0, %v977
      %v979 = vpop.f32.mrf.mxu0
      %v980 = vpop.f32.mrf.mxu0
      %v981 = vadd.f32 0.0, %v980
      %v982 = vpop.f32.mrf.mxu0
      %983 = vmatprep.mubr.bf16.mxu0 0
      %984 = vmatmul.mubr.bf16.gmra.mxu0 %v844
      %v985 = vpop.f32.mrf.mxu0
      %v986 = vadd.f32 0.0, %v985
      %v987 = vpop.f32.mrf.mxu0
      %v988 = vpop.f32.mrf.mxu0
      %v989 = vadd.f32 0.0, %v988
      %v990 = vpop.f32.mrf.mxu0
      %991 = vmatprep.mubr.bf16.mxu0 0
      %992 = vmatmul.mubr.bf16.gmra.mxu0 %v847
      %v993 = vpop.f32.mrf.mxu0
      %v994 = vadd.f32 0.0, %v993
      %v995 = vpop.f32.mrf.mxu0
      %v996 = vpop.f32.mrf.mxu0
      %v997 = vadd.f32 0.0, %v996
      %v998 = vpop.f32.mrf.mxu0
      %999 = vmatprep.mubr.bf16.mxu0 0
      %1000 = vmatmul.mubr.bf16.gmra.mxu0 %v850
      %v1001 = vpop.f32.mrf.mxu0
      %v1002 = vadd.f32 0.0, %v1001
      %v1003 = vpop.f32.mrf.mxu0
      %v1004 = vpop.f32.mrf.mxu0
      %v1005 = vadd.f32 0.0, %v1004
      %v1006 = vpop.f32.mrf.mxu0
      %1007 = vmatprep.mubr.bf16.mxu0 0
      %1008 = vmatmul.mubr.bf16.gmra.mxu0 %v853
      %v1009 = vpop.f32.mrf.mxu0
      %v1010 = vadd.f32 0.0, %v1009
      %v1011 = vpop.f32.mrf.mxu0
      %v1012 = vpop.f32.mrf.mxu0
      %v1013 = vadd.f32 0.0, %v1012
      %v1014 = vpop.f32.mrf.mxu0
      %1015 = vdwg.mxu0
      %v1016 = vpack.c.bf16 %v893, %v890
      %v1017 = vpack.c.bf16 %v901, %v898
      %v1018 = vpack.c.bf16 %v909, %v906
      %v1019 = vpack.c.bf16 %v917, %v914
      %v1020 = vpack.c.bf16 %v925, %v922
      %v1021 = vpack.c.bf16 %v933, %v930
      %v1022 = vpack.c.bf16 %v941, %v938
      %v1023 = vpack.c.bf16 %v949, %v946
      %v1024 = vpack.c.bf16 %v957, %v954
      %v1025 = vpack.c.bf16 %v965, %v962
      %v1026 = vpack.c.bf16 %v973, %v970
      %v1027 = vpack.c.bf16 %v981, %v978
      %v1028 = vpack.c.bf16 %v989, %v986
      %v1029 = vpack.c.bf16 %v997, %v994
      %v1030 = vpack.c.bf16 %v1005, %v1002
      %v1031 = vpack.c.bf16 %v1013, %v1010
      %v1048 = vunpack.c.l.b16 %v1016
      %v1049 = vunpack.c.h.b16 %v1016
      %v1050 = vunpack.c.l.b16 %v1017
      %v1051 = vunpack.c.h.b16 %v1017
      %v1052 = vunpack.c.l.b16 %v1018
      %v1053 = vunpack.c.h.b16 %v1018
      %v1054 = vunpack.c.l.b16 %v1019
      %v1055 = vunpack.c.h.b16 %v1019
      %v1056 = vunpack.c.l.b16 %v1020
      %v1057 = vunpack.c.h.b16 %v1020
      %v1058 = vunpack.c.l.b16 %v1021
      %v1059 = vunpack.c.h.b16 %v1021
      %v1060 = vunpack.c.l.b16 %v1022
      %v1061 = vunpack.c.h.b16 %v1022
      %v1062 = vunpack.c.l.b16 %v1023
      %v1063 = vunpack.c.h.b16 %v1023
      %v1064 = vunpack.c.l.b16 %v1024
      %v1065 = vunpack.c.h.b16 %v1024
      %v1066 = vunpack.c.l.b16 %v1025
      %v1067 = vunpack.c.h.b16 %v1025
      %v1068 = vunpack.c.l.b16 %v1026
      %v1069 = vunpack.c.h.b16 %v1026
      %v1070 = vunpack.c.l.b16 %v1027
      %v1071 = vunpack.c.h.b16 %v1027
      %v1072 = vunpack.c.l.b16 %v1028
      %v1073 = vunpack.c.h.b16 %v1028
      %v1074 = vunpack.c.l.b16 %v1029
      %v1075 = vunpack.c.h.b16 %v1029
      %v1076 = vunpack.c.l.b16 %v1030
      %v1077 = vunpack.c.h.b16 %v1030
      %v1078 = vunpack.c.l.b16 %v1031
      %v1079 = vunpack.c.h.b16 %v1031
      %v1080 = vpack.c.b16 %v1048, %v1048
      %v1081 = vpack.c.b16 %v1049, %v1049
      %v1082 = vpack.c.b16 %v1050, %v1050
      %v1083 = vpack.c.b16 %v1051, %v1051
      %v1084 = vpack.c.b16 %v1052, %v1052
      %v1085 = vpack.c.b16 %v1053, %v1053
      %v1086 = vpack.c.b16 %v1054, %v1054
      %v1087 = vpack.c.b16 %v1055, %v1055
      %v1088 = vpack.c.b16 %v1056, %v1056
      %v1089 = vpack.c.b16 %v1057, %v1057
      %v1090 = vpack.c.b16 %v1058, %v1058
      %v1091 = vpack.c.b16 %v1059, %v1059
      %v1092 = vpack.c.b16 %v1060, %v1060
      %v1093 = vpack.c.b16 %v1061, %v1061
      %v1094 = vpack.c.b16 %v1062, %v1062
      %v1095 = vpack.c.b16 %v1063, %v1063
      %v1096 = vpack.c.b16 %v1064, %v1064
      %v1097 = vpack.c.b16 %v1065, %v1065
      %v1098 = vpack.c.b16 %v1066, %v1066
      %v1099 = vpack.c.b16 %v1067, %v1067
      %v1100 = vpack.c.b16 %v1068, %v1068
      %v1101 = vpack.c.b16 %v1069, %v1069
      %v1102 = vpack.c.b16 %v1070, %v1070
      %v1103 = vpack.c.b16 %v1071, %v1071
      %v1104 = vpack.c.b16 %v1072, %v1072
      %v1105 = vpack.c.b16 %v1073, %v1073
      %v1106 = vpack.c.b16 %v1074, %v1074
      %v1107 = vpack.c.b16 %v1075, %v1075
      %v1108 = vpack.c.b16 %v1076, %v1076
      %v1109 = vpack.c.b16 %v1077, %v1077
      %v1110 = vpack.c.b16 %v1078, %v1078
      %v1111 = vpack.c.b16 %v1079, %v1079
      %vm1144 = vcmask 257024
      %1145 = vst.msk [vmem:[#allocation2] sm:$0xf] %vm1144, %v1080
      %1146 = vst.msk [vmem:[#allocation2 + $0x4] sm:$0xf] %vm1144, %v1081
      %1147 = vst.msk [vmem:[#allocation2 + $0x8] sm:$0xf] %vm1144, %v1082
      %1148 = vst.msk [vmem:[#allocation2 + $0xc] sm:$0xf] %vm1144, %v1083
      %1149 = vst.msk [vmem:[#allocation2 + $0x10] sm:$0xf] %vm1144, %v1084
      %1150 = vst.msk [vmem:[#allocation2 + $0x14] sm:$0xf] %vm1144, %v1085
      %1151 = vst.msk [vmem:[#allocation2 + $0x18] sm:$0xf] %vm1144, %v1086
      %1152 = vst.msk [vmem:[#allocation2 + $0x1c] sm:$0xf] %vm1144, %v1087
      %1153 = vst.msk [vmem:[#allocation2 + $0x20] sm:$0xf] %vm1144, %v1088
      %1154 = vst.msk [vmem:[#allocation2 + $0x24] sm:$0xf] %vm1144, %v1089
      %1155 = vst.msk [vmem:[#allocation2 + $0x28] sm:$0xf] %vm1144, %v1090
      %1156 = vst.msk [vmem:[#allocation2 + $0x2c] sm:$0xf] %vm1144, %v1091
      %1157 = vst.msk [vmem:[#allocation2 + $0x30] sm:$0xf] %vm1144, %v1092
      %1158 = vst.msk [vmem:[#allocation2 + $0x34] sm:$0xf] %vm1144, %v1093
      %1159 = vst.msk [vmem:[#allocation2 + $0x38] sm:$0xf] %vm1144, %v1094
      %1160 = vst.msk [vmem:[#allocation2 + $0x3c] sm:$0xf] %vm1144, %v1095
      %1161 = vst.msk [vmem:[#allocation2 + $0x40] sm:$0xf] %vm1144, %v1096
      %1162 = vst.msk [vmem:[#allocation2 + $0x44] sm:$0xf] %vm1144, %v1097
      %1163 = vst.msk [vmem:[#allocation2 + $0x48] sm:$0xf] %vm1144, %v1098
      %1164 = vst.msk [vmem:[#allocation2 + $0x4c] sm:$0xf] %vm1144, %v1099
      %1165 = vst.msk [vmem:[#allocation2 + $0x50] sm:$0xf] %vm1144, %v1100
      %1166 = vst.msk [vmem:[#allocation2 + $0x54] sm:$0xf] %vm1144, %v1101
      %1167 = vst.msk [vmem:[#allocation2 + $0x58] sm:$0xf] %vm1144, %v1102
      %1168 = vst.msk [vmem:[#allocation2 + $0x5c] sm:$0xf] %vm1144, %v1103
      %1169 = vst.msk [vmem:[#allocation2 + $0x60] sm:$0xf] %vm1144, %v1104
      %1170 = vst.msk [vmem:[#allocation2 + $0x64] sm:$0xf] %vm1144, %v1105
      %1171 = vst.msk [vmem:[#allocation2 + $0x68] sm:$0xf] %vm1144, %v1106
      %1172 = vst.msk [vmem:[#allocation2 + $0x6c] sm:$0xf] %vm1144, %v1107
      %1173 = vst.msk [vmem:[#allocation2 + $0x70] sm:$0xf] %vm1144, %v1108
      %1174 = vst.msk [vmem:[#allocation2 + $0x74] sm:$0xf] %vm1144, %v1109
      %1175 = vst.msk [vmem:[#allocation2 + $0x78] sm:$0xf] %vm1144, %v1110
      %1176 = vst.msk [vmem:[#allocation2 + $0x7c] sm:$0xf] %vm1144, %v1111
      %v1177 = vld [vmem:[#allocation2] sm:$0xf]
      %v1178 = vld [vmem:[#allocation2 + $0x4] sm:$0xf]
      %v1179 = vld [vmem:[%s5] sm:$0xf]
      %v1180 = vld [vmem:[%s5 + $0x4] sm:$0xf]
      %v1181 = vld [vmem:[%s5 + $0x8] sm:$0xf]
      %v1182 = vld [vmem:[%s5 + $0xc] sm:$0xf]
      %v1183 = vld [vmem:[#allocation2 + $0x8] sm:$0xf]
      %v1184 = vld [vmem:[#allocation2 + $0xc] sm:$0xf]
      %s1185 = scalar_lea.vmem %s5, 16
      %v1186 = vld [vmem:[%s1185] sm:$0xf]
      %v1187 = vld [vmem:[%s1185 + $0x4] sm:$0xf]
      %v1188 = vld [vmem:[%s1185 + $0x8] sm:$0xf]
      %v1189 = vld [vmem:[%s1185 + $0xc] sm:$0xf]
      %v1192 = vunpack.c.l.b16 %v1183
      %v1193 = vunpack.c.l.b16 %v1184
      %v1194 = vpack.c.b16 %v1193, %v1192
      %v1199 = vunpack.c.l.b16 %v1186
      %v1200 = vunpack.c.l.b16 %v1187
      %v1201 = vunpack.c.l.b16 %v1188
      %v1202 = vunpack.c.l.b16 %v1189
      %v1203 = vpack.c.b16 %v1200, %v1199
      %v1204 = vpack.c.b16 %v1202, %v1201
      %v1208 = vsel %vm573, %v1194, 0
      %1210 = vmatprep.subr.bf16.mxu0 0
      %1211 = vmatpush1.bf16.msra.mxu0 0
      %1212 = vmatprep.subr.bf16.mxu0 0
      %1213 = vmatpush1.bf16.msra.mxu0 0
      %1214 = vmatprep.subr.bf16.mxu0 0
      %1215 = vmatpush1.bf16.msra.mxu0 0
      %1216 = vmatprep.subr.bf16.mxu0 0
      %1217 = vmatpush1.bf16.msra.mxu0 0
      %1218 = vmatprep.subr.bf16.mxu0 0
      %1219 = vmatpush1.bf16.msra.mxu0 0
      %1220 = vmatprep.subr.bf16.mxu0 0
      %1221 = vmatpush1.bf16.msra.mxu0 0
      %1222 = vmatprep.subr.bf16.mxu0 0
      %1223 = vmatpush1.bf16.msra.mxu0 %v1204
      %1224 = vmatprep.subr.bf16.mxu0 0
      %1225 = vmatpush1.bf16.msra.mxu0 %v1203
      %1226 = vmatprep.subr.bf16.mxu0 0
      %1227 = vmatpush2.bf16.msra.mxu0 0
      %1228 = vmatprep.subr.bf16.mxu0 0
      %1229 = vmatpush2.bf16.msra.mxu0 0
      %1230 = vmatprep.subr.bf16.mxu0 0
      %1231 = vmatpush2.bf16.msra.mxu0 0
      %1232 = vmatprep.subr.bf16.mxu0 0
      %1233 = vmatpush2.bf16.msra.mxu0 0
      %1234 = vmatprep.subr.bf16.mxu0 0
      %1235 = vmatpush2.bf16.msra.mxu0 0
      %1236 = vmatprep.subr.bf16.mxu0 0
      %1237 = vmatpush2.bf16.msra.mxu0 0
      %1238 = vmatprep.subr.bf16.mxu0 0
      %1239 = vmatpush2.bf16.msra.mxu0 0
      %1240 = vmatprep.subr.bf16.mxu0 0
      %1241 = vmatpush2.bf16.msra.mxu0 0
      %1242 = vmatprep.mubr.bf16.mxu0 0
      %1243 = vmatmul.mubr.bf16.gmra.mxu0 %v1208
      %v1244 = vpop.f32.mrf.mxu0
      %v1245 = vadd.f32 0.0, %v1244
      %v1246 = vpop.f32.mrf.mxu0
      %v1247 = vpop.f32.mrf.mxu0
      %v1248 = vadd.f32 0.0, %v1247
      %v1249 = vpop.f32.mrf.mxu0
      %1250 = vdwg.mxu0
      %v1253 = vunpack.c.l.b16 %v1177
      %v1254 = vunpack.c.l.b16 %v1178
      %v1255 = vpack.c.b16 %v1254, %v1253
      %v1260 = vunpack.c.l.b16 %v1179
      %v1261 = vunpack.c.l.b16 %v1180
      %v1262 = vunpack.c.l.b16 %v1181
      %v1263 = vunpack.c.l.b16 %v1182
      %v1264 = vpack.c.b16 %v1261, %v1260
      %v1265 = vpack.c.b16 %v1263, %v1262
      %v1269 = vsel %vm573, %v1255, 0
      %1271 = vmatprep.subr.bf16.mxu0 0
      %1272 = vmatpush1.bf16.msra.mxu0 0
      %1273 = vmatprep.subr.bf16.mxu0 0
      %1274 = vmatpush1.bf16.msra.mxu0 0
      %1275 = vmatprep.subr.bf16.mxu0 0
      %1276 = vmatpush1.bf16.msra.mxu0 0
      %1277 = vmatprep.subr.bf16.mxu0 0
      %1278 = vmatpush1.bf16.msra.mxu0 0
      %1279 = vmatprep.subr.bf16.mxu0 0
      %1280 = vmatpush1.bf16.msra.mxu0 0
      %1281 = vmatprep.subr.bf16.mxu0 0
      %1282 = vmatpush1.bf16.msra.mxu0 0
      %1283 = vmatprep.subr.bf16.mxu0 0
      %1284 = vmatpush1.bf16.msra.mxu0 %v1265
      %1285 = vmatprep.subr.bf16.mxu0 0
      %1286 = vmatpush1.bf16.msra.mxu0 %v1264
      %1287 = vmatprep.subr.bf16.mxu0 0
      %1288 = vmatpush2.bf16.msra.mxu0 0
      %1289 = vmatprep.subr.bf16.mxu0 0
      %1290 = vmatpush2.bf16.msra.mxu0 0
      %1291 = vmatprep.subr.bf16.mxu0 0
      %1292 = vmatpush2.bf16.msra.mxu0 0
      %1293 = vmatprep.subr.bf16.mxu0 0
      %1294 = vmatpush2.bf16.msra.mxu0 0
      %1295 = vmatprep.subr.bf16.mxu0 0
      %1296 = vmatpush2.bf16.msra.mxu0 0
      %1297 = vmatprep.subr.bf16.mxu0 0
      %1298 = vmatpush2.bf16.msra.mxu0 0
      %1299 = vmatprep.subr.bf16.mxu0 0
      %1300 = vmatpush2.bf16.msra.mxu0 0
      %1301 = vmatprep.subr.bf16.mxu0 0
      %1302 = vmatpush2.bf16.msra.mxu0 0
      %1303 = vmatprep.mubr.bf16.mxu0 0
      %1304 = vmatmul.mubr.bf16.gmra.mxu0 %v1269
      %v1305 = vpop.f32.mrf.mxu0
      %v1306 = vadd.f32 %v1245, %v1305
      %v1307 = vpop.f32.mrf.mxu0
      %v1308 = vpop.f32.mrf.mxu0
      %v1309 = vadd.f32 %v1248, %v1308
      %v1310 = vpop.f32.mrf.mxu0
      %1311 = vdwg.mxu0
      %v1312 = vld [vmem:[#allocation2 + $0x10] sm:$0xf]
      %v1313 = vld [vmem:[#allocation2 + $0x14] sm:$0xf]
      %s1314 = scalar_lea.vmem %s5, 32
      %v1315 = vld [vmem:[%s1314] sm:$0xf]
      %v1316 = vld [vmem:[%s1314 + $0x4] sm:$0xf]
      %v1317 = vld [vmem:[%s1314 + $0x8] sm:$0xf]
      %v1318 = vld [vmem:[%s1314 + $0xc] sm:$0xf]
      %v1321 = vunpack.c.l.b16 %v1312
      %v1322 = vunpack.c.l.b16 %v1313
      %v1323 = vpack.c.b16 %v1322, %v1321
      %v1328 = vunpack.c.l.b16 %v1315
      %v1329 = vunpack.c.l.b16 %v1316
      %v1330 = vunpack.c.l.b16 %v1317
      %v1331 = vunpack.c.l.b16 %v1318
      %v1332 = vpack.c.b16 %v1329, %v1328
      %v1333 = vpack.c.b16 %v1331, %v1330
      %v1337 = vsel %vm573, %v1323, 0
      %1339 = vmatprep.subr.bf16.mxu0 0
      %1340 = vmatpush1.bf16.msra.mxu0 0
      %1341 = vmatprep.subr.bf16.mxu0 0
      %1342 = vmatpush1.bf16.msra.mxu0 0
      %1343 = vmatprep.subr.bf16.mxu0 0
      %1344 = vmatpush1.bf16.msra.mxu0 0
      %1345 = vmatprep.subr.bf16.mxu0 0
      %1346 = vmatpush1.bf16.msra.mxu0 0
      %1347 = vmatprep.subr.bf16.mxu0 0
      %1348 = vmatpush1.bf16.msra.mxu0 0
      %1349 = vmatprep.subr.bf16.mxu0 0
      %1350 = vmatpush1.bf16.msra.mxu0 0
      %1351 = vmatprep.subr.bf16.mxu0 0
      %1352 = vmatpush1.bf16.msra.mxu0 %v1333
      %1353 = vmatprep.subr.bf16.mxu0 0
      %1354 = vmatpush1.bf16.msra.mxu0 %v1332
      %1355 = vmatprep.subr.bf16.mxu0 0
      %1356 = vmatpush2.bf16.msra.mxu0 0
      %1357 = vmatprep.subr.bf16.mxu0 0
      %1358 = vmatpush2.bf16.msra.mxu0 0
      %1359 = vmatprep.subr.bf16.mxu0 0
      %1360 = vmatpush2.bf16.msra.mxu0 0
      %1361 = vmatprep.subr.bf16.mxu0 0
      %1362 = vmatpush2.bf16.msra.mxu0 0
      %1363 = vmatprep.subr.bf16.mxu0 0
      %1364 = vmatpush2.bf16.msra.mxu0 0
      %1365 = vmatprep.subr.bf16.mxu0 0
      %1366 = vmatpush2.bf16.msra.mxu0 0
      %1367 = vmatprep.subr.bf16.mxu0 0
      %1368 = vmatpush2.bf16.msra.mxu0 0
      %1369 = vmatprep.subr.bf16.mxu0 0
      %1370 = vmatpush2.bf16.msra.mxu0 0
      %1371 = vmatprep.mubr.bf16.mxu0 0
      %1372 = vmatmul.mubr.bf16.gmra.mxu0 %v1337
      %v1373 = vpop.f32.mrf.mxu0
      %v1374 = vadd.f32 0.0, %v1373
      %v1375 = vpop.f32.mrf.mxu0
      %v1376 = vpop.f32.mrf.mxu0
      %v1377 = vadd.f32 0.0, %v1376
      %v1378 = vpop.f32.mrf.mxu0
      %1379 = vdwg.mxu0
      %v1380 = vadd.f32 %v1306, %v1374
      %v1381 = vadd.f32 %v1309, %v1377
      %v1382 = vld [vmem:[#allocation2 + $0x18] sm:$0xf]
      %v1383 = vld [vmem:[#allocation2 + $0x1c] sm:$0xf]
      %s1384 = scalar_lea.vmem %s5, 48
      %v1385 = vld [vmem:[%s1384] sm:$0xf]
      %v1386 = vld [vmem:[%s1384 + $0x4] sm:$0xf]
      %v1387 = vld [vmem:[%s1384 + $0x8] sm:$0xf]
      %v1388 = vld [vmem:[%s1384 + $0xc] sm:$0xf]
      %v1391 = vunpack.c.l.b16 %v1382
      %v1392 = vunpack.c.l.b16 %v1383
      %v1393 = vpack.c.b16 %v1392, %v1391
      %v1398 = vunpack.c.l.b16 %v1385
      %v1399 = vunpack.c.l.b16 %v1386
      %v1400 = vunpack.c.l.b16 %v1387
      %v1401 = vunpack.c.l.b16 %v1388
      %v1402 = vpack.c.b16 %v1399, %v1398
      %v1403 = vpack.c.b16 %v1401, %v1400
      %v1407 = vsel %vm573, %v1393, 0
      %1409 = vmatprep.subr.bf16.mxu0 0
      %1410 = vmatpush1.bf16.msra.mxu0 0
      %1411 = vmatprep.subr.bf16.mxu0 0
      %1412 = vmatpush1.bf16.msra.mxu0 0
      %1413 = vmatprep.subr.bf16.mxu0 0
      %1414 = vmatpush1.bf16.msra.mxu0 0
      %1415 = vmatprep.subr.bf16.mxu0 0
      %1416 = vmatpush1.bf16.msra.mxu0 0
      %1417 = vmatprep.subr.bf16.mxu0 0
      %1418 = vmatpush1.bf16.msra.mxu0 0
      %1419 = vmatprep.subr.bf16.mxu0 0
      %1420 = vmatpush1.bf16.msra.mxu0 0
      %1421 = vmatprep.subr.bf16.mxu0 0
      %1422 = vmatpush1.bf16.msra.mxu0 %v1403
      %1423 = vmatprep.subr.bf16.mxu0 0
      %1424 = vmatpush1.bf16.msra.mxu0 %v1402
      %1425 = vmatprep.subr.bf16.mxu0 0
      %1426 = vmatpush2.bf16.msra.mxu0 0
      %1427 = vmatprep.subr.bf16.mxu0 0
      %1428 = vmatpush2.bf16.msra.mxu0 0
      %1429 = vmatprep.subr.bf16.mxu0 0
      %1430 = vmatpush2.bf16.msra.mxu0 0
      %1431 = vmatprep.subr.bf16.mxu0 0
      %1432 = vmatpush2.bf16.msra.mxu0 0
      %1433 = vmatprep.subr.bf16.mxu0 0
      %1434 = vmatpush2.bf16.msra.mxu0 0
      %1435 = vmatprep.subr.bf16.mxu0 0
      %1436 = vmatpush2.bf16.msra.mxu0 0
      %1437 = vmatprep.subr.bf16.mxu0 0
      %1438 = vmatpush2.bf16.msra.mxu0 0
      %1439 = vmatprep.subr.bf16.mxu0 0
      %1440 = vmatpush2.bf16.msra.mxu0 0
      %1441 = vmatprep.mubr.bf16.mxu0 0
      %1442 = vmatmul.mubr.bf16.gmra.mxu0 %v1407
      %v1443 = vpop.f32.mrf.mxu0
      %v1444 = vadd.f32 0.0, %v1443
      %v1445 = vpop.f32.mrf.mxu0
      %v1446 = vpop.f32.mrf.mxu0
      %v1447 = vadd.f32 0.0, %v1446
      %v1448 = vpop.f32.mrf.mxu0
      %1449 = vdwg.mxu0
      %v1450 = vadd.f32 %v1380, %v1444
      %v1451 = vadd.f32 %v1381, %v1447
      %v1452 = vld [vmem:[#allocation2 + $0x20] sm:$0xf]
      %v1453 = vld [vmem:[#allocation2 + $0x24] sm:$0xf]
      %s1454 = scalar_lea.vmem %s5, 64
      %v1455 = vld [vmem:[%s1454] sm:$0xf]
      %v1456 = vld [vmem:[%s1454 + $0x4] sm:$0xf]
      %v1457 = vld [vmem:[%s1454 + $0x8] sm:$0xf]
      %v1458 = vld [vmem:[%s1454 + $0xc] sm:$0xf]
      %v1461 = vunpack.c.l.b16 %v1452
      %v1462 = vunpack.c.l.b16 %v1453
      %v1463 = vpack.c.b16 %v1462, %v1461
      %v1468 = vunpack.c.l.b16 %v1455
      %v1469 = vunpack.c.l.b16 %v1456
      %v1470 = vunpack.c.l.b16 %v1457
      %v1471 = vunpack.c.l.b16 %v1458
      %v1472 = vpack.c.b16 %v1469, %v1468
      %v1473 = vpack.c.b16 %v1471, %v1470
      %v1477 = vsel %vm573, %v1463, 0
      %1479 = vmatprep.subr.bf16.mxu0 0
      %1480 = vmatpush1.bf16.msra.mxu0 0
      %1481 = vmatprep.subr.bf16.mxu0 0
      %1482 = vmatpush1.bf16.msra.mxu0 0
      %1483 = vmatprep.subr.bf16.mxu0 0
      %1484 = vmatpush1.bf16.msra.mxu0 0
      %1485 = vmatprep.subr.bf16.mxu0 0
      %1486 = vmatpush1.bf16.msra.mxu0 0
      %1487 = vmatprep.subr.bf16.mxu0 0
      %1488 = vmatpush1.bf16.msra.mxu0 0
      %1489 = vmatprep.subr.bf16.mxu0 0
      %1490 = vmatpush1.bf16.msra.mxu0 0
      %1491 = vmatprep.subr.bf16.mxu0 0
      %1492 = vmatpush1.bf16.msra.mxu0 %v1473
      %1493 = vmatprep.subr.bf16.mxu0 0
      %1494 = vmatpush1.bf16.msra.mxu0 %v1472
      %1495 = vmatprep.subr.bf16.mxu0 0
      %1496 = vmatpush2.bf16.msra.mxu0 0
      %1497 = vmatprep.subr.bf16.mxu0 0
      %1498 = vmatpush2.bf16.msra.mxu0 0
      %1499 = vmatprep.subr.bf16.mxu0 0
      %1500 = vmatpush2.bf16.msra.mxu0 0
      %1501 = vmatprep.subr.bf16.mxu0 0
      %1502 = vmatpush2.bf16.msra.mxu0 0
      %1503 = vmatprep.subr.bf16.mxu0 0
      %1504 = vmatpush2.bf16.msra.mxu0 0
      %1505 = vmatprep.subr.bf16.mxu0 0
      %1506 = vmatpush2.bf16.msra.mxu0 0
      %1507 = vmatprep.subr.bf16.mxu0 0
      %1508 = vmatpush2.bf16.msra.mxu0 0
      %1509 = vmatprep.subr.bf16.mxu0 0
      %1510 = vmatpush2.bf16.msra.mxu0 0
      %1511 = vmatprep.mubr.bf16.mxu0 0
      %1512 = vmatmul.mubr.bf16.gmra.mxu0 %v1477
      %v1513 = vpop.f32.mrf.mxu0
      %v1514 = vadd.f32 0.0, %v1513
      %v1515 = vpop.f32.mrf.mxu0
      %v1516 = vpop.f32.mrf.mxu0
      %v1517 = vadd.f32 0.0, %v1516
      %v1518 = vpop.f32.mrf.mxu0
      %1519 = vdwg.mxu0
      %v1520 = vadd.f32 %v1450, %v1514
      %v1521 = vadd.f32 %v1451, %v1517
      %v1522 = vld [vmem:[#allocation2 + $0x28] sm:$0xf]
      %v1523 = vld [vmem:[#allocation2 + $0x2c] sm:$0xf]
      %s1524 = scalar_lea.vmem %s5, 80
      %v1525 = vld [vmem:[%s1524] sm:$0xf]
      %v1526 = vld [vmem:[%s1524 + $0x4] sm:$0xf]
      %v1527 = vld [vmem:[%s1524 + $0x8] sm:$0xf]
      %v1528 = vld [vmem:[%s1524 + $0xc] sm:$0xf]
      %v1531 = vunpack.c.l.b16 %v1522
      %v1532 = vunpack.c.l.b16 %v1523
      %v1533 = vpack.c.b16 %v1532, %v1531
      %v1538 = vunpack.c.l.b16 %v1525
      %v1539 = vunpack.c.l.b16 %v1526
      %v1540 = vunpack.c.l.b16 %v1527
      %v1541 = vunpack.c.l.b16 %v1528
      %v1542 = vpack.c.b16 %v1539, %v1538
      %v1543 = vpack.c.b16 %v1541, %v1540
      %v1547 = vsel %vm573, %v1533, 0
      %1549 = vmatprep.subr.bf16.mxu0 0
      %1550 = vmatpush1.bf16.msra.mxu0 0
      %1551 = vmatprep.subr.bf16.mxu0 0
      %1552 = vmatpush1.bf16.msra.mxu0 0
      %1553 = vmatprep.subr.bf16.mxu0 0
      %1554 = vmatpush1.bf16.msra.mxu0 0
      %1555 = vmatprep.subr.bf16.mxu0 0
      %1556 = vmatpush1.bf16.msra.mxu0 0
      %1557 = vmatprep.subr.bf16.mxu0 0
      %1558 = vmatpush1.bf16.msra.mxu0 0
      %1559 = vmatprep.subr.bf16.mxu0 0
      %1560 = vmatpush1.bf16.msra.mxu0 0
      %1561 = vmatprep.subr.bf16.mxu0 0
      %1562 = vmatpush1.bf16.msra.mxu0 %v1543
      %1563 = vmatprep.subr.bf16.mxu0 0
      %1564 = vmatpush1.bf16.msra.mxu0 %v1542
      %1565 = vmatprep.subr.bf16.mxu0 0
      %1566 = vmatpush2.bf16.msra.mxu0 0
      %1567 = vmatprep.subr.bf16.mxu0 0
      %1568 = vmatpush2.bf16.msra.mxu0 0
      %1569 = vmatprep.subr.bf16.mxu0 0
      %1570 = vmatpush2.bf16.msra.mxu0 0
      %1571 = vmatprep.subr.bf16.mxu0 0
      %1572 = vmatpush2.bf16.msra.mxu0 0
      %1573 = vmatprep.subr.bf16.mxu0 0
      %1574 = vmatpush2.bf16.msra.mxu0 0
      %1575 = vmatprep.subr.bf16.mxu0 0
      %1576 = vmatpush2.bf16.msra.mxu0 0
      %1577 = vmatprep.subr.bf16.mxu0 0
      %1578 = vmatpush2.bf16.msra.mxu0 0
      %1579 = vmatprep.subr.bf16.mxu0 0
      %1580 = vmatpush2.bf16.msra.mxu0 0
      %1581 = vmatprep.mubr.bf16.mxu0 0
      %1582 = vmatmul.mubr.bf16.gmra.mxu0 %v1547
      %v1583 = vpop.f32.mrf.mxu0
      %v1584 = vadd.f32 0.0, %v1583
      %v1585 = vpop.f32.mrf.mxu0
      %v1586 = vpop.f32.mrf.mxu0
      %v1587 = vadd.f32 0.0, %v1586
      %v1588 = vpop.f32.mrf.mxu0
      %1589 = vdwg.mxu0
      %v1590 = vadd.f32 %v1520, %v1584
      %v1591 = vadd.f32 %v1521, %v1587
      %v1592 = vld [vmem:[#allocation2 + $0x30] sm:$0xf]
      %v1593 = vld [vmem:[#allocation2 + $0x34] sm:$0xf]
      %s1594 = scalar_lea.vmem %s5, 96
      %v1595 = vld [vmem:[%s1594] sm:$0xf]
      %v1596 = vld [vmem:[%s1594 + $0x4] sm:$0xf]
      %v1597 = vld [vmem:[%s1594 + $0x8] sm:$0xf]
      %v1598 = vld [vmem:[%s1594 + $0xc] sm:$0xf]
      %v1601 = vunpack.c.l.b16 %v1592
      %v1602 = vunpack.c.l.b16 %v1593
      %v1603 = vpack.c.b16 %v1602, %v1601
      %v1608 = vunpack.c.l.b16 %v1595
      %v1609 = vunpack.c.l.b16 %v1596
      %v1610 = vunpack.c.l.b16 %v1597
      %v1611 = vunpack.c.l.b16 %v1598
      %v1612 = vpack.c.b16 %v1609, %v1608
      %v1613 = vpack.c.b16 %v1611, %v1610
      %v1617 = vsel %vm573, %v1603, 0
      %1619 = vmatprep.subr.bf16.mxu0 0
      %1620 = vmatpush1.bf16.msra.mxu0 0
      %1621 = vmatprep.subr.bf16.mxu0 0
      %1622 = vmatpush1.bf16.msra.mxu0 0
      %1623 = vmatprep.subr.bf16.mxu0 0
      %1624 = vmatpush1.bf16.msra.mxu0 0
      %1625 = vmatprep.subr.bf16.mxu0 0
      %1626 = vmatpush1.bf16.msra.mxu0 0
      %1627 = vmatprep.subr.bf16.mxu0 0
      %1628 = vmatpush1.bf16.msra.mxu0 0
      %1629 = vmatprep.subr.bf16.mxu0 0
      %1630 = vmatpush1.bf16.msra.mxu0 0
      %1631 = vmatprep.subr.bf16.mxu0 0
      %1632 = vmatpush1.bf16.msra.mxu0 %v1613
      %1633 = vmatprep.subr.bf16.mxu0 0
      %1634 = vmatpush1.bf16.msra.mxu0 %v1612
      %1635 = vmatprep.subr.bf16.mxu0 0
      %1636 = vmatpush2.bf16.msra.mxu0 0
      %1637 = vmatprep.subr.bf16.mxu0 0
      %1638 = vmatpush2.bf16.msra.mxu0 0
      %1639 = vmatprep.subr.bf16.mxu0 0
      %1640 = vmatpush2.bf16.msra.mxu0 0
      %1641 = vmatprep.subr.bf16.mxu0 0
      %1642 = vmatpush2.bf16.msra.mxu0 0
      %1643 = vmatprep.subr.bf16.mxu0 0
      %1644 = vmatpush2.bf16.msra.mxu0 0
      %1645 = vmatprep.subr.bf16.mxu0 0
      %1646 = vmatpush2.bf16.msra.mxu0 0
      %1647 = vmatprep.subr.bf16.mxu0 0
      %1648 = vmatpush2.bf16.msra.mxu0 0
      %1649 = vmatprep.subr.bf16.mxu0 0
      %1650 = vmatpush2.bf16.msra.mxu0 0
      %1651 = vmatprep.mubr.bf16.mxu0 0
      %1652 = vmatmul.mubr.bf16.gmra.mxu0 %v1617
      %v1653 = vpop.f32.mrf.mxu0
      %v1654 = vadd.f32 0.0, %v1653
      %v1655 = vpop.f32.mrf.mxu0
      %v1656 = vpop.f32.mrf.mxu0
      %v1657 = vadd.f32 0.0, %v1656
      %v1658 = vpop.f32.mrf.mxu0
      %1659 = vdwg.mxu0
      %v1660 = vadd.f32 %v1590, %v1654
      %v1661 = vadd.f32 %v1591, %v1657
      %v1662 = vld [vmem:[#allocation2 + $0x38] sm:$0xf]
      %v1663 = vld [vmem:[#allocation2 + $0x3c] sm:$0xf]
      %s1664 = scalar_lea.vmem %s5, 112
      %v1665 = vld [vmem:[%s1664] sm:$0xf]
      %v1666 = vld [vmem:[%s1664 + $0x4] sm:$0xf]
      %v1667 = vld [vmem:[%s1664 + $0x8] sm:$0xf]
      %v1668 = vld [vmem:[%s1664 + $0xc] sm:$0xf]
      %v1671 = vunpack.c.l.b16 %v1662
      %v1672 = vunpack.c.l.b16 %v1663
      %v1673 = vpack.c.b16 %v1672, %v1671
      %v1678 = vunpack.c.l.b16 %v1665
      %v1679 = vunpack.c.l.b16 %v1666
      %v1680 = vunpack.c.l.b16 %v1667
      %v1681 = vunpack.c.l.b16 %v1668
      %v1682 = vpack.c.b16 %v1679, %v1678
      %v1683 = vpack.c.b16 %v1681, %v1680
      %v1687 = vsel %vm573, %v1673, 0
      %1689 = vmatprep.subr.bf16.mxu0 0
      %1690 = vmatpush1.bf16.msra.mxu0 0
      %1691 = vmatprep.subr.bf16.mxu0 0
      %1692 = vmatpush1.bf16.msra.mxu0 0
      %1693 = vmatprep.subr.bf16.mxu0 0
      %1694 = vmatpush1.bf16.msra.mxu0 0
      %1695 = vmatprep.subr.bf16.mxu0 0
      %1696 = vmatpush1.bf16.msra.mxu0 0
      %1697 = vmatprep.subr.bf16.mxu0 0
      %1698 = vmatpush1.bf16.msra.mxu0 0
      %1699 = vmatprep.subr.bf16.mxu0 0
      %1700 = vmatpush1.bf16.msra.mxu0 0
      %1701 = vmatprep.subr.bf16.mxu0 0
      %1702 = vmatpush1.bf16.msra.mxu0 %v1683
      %1703 = vmatprep.subr.bf16.mxu0 0
      %1704 = vmatpush1.bf16.msra.mxu0 %v1682
      %1705 = vmatprep.subr.bf16.mxu0 0
      %1706 = vmatpush2.bf16.msra.mxu0 0
      %1707 = vmatprep.subr.bf16.mxu0 0
      %1708 = vmatpush2.bf16.msra.mxu0 0
      %1709 = vmatprep.subr.bf16.mxu0 0
      %1710 = vmatpush2.bf16.msra.mxu0 0
      %1711 = vmatprep.subr.bf16.mxu0 0
      %1712 = vmatpush2.bf16.msra.mxu0 0
      %1713 = vmatprep.subr.bf16.mxu0 0
      %1714 = vmatpush2.bf16.msra.mxu0 0
      %1715 = vmatprep.subr.bf16.mxu0 0
      %1716 = vmatpush2.bf16.msra.mxu0 0
      %1717 = vmatprep.subr.bf16.mxu0 0
      %1718 = vmatpush2.bf16.msra.mxu0 0
      %1719 = vmatprep.subr.bf16.mxu0 0
      %1720 = vmatpush2.bf16.msra.mxu0 0
      %1721 = vmatprep.mubr.bf16.mxu0 0
      %1722 = vmatmul.mubr.bf16.gmra.mxu0 %v1687
      %v1723 = vpop.f32.mrf.mxu0
      %v1724 = vadd.f32 0.0, %v1723
      %v1725 = vpop.f32.mrf.mxu0
      %v1726 = vpop.f32.mrf.mxu0
      %v1727 = vadd.f32 0.0, %v1726
      %v1728 = vpop.f32.mrf.mxu0
      %1729 = vdwg.mxu0
      %v1730 = vadd.f32 %v1660, %v1724
      %v1731 = vadd.f32 %v1661, %v1727
      %v1732 = vld [vmem:[#allocation2 + $0x40] sm:$0xf]
      %v1733 = vld [vmem:[#allocation2 + $0x44] sm:$0xf]
      %s1734 = scalar_lea.vmem %s5, 128
      %v1735 = vld [vmem:[%s1734] sm:$0xf]
      %v1736 = vld [vmem:[%s1734 + $0x4] sm:$0xf]
      %v1737 = vld [vmem:[%s1734 + $0x8] sm:$0xf]
      %v1738 = vld [vmem:[%s1734 + $0xc] sm:$0xf]
      %v1741 = vunpack.c.l.b16 %v1732
      %v1742 = vunpack.c.l.b16 %v1733
      %v1743 = vpack.c.b16 %v1742, %v1741
      %v1748 = vunpack.c.l.b16 %v1735
      %v1749 = vunpack.c.l.b16 %v1736
      %v1750 = vunpack.c.l.b16 %v1737
      %v1751 = vunpack.c.l.b16 %v1738
      %v1752 = vpack.c.b16 %v1749, %v1748
      %v1753 = vpack.c.b16 %v1751, %v1750
      %v1757 = vsel %vm573, %v1743, 0
      %1759 = vmatprep.subr.bf16.mxu0 0
      %1760 = vmatpush1.bf16.msra.mxu0 0
      %1761 = vmatprep.subr.bf16.mxu0 0
      %1762 = vmatpush1.bf16.msra.mxu0 0
      %1763 = vmatprep.subr.bf16.mxu0 0
      %1764 = vmatpush1.bf16.msra.mxu0 0
      %1765 = vmatprep.subr.bf16.mxu0 0
      %1766 = vmatpush1.bf16.msra.mxu0 0
      %1767 = vmatprep.subr.bf16.mxu0 0
      %1768 = vmatpush1.bf16.msra.mxu0 0
      %1769 = vmatprep.subr.bf16.mxu0 0
      %1770 = vmatpush1.bf16.msra.mxu0 0
      %1771 = vmatprep.subr.bf16.mxu0 0
      %1772 = vmatpush1.bf16.msra.mxu0 %v1753
      %1773 = vmatprep.subr.bf16.mxu0 0
      %1774 = vmatpush1.bf16.msra.mxu0 %v1752
      %1775 = vmatprep.subr.bf16.mxu0 0
      %1776 = vmatpush2.bf16.msra.mxu0 0
      %1777 = vmatprep.subr.bf16.mxu0 0
      %1778 = vmatpush2.bf16.msra.mxu0 0
      %1779 = vmatprep.subr.bf16.mxu0 0
      %1780 = vmatpush2.bf16.msra.mxu0 0
      %1781 = vmatprep.subr.bf16.mxu0 0
      %1782 = vmatpush2.bf16.msra.mxu0 0
      %1783 = vmatprep.subr.bf16.mxu0 0
      %1784 = vmatpush2.bf16.msra.mxu0 0
      %1785 = vmatprep.subr.bf16.mxu0 0
      %1786 = vmatpush2.bf16.msra.mxu0 0
      %1787 = vmatprep.subr.bf16.mxu0 0
      %1788 = vmatpush2.bf16.msra.mxu0 0
      %1789 = vmatprep.subr.bf16.mxu0 0
      %1790 = vmatpush2.bf16.msra.mxu0 0
      %1791 = vmatprep.mubr.bf16.mxu0 0
      %1792 = vmatmul.mubr.bf16.gmra.mxu0 %v1757
      %v1793 = vpop.f32.mrf.mxu0
      %v1794 = vadd.f32 0.0, %v1793
      %v1795 = vpop.f32.mrf.mxu0
      %v1796 = vpop.f32.mrf.mxu0
      %v1797 = vadd.f32 0.0, %v1796
      %v1798 = vpop.f32.mrf.mxu0
      %1799 = vdwg.mxu0
      %v1800 = vadd.f32 %v1730, %v1794
      %v1801 = vadd.f32 %v1731, %v1797
      %v1802 = vld [vmem:[#allocation2 + $0x48] sm:$0xf]
      %v1803 = vld [vmem:[#allocation2 + $0x4c] sm:$0xf]
      %s1804 = scalar_lea.vmem %s5, 144
      %v1805 = vld [vmem:[%s1804] sm:$0xf]
      %v1806 = vld [vmem:[%s1804 + $0x4] sm:$0xf]
      %v1807 = vld [vmem:[%s1804 + $0x8] sm:$0xf]
      %v1808 = vld [vmem:[%s1804 + $0xc] sm:$0xf]
      %v1811 = vunpack.c.l.b16 %v1802
      %v1812 = vunpack.c.l.b16 %v1803
      %v1813 = vpack.c.b16 %v1812, %v1811
      %v1818 = vunpack.c.l.b16 %v1805
      %v1819 = vunpack.c.l.b16 %v1806
      %v1820 = vunpack.c.l.b16 %v1807
      %v1821 = vunpack.c.l.b16 %v1808
      %v1822 = vpack.c.b16 %v1819, %v1818
      %v1823 = vpack.c.b16 %v1821, %v1820
      %v1827 = vsel %vm573, %v1813, 0
      %1829 = vmatprep.subr.bf16.mxu0 0
      %1830 = vmatpush1.bf16.msra.mxu0 0
      %1831 = vmatprep.subr.bf16.mxu0 0
      %1832 = vmatpush1.bf16.msra.mxu0 0
      %1833 = vmatprep.subr.bf16.mxu0 0
      %1834 = vmatpush1.bf16.msra.mxu0 0
      %1835 = vmatprep.subr.bf16.mxu0 0
      %1836 = vmatpush1.bf16.msra.mxu0 0
      %1837 = vmatprep.subr.bf16.mxu0 0
      %1838 = vmatpush1.bf16.msra.mxu0 0
      %1839 = vmatprep.subr.bf16.mxu0 0
      %1840 = vmatpush1.bf16.msra.mxu0 0
      %1841 = vmatprep.subr.bf16.mxu0 0
      %1842 = vmatpush1.bf16.msra.mxu0 %v1823
      %1843 = vmatprep.subr.bf16.mxu0 0
      %1844 = vmatpush1.bf16.msra.mxu0 %v1822
      %1845 = vmatprep.subr.bf16.mxu0 0
      %1846 = vmatpush2.bf16.msra.mxu0 0
      %1847 = vmatprep.subr.bf16.mxu0 0
      %1848 = vmatpush2.bf16.msra.mxu0 0
      %1849 = vmatprep.subr.bf16.mxu0 0
      %1850 = vmatpush2.bf16.msra.mxu0 0
      %1851 = vmatprep.subr.bf16.mxu0 0
      %1852 = vmatpush2.bf16.msra.mxu0 0
      %1853 = vmatprep.subr.bf16.mxu0 0
      %1854 = vmatpush2.bf16.msra.mxu0 0
      %1855 = vmatprep.subr.bf16.mxu0 0
      %1856 = vmatpush2.bf16.msra.mxu0 0
      %1857 = vmatprep.subr.bf16.mxu0 0
      %1858 = vmatpush2.bf16.msra.mxu0 0
      %1859 = vmatprep.subr.bf16.mxu0 0
      %1860 = vmatpush2.bf16.msra.mxu0 0
      %1861 = vmatprep.mubr.bf16.mxu0 0
      %1862 = vmatmul.mubr.bf16.gmra.mxu0 %v1827
      %v1863 = vpop.f32.mrf.mxu0
      %v1864 = vadd.f32 0.0, %v1863
      %v1865 = vpop.f32.mrf.mxu0
      %v1866 = vpop.f32.mrf.mxu0
      %v1867 = vadd.f32 0.0, %v1866
      %v1868 = vpop.f32.mrf.mxu0
      %1869 = vdwg.mxu0
      %v1870 = vadd.f32 %v1800, %v1864
      %v1871 = vadd.f32 %v1801, %v1867
      %v1872 = vld [vmem:[#allocation2 + $0x50] sm:$0xf]
      %v1873 = vld [vmem:[#allocation2 + $0x54] sm:$0xf]
      %s1874 = scalar_lea.vmem %s5, 160
      %v1875 = vld [vmem:[%s1874] sm:$0xf]
      %v1876 = vld [vmem:[%s1874 + $0x4] sm:$0xf]
      %v1877 = vld [vmem:[%s1874 + $0x8] sm:$0xf]
      %v1878 = vld [vmem:[%s1874 + $0xc] sm:$0xf]
      %v1881 = vunpack.c.l.b16 %v1872
      %v1882 = vunpack.c.l.b16 %v1873
      %v1883 = vpack.c.b16 %v1882, %v1881
      %v1888 = vunpack.c.l.b16 %v1875
      %v1889 = vunpack.c.l.b16 %v1876
      %v1890 = vunpack.c.l.b16 %v1877
      %v1891 = vunpack.c.l.b16 %v1878
      %v1892 = vpack.c.b16 %v1889, %v1888
      %v1893 = vpack.c.b16 %v1891, %v1890
      %v1897 = vsel %vm573, %v1883, 0
      %1899 = vmatprep.subr.bf16.mxu0 0
      %1900 = vmatpush1.bf16.msra.mxu0 0
      %1901 = vmatprep.subr.bf16.mxu0 0
      %1902 = vmatpush1.bf16.msra.mxu0 0
      %1903 = vmatprep.subr.bf16.mxu0 0
      %1904 = vmatpush1.bf16.msra.mxu0 0
      %1905 = vmatprep.subr.bf16.mxu0 0
      %1906 = vmatpush1.bf16.msra.mxu0 0
      %1907 = vmatprep.subr.bf16.mxu0 0
      %1908 = vmatpush1.bf16.msra.mxu0 0
      %1909 = vmatprep.subr.bf16.mxu0 0
      %1910 = vmatpush1.bf16.msra.mxu0 0
      %1911 = vmatprep.subr.bf16.mxu0 0
      %1912 = vmatpush1.bf16.msra.mxu0 %v1893
      %1913 = vmatprep.subr.bf16.mxu0 0
      %1914 = vmatpush1.bf16.msra.mxu0 %v1892
      %1915 = vmatprep.subr.bf16.mxu0 0
      %1916 = vmatpush2.bf16.msra.mxu0 0
      %1917 = vmatprep.subr.bf16.mxu0 0
      %1918 = vmatpush2.bf16.msra.mxu0 0
      %1919 = vmatprep.subr.bf16.mxu0 0
      %1920 = vmatpush2.bf16.msra.mxu0 0
      %1921 = vmatprep.subr.bf16.mxu0 0
      %1922 = vmatpush2.bf16.msra.mxu0 0
      %1923 = vmatprep.subr.bf16.mxu0 0
      %1924 = vmatpush2.bf16.msra.mxu0 0
      %1925 = vmatprep.subr.bf16.mxu0 0
      %1926 = vmatpush2.bf16.msra.mxu0 0
      %1927 = vmatprep.subr.bf16.mxu0 0
      %1928 = vmatpush2.bf16.msra.mxu0 0
      %1929 = vmatprep.subr.bf16.mxu0 0
      %1930 = vmatpush2.bf16.msra.mxu0 0
      %1931 = vmatprep.mubr.bf16.mxu0 0
      %1932 = vmatmul.mubr.bf16.gmra.mxu0 %v1897
      %v1933 = vpop.f32.mrf.mxu0
      %v1934 = vadd.f32 0.0, %v1933
      %v1935 = vpop.f32.mrf.mxu0
      %v1936 = vpop.f32.mrf.mxu0
      %v1937 = vadd.f32 0.0, %v1936
      %v1938 = vpop.f32.mrf.mxu0
      %1939 = vdwg.mxu0
      %v1940 = vadd.f32 %v1870, %v1934
      %v1941 = vadd.f32 %v1871, %v1937
      %v1942 = vld [vmem:[#allocation2 + $0x58] sm:$0xf]
      %v1943 = vld [vmem:[#allocation2 + $0x5c] sm:$0xf]
      %s1944 = scalar_lea.vmem %s5, 176
      %v1945 = vld [vmem:[%s1944] sm:$0xf]
      %v1946 = vld [vmem:[%s1944 + $0x4] sm:$0xf]
      %v1947 = vld [vmem:[%s1944 + $0x8] sm:$0xf]
      %v1948 = vld [vmem:[%s1944 + $0xc] sm:$0xf]
      %v1951 = vunpack.c.l.b16 %v1942
      %v1952 = vunpack.c.l.b16 %v1943
      %v1953 = vpack.c.b16 %v1952, %v1951
      %v1958 = vunpack.c.l.b16 %v1945
      %v1959 = vunpack.c.l.b16 %v1946
      %v1960 = vunpack.c.l.b16 %v1947
      %v1961 = vunpack.c.l.b16 %v1948
      %v1962 = vpack.c.b16 %v1959, %v1958
      %v1963 = vpack.c.b16 %v1961, %v1960
      %v1967 = vsel %vm573, %v1953, 0
      %1969 = vmatprep.subr.bf16.mxu0 0
      %1970 = vmatpush1.bf16.msra.mxu0 0
      %1971 = vmatprep.subr.bf16.mxu0 0
      %1972 = vmatpush1.bf16.msra.mxu0 0
      %1973 = vmatprep.subr.bf16.mxu0 0
      %1974 = vmatpush1.bf16.msra.mxu0 0
      %1975 = vmatprep.subr.bf16.mxu0 0
      %1976 = vmatpush1.bf16.msra.mxu0 0
      %1977 = vmatprep.subr.bf16.mxu0 0
      %1978 = vmatpush1.bf16.msra.mxu0 0
      %1979 = vmatprep.subr.bf16.mxu0 0
      %1980 = vmatpush1.bf16.msra.mxu0 0
      %1981 = vmatprep.subr.bf16.mxu0 0
      %1982 = vmatpush1.bf16.msra.mxu0 %v1963
      %1983 = vmatprep.subr.bf16.mxu0 0
      %1984 = vmatpush1.bf16.msra.mxu0 %v1962
      %1985 = vmatprep.subr.bf16.mxu0 0
      %1986 = vmatpush2.bf16.msra.mxu0 0
      %1987 = vmatprep.subr.bf16.mxu0 0
      %1988 = vmatpush2.bf16.msra.mxu0 0
      %1989 = vmatprep.subr.bf16.mxu0 0
      %1990 = vmatpush2.bf16.msra.mxu0 0
      %1991 = vmatprep.subr.bf16.mxu0 0
      %1992 = vmatpush2.bf16.msra.mxu0 0
      %1993 = vmatprep.subr.bf16.mxu0 0
      %1994 = vmatpush2.bf16.msra.mxu0 0
      %1995 = vmatprep.subr.bf16.mxu0 0
      %1996 = vmatpush2.bf16.msra.mxu0 0
      %1997 = vmatprep.subr.bf16.mxu0 0
      %1998 = vmatpush2.bf16.msra.mxu0 0
      %1999 = vmatprep.subr.bf16.mxu0 0
      %2000 = vmatpush2.bf16.msra.mxu0 0
      %2001 = vmatprep.mubr.bf16.mxu0 0
      %2002 = vmatmul.mubr.bf16.gmra.mxu0 %v1967
      %v2003 = vpop.f32.mrf.mxu0
      %v2004 = vadd.f32 0.0, %v2003
      %v2005 = vpop.f32.mrf.mxu0
      %v2006 = vpop.f32.mrf.mxu0
      %v2007 = vadd.f32 0.0, %v2006
      %v2008 = vpop.f32.mrf.mxu0
      %2009 = vdwg.mxu0
      %v2010 = vadd.f32 %v1940, %v2004
      %v2011 = vadd.f32 %v1941, %v2007
      %v2012 = vld [vmem:[#allocation2 + $0x60] sm:$0xf]
      %v2013 = vld [vmem:[#allocation2 + $0x64] sm:$0xf]
      %s2014 = scalar_lea.vmem %s5, 192
      %v2015 = vld [vmem:[%s2014] sm:$0xf]
      %v2016 = vld [vmem:[%s2014 + $0x4] sm:$0xf]
      %v2017 = vld [vmem:[%s2014 + $0x8] sm:$0xf]
      %v2018 = vld [vmem:[%s2014 + $0xc] sm:$0xf]
      %v2021 = vunpack.c.l.b16 %v2012
      %v2022 = vunpack.c.l.b16 %v2013
      %v2023 = vpack.c.b16 %v2022, %v2021
      %v2028 = vunpack.c.l.b16 %v2015
      %v2029 = vunpack.c.l.b16 %v2016
      %v2030 = vunpack.c.l.b16 %v2017
      %v2031 = vunpack.c.l.b16 %v2018
      %v2032 = vpack.c.b16 %v2029, %v2028
      %v2033 = vpack.c.b16 %v2031, %v2030
      %v2037 = vsel %vm573, %v2023, 0
      %2039 = vmatprep.subr.bf16.mxu0 0
      %2040 = vmatpush1.bf16.msra.mxu0 0
      %2041 = vmatprep.subr.bf16.mxu0 0
      %2042 = vmatpush1.bf16.msra.mxu0 0
      %2043 = vmatprep.subr.bf16.mxu0 0
      %2044 = vmatpush1.bf16.msra.mxu0 0
      %2045 = vmatprep.subr.bf16.mxu0 0
      %2046 = vmatpush1.bf16.msra.mxu0 0
      %2047 = vmatprep.subr.bf16.mxu0 0
      %2048 = vmatpush1.bf16.msra.mxu0 0
      %2049 = vmatprep.subr.bf16.mxu0 0
      %2050 = vmatpush1.bf16.msra.mxu0 0
      %2051 = vmatprep.subr.bf16.mxu0 0
      %2052 = vmatpush1.bf16.msra.mxu0 %v2033
      %2053 = vmatprep.subr.bf16.mxu0 0
      %2054 = vmatpush1.bf16.msra.mxu0 %v2032
      %2055 = vmatprep.subr.bf16.mxu0 0
      %2056 = vmatpush2.bf16.msra.mxu0 0
      %2057 = vmatprep.subr.bf16.mxu0 0
      %2058 = vmatpush2.bf16.msra.mxu0 0
      %2059 = vmatprep.subr.bf16.mxu0 0
      %2060 = vmatpush2.bf16.msra.mxu0 0
      %2061 = vmatprep.subr.bf16.mxu0 0
      %2062 = vmatpush2.bf16.msra.mxu0 0
      %2063 = vmatprep.subr.bf16.mxu0 0
      %2064 = vmatpush2.bf16.msra.mxu0 0
      %2065 = vmatprep.subr.bf16.mxu0 0
      %2066 = vmatpush2.bf16.msra.mxu0 0
      %2067 = vmatprep.subr.bf16.mxu0 0
      %2068 = vmatpush2.bf16.msra.mxu0 0
      %2069 = vmatprep.subr.bf16.mxu0 0
      %2070 = vmatpush2.bf16.msra.mxu0 0
      %2071 = vmatprep.mubr.bf16.mxu0 0
      %2072 = vmatmul.mubr.bf16.gmra.mxu0 %v2037
      %v2073 = vpop.f32.mrf.mxu0
      %v2074 = vadd.f32 0.0, %v2073
      %v2075 = vpop.f32.mrf.mxu0
      %v2076 = vpop.f32.mrf.mxu0
      %v2077 = vadd.f32 0.0, %v2076
      %v2078 = vpop.f32.mrf.mxu0
      %2079 = vdwg.mxu0
      %v2080 = vadd.f32 %v2010, %v2074
      %v2081 = vadd.f32 %v2011, %v2077
      %v2082 = vld [vmem:[#allocation2 + $0x68] sm:$0xf]
      %v2083 = vld [vmem:[#allocation2 + $0x6c] sm:$0xf]
      %s2084 = scalar_lea.vmem %s5, 208
      %v2085 = vld [vmem:[%s2084] sm:$0xf]
      %v2086 = vld [vmem:[%s2084 + $0x4] sm:$0xf]
      %v2087 = vld [vmem:[%s2084 + $0x8] sm:$0xf]
      %v2088 = vld [vmem:[%s2084 + $0xc] sm:$0xf]
      %v2091 = vunpack.c.l.b16 %v2082
      %v2092 = vunpack.c.l.b16 %v2083
      %v2093 = vpack.c.b16 %v2092, %v2091
      %v2098 = vunpack.c.l.b16 %v2085
      %v2099 = vunpack.c.l.b16 %v2086
      %v2100 = vunpack.c.l.b16 %v2087
      %v2101 = vunpack.c.l.b16 %v2088
      %v2102 = vpack.c.b16 %v2099, %v2098
      %v2103 = vpack.c.b16 %v2101, %v2100
      %v2107 = vsel %vm573, %v2093, 0
      %2109 = vmatprep.subr.bf16.mxu0 0
      %2110 = vmatpush1.bf16.msra.mxu0 0
      %2111 = vmatprep.subr.bf16.mxu0 0
      %2112 = vmatpush1.bf16.msra.mxu0 0
      %2113 = vmatprep.subr.bf16.mxu0 0
      %2114 = vmatpush1.bf16.msra.mxu0 0
      %2115 = vmatprep.subr.bf16.mxu0 0
      %2116 = vmatpush1.bf16.msra.mxu0 0
      %2117 = vmatprep.subr.bf16.mxu0 0
      %2118 = vmatpush1.bf16.msra.mxu0 0
      %2119 = vmatprep.subr.bf16.mxu0 0
      %2120 = vmatpush1.bf16.msra.mxu0 0
      %2121 = vmatprep.subr.bf16.mxu0 0
      %2122 = vmatpush1.bf16.msra.mxu0 %v2103
      %2123 = vmatprep.subr.bf16.mxu0 0
      %2124 = vmatpush1.bf16.msra.mxu0 %v2102
      %2125 = vmatprep.subr.bf16.mxu0 0
      %2126 = vmatpush2.bf16.msra.mxu0 0
      %2127 = vmatprep.subr.bf16.mxu0 0
      %2128 = vmatpush2.bf16.msra.mxu0 0
      %2129 = vmatprep.subr.bf16.mxu0 0
      %2130 = vmatpush2.bf16.msra.mxu0 0
      %2131 = vmatprep.subr.bf16.mxu0 0
      %2132 = vmatpush2.bf16.msra.mxu0 0
      %2133 = vmatprep.subr.bf16.mxu0 0
      %2134 = vmatpush2.bf16.msra.mxu0 0
      %2135 = vmatprep.subr.bf16.mxu0 0
      %2136 = vmatpush2.bf16.msra.mxu0 0
      %2137 = vmatprep.subr.bf16.mxu0 0
      %2138 = vmatpush2.bf16.msra.mxu0 0
      %2139 = vmatprep.subr.bf16.mxu0 0
      %2140 = vmatpush2.bf16.msra.mxu0 0
      %2141 = vmatprep.mubr.bf16.mxu0 0
      %2142 = vmatmul.mubr.bf16.gmra.mxu0 %v2107
      %v2143 = vpop.f32.mrf.mxu0
      %v2144 = vadd.f32 0.0, %v2143
      %v2145 = vpop.f32.mrf.mxu0
      %v2146 = vpop.f32.mrf.mxu0
      %v2147 = vadd.f32 0.0, %v2146
      %v2148 = vpop.f32.mrf.mxu0
      %2149 = vdwg.mxu0
      %v2150 = vadd.f32 %v2080, %v2144
      %v2151 = vadd.f32 %v2081, %v2147
      %v2152 = vld [vmem:[#allocation2 + $0x70] sm:$0xf]
      %v2153 = vld [vmem:[#allocation2 + $0x74] sm:$0xf]
      %s2154 = scalar_lea.vmem %s5, 224
      %v2155 = vld [vmem:[%s2154] sm:$0xf]
      %v2156 = vld [vmem:[%s2154 + $0x4] sm:$0xf]
      %v2157 = vld [vmem:[%s2154 + $0x8] sm:$0xf]
      %v2158 = vld [vmem:[%s2154 + $0xc] sm:$0xf]
      %v2161 = vunpack.c.l.b16 %v2152
      %v2162 = vunpack.c.l.b16 %v2153
      %v2163 = vpack.c.b16 %v2162, %v2161
      %v2168 = vunpack.c.l.b16 %v2155
      %v2169 = vunpack.c.l.b16 %v2156
      %v2170 = vunpack.c.l.b16 %v2157
      %v2171 = vunpack.c.l.b16 %v2158
      %v2172 = vpack.c.b16 %v2169, %v2168
      %v2173 = vpack.c.b16 %v2171, %v2170
      %v2177 = vsel %vm573, %v2163, 0
      %2179 = vmatprep.subr.bf16.mxu0 0
      %2180 = vmatpush1.bf16.msra.mxu0 0
      %2181 = vmatprep.subr.bf16.mxu0 0
      %2182 = vmatpush1.bf16.msra.mxu0 0
      %2183 = vmatprep.subr.bf16.mxu0 0
      %2184 = vmatpush1.bf16.msra.mxu0 0
      %2185 = vmatprep.subr.bf16.mxu0 0
      %2186 = vmatpush1.bf16.msra.mxu0 0
      %2187 = vmatprep.subr.bf16.mxu0 0
      %2188 = vmatpush1.bf16.msra.mxu0 0
      %2189 = vmatprep.subr.bf16.mxu0 0
      %2190 = vmatpush1.bf16.msra.mxu0 0
      %2191 = vmatprep.subr.bf16.mxu0 0
      %2192 = vmatpush1.bf16.msra.mxu0 %v2173
      %2193 = vmatprep.subr.bf16.mxu0 0
      %2194 = vmatpush1.bf16.msra.mxu0 %v2172
      %2195 = vmatprep.subr.bf16.mxu0 0
      %2196 = vmatpush2.bf16.msra.mxu0 0
      %2197 = vmatprep.subr.bf16.mxu0 0
      %2198 = vmatpush2.bf16.msra.mxu0 0
      %2199 = vmatprep.subr.bf16.mxu0 0
      %2200 = vmatpush2.bf16.msra.mxu0 0
      %2201 = vmatprep.subr.bf16.mxu0 0
      %2202 = vmatpush2.bf16.msra.mxu0 0
      %2203 = vmatprep.subr.bf16.mxu0 0
      %2204 = vmatpush2.bf16.msra.mxu0 0
      %2205 = vmatprep.subr.bf16.mxu0 0
      %2206 = vmatpush2.bf16.msra.mxu0 0
      %2207 = vmatprep.subr.bf16.mxu0 0
      %2208 = vmatpush2.bf16.msra.mxu0 0
      %2209 = vmatprep.subr.bf16.mxu0 0
      %2210 = vmatpush2.bf16.msra.mxu0 0
      %2211 = vmatprep.mubr.bf16.mxu0 0
      %2212 = vmatmul.mubr.bf16.gmra.mxu0 %v2177
      %v2213 = vpop.f32.mrf.mxu0
      %v2214 = vadd.f32 0.0, %v2213
      %v2215 = vpop.f32.mrf.mxu0
      %v2216 = vpop.f32.mrf.mxu0
      %v2217 = vadd.f32 0.0, %v2216
      %v2218 = vpop.f32.mrf.mxu0
      %2219 = vdwg.mxu0
      %v2220 = vadd.f32 %v2150, %v2214
      %v2221 = vadd.f32 %v2151, %v2217
      %v2222 = vld [vmem:[#allocation2 + $0x78] sm:$0xf]
      %v2223 = vld [vmem:[#allocation2 + $0x7c] sm:$0xf]
      %s2224 = scalar_lea.vmem %s5, 240
      %v2225 = vld [vmem:[%s2224] sm:$0xf]
      %v2226 = vld [vmem:[%s2224 + $0x4] sm:$0xf]
      %v2227 = vld [vmem:[%s2224 + $0x8] sm:$0xf]
      %v2228 = vld [vmem:[%s2224 + $0xc] sm:$0xf]
      %v2231 = vunpack.c.l.b16 %v2222
      %v2232 = vunpack.c.l.b16 %v2223
      %v2233 = vpack.c.b16 %v2232, %v2231
      %v2238 = vunpack.c.l.b16 %v2225
      %v2239 = vunpack.c.l.b16 %v2226
      %v2240 = vunpack.c.l.b16 %v2227
      %v2241 = vunpack.c.l.b16 %v2228
      %v2242 = vpack.c.b16 %v2239, %v2238
      %v2243 = vpack.c.b16 %v2241, %v2240
      %v2247 = vsel %vm573, %v2233, 0
      %2249 = vmatprep.subr.bf16.mxu0 0
      %2250 = vmatpush1.bf16.msra.mxu0 0
      %2251 = vmatprep.subr.bf16.mxu0 0
      %2252 = vmatpush1.bf16.msra.mxu0 0
      %2253 = vmatprep.subr.bf16.mxu0 0
      %2254 = vmatpush1.bf16.msra.mxu0 0
      %2255 = vmatprep.subr.bf16.mxu0 0
      %2256 = vmatpush1.bf16.msra.mxu0 0
      %2257 = vmatprep.subr.bf16.mxu0 0
      %2258 = vmatpush1.bf16.msra.mxu0 0
      %2259 = vmatprep.subr.bf16.mxu0 0
      %2260 = vmatpush1.bf16.msra.mxu0 0
      %2261 = vmatprep.subr.bf16.mxu0 0
      %2262 = vmatpush1.bf16.msra.mxu0 %v2243
      %2263 = vmatprep.subr.bf16.mxu0 0
      %2264 = vmatpush1.bf16.msra.mxu0 %v2242
      %2265 = vmatprep.subr.bf16.mxu0 0
      %2266 = vmatpush2.bf16.msra.mxu0 0
      %2267 = vmatprep.subr.bf16.mxu0 0
      %2268 = vmatpush2.bf16.msra.mxu0 0
      %2269 = vmatprep.subr.bf16.mxu0 0
      %2270 = vmatpush2.bf16.msra.mxu0 0
      %2271 = vmatprep.subr.bf16.mxu0 0
      %2272 = vmatpush2.bf16.msra.mxu0 0
      %2273 = vmatprep.subr.bf16.mxu0 0
      %2274 = vmatpush2.bf16.msra.mxu0 0
      %2275 = vmatprep.subr.bf16.mxu0 0
      %2276 = vmatpush2.bf16.msra.mxu0 0
      %2277 = vmatprep.subr.bf16.mxu0 0
      %2278 = vmatpush2.bf16.msra.mxu0 0
      %2279 = vmatprep.subr.bf16.mxu0 0
      %2280 = vmatpush2.bf16.msra.mxu0 0
      %2281 = vmatprep.mubr.bf16.mxu0 0
      %2282 = vmatmul.mubr.bf16.gmra.mxu0 %v2247
      %v2283 = vpop.f32.mrf.mxu0
      %v2284 = vadd.f32 0.0, %v2283
      %v2285 = vpop.f32.mrf.mxu0
      %v2286 = vpop.f32.mrf.mxu0
      %v2287 = vadd.f32 0.0, %v2286
      %v2288 = vpop.f32.mrf.mxu0
      %2289 = vdwg.mxu0
      %v2290 = vadd.f32 %v2220, %v2284
      %v2291 = vadd.f32 %v2221, %v2287
      %v2292 = vld [vmem:[%s6] sm:$0x1]
      %v2293 = vld [vmem:[%s7] sm:$0x1]
      %v2294 = vsel %vm806, %v2290, 0.0
      %v2295 = vsel %vm806, %v2291, 0.0
      %v2296 = vadd.f32 %v2294, %v2295
      %v2297 = vrot.slane %v2296, 4
      %v2298 = vadd.f32 %v2296, %v2297
      %v2299 = vrot.slane %v2298, 2
      %v2300 = vadd.f32 %v2298, %v2299
      %v2301 = vrot.slane %v2300, 1
      %v2302 = vadd.f32 %v2300, %v2301
      %v2303 = vrcp.pop 16.0
      %v2304 = vmul.f32 %v2302, %v2303
      %v2305 = vsub.f32 %v2290, %v2304
      %v2306 = vsub.f32 %v2291, %v2304
      %v2307 = vmul.f32 %v2305, %v2305
      %v2308 = vmul.f32 %v2306, %v2306
      %v2309 = vsel %vm806, %v2307, 0.0
      %v2310 = vsel %vm806, %v2308, 0.0
      %v2311 = vadd.f32 %v2309, %v2310
      %v2312 = vrot.slane %v2311, 4
      %v2313 = vadd.f32 %v2311, %v2312
      %v2314 = vrot.slane %v2313, 2
      %v2315 = vadd.f32 %v2313, %v2314
      %v2316 = vrot.slane %v2315, 1
      %v2317 = vadd.f32 %v2315, %v2316
      %v2318 = vmul.f32 %v2317, %v2303
      %v2319 = vadd.f32 %v2318, 1e-05
      %v2320 = vrsqrt.pop %v2319
      %v2321 = vmul.f32 %v2292, %v2320
      %v2323 = vlaneseq
      %v2324 = vshrl.u32 %v2323, 7
      %v2325 = vsub.s32 0, %v2324
      %v2326 = vrot.slane %v2321, %v2325
      %v2328 = vmul.f32 %v2305, %v2326
      %v2329 = vmul.f32 %v2306, %v2326
      %v2331 = vlaneseq
      %v2332 = vshrl.u32 %v2331, 7
      %v2333 = vsub.s32 0, %v2332
      %v2334 = vrot.slane %v2293, %v2333
      %v2336 = vadd.f32 %v2328, %v2334
      %v2337 = vadd.f32 %v2329, %v2334
      %vm2338 = vcmp.ge.f32.partialorder %v2336, 0.0
      %vm2339 = vcmp.ge.f32.partialorder %v2337, 0.0
      %v2340 = vmul.f32 %v2336, 0.2
      %v2341 = vmul.f32 %v2337, 0.2
      %v2342 = vsel %vm2338, %v2336, %v2340
      %v2343 = vsel %vm2339, %v2337, %v2341
      %v2344 = vld [vmem:[%s8] sm:$0xff]
      %v2345 = vld [vmem:[%s8 + $0x8] sm:$0xff]
      %v2346 = vmul.f32 %v2342, %v2344
      %v2347 = vmul.f32 %v2343, %v2345
      %v2348 = vsel %vm806, %v2346, 0.0
      %2349 = vadd.xlane.f32.xlu0 %v2348
      %v2350 = vpop.xlane.xlu0 %2349
      %v2351 = vsel %vm806, %v2347, 0.0
      %2352 = vadd.xlane.f32.xlu0 %v2351
      %v2353 = vpop.xlane.xlu0 %2352
      %v2354 = vadd.f32 %v2350, %v2353
      %v2355 = vrot.slane %v2354, 4
      %v2356 = vadd.f32 %v2354, %v2355
      %v2357 = vrot.slane %v2356, 2
      %v2358 = vadd.f32 %v2356, %v2357
      %v2359 = vrot.slane %v2358, 1
      %v2360 = vadd.f32 %v2358, %v2359
      %v2361 = vsub.f32 0.0, %v2360
      %v2362 = vmul.f32 %v2361, 1.442695
      %v2363 = vpow.pop %v2362
      %v2364 = vadd.f32 %v2363, 1.0
      %v2365 = vrcp.pop %v2364
      %v2366 = vmul.f32 1.0, %v2365
      %vm2367 = vcmask 0
      %2368 = vst.msk [vmem:[%s328] sm:$0x1] %vm2367, %v2366
      %p2369 = scmp.lt.s32.totalorder %s20, 1
      %s2370 = scalar_select %p2369, %s20, 1
      %s2371 = scalar_lea.vmem %s9, %s2370
      // Predicated region
      $region57: #{discriminator_forward.5} parent=55 // pred_check
        %p2372 = pneg %p232
      $region58: #{discriminator_forward.5} parent=55 // pred_check_branch
        %2374 = sbr.rel (%p2372) target = $region60
      $region59: #{discriminator_forward.5} parent=55 // pred_region
        _
      $region60: #{discriminator_forward.5} parent=55 // pred_fallthru
        _
    $region56: #{discriminator_forward.5} parent=5 // pred_fallthru
      _
    %p2375 = scmp.le.s32.totalorder 2, %s15
    // Predicated region
    $region61: #{discriminator_forward.5} parent=5 // pred_check
      %p2376 = pneg %p2375
    $region62: #{discriminator_forward.5} parent=5 // pred_check_branch
      %2378 = sbr.rel (%p2376) target = $region64
    $region63: #{discriminator_forward.5} parent=5 // pred_region
      %s2379 = ssub.s32 %s15, 2
      // Predicated region
      $region65: #{discriminator_forward.5} parent=63 // pred_check
        %p2380 = pneg %p238
      $region66: #{discriminator_forward.5} parent=63 // pred_check_branch
        %2382 = sbr.rel (%p2380) target = $region68
      $region67: #{discriminator_forward.5} parent=63 // pred_region
        %p2383 = scmp.lt.s32.totalorder %s21, 1
        %s2384 = scalar_select %p2383, %s21, 1
        %s2385 = scalar_lea.vmem %s9, %s2384
      $region68: #{discriminator_forward.5} parent=63 // pred_fallthru
        _
    $region64: #{discriminator_forward.5} parent=5 // pred_fallthru
      _
  $region6: #{discriminator_forward.5} parent=0 // loop_footer
    %s19 = sadd.s32 1, %s15
  $region7: #{discriminator_forward.5} parent=0 // loop_footer_branch
    %14 = sbr.rel target = $region3
  $region8: #{discriminator_forward.5} parent=0 // loop_exit
    _

</llo_original>
